<compile_context>
chip_gen: v6e
topology: v6e:2x2x1
jax: 0.10.0
libtpu: 0.0.40
codegen_flags: <defaults>
</compile_context>

<pallas_src>
import functools
import numpy as np
import jax
import jax.numpy as jnp
from jax.experimental import pallas as pl
from jax.experimental.pallas import tpu as pltpu

SP = 4        # split_size
HEADS = 2     # num_heads
LN_EPS = 1e-4


# ----------------------------- static helpers -----------------------------

def _shift_mats(hsp, wsp):
    """(9, S, S) 0/1 matrices so that M[t] @ v_window == v spatially shifted by
    (dy, dx) = (t//3 - 1, t%3 - 1) inside an (hsp, wsp) window with zero padding."""
    S = hsp * wsp
    m = np.zeros((9, S, S), np.float32)
    for t in range(9):
        dy, dx = t // 3 - 1, t % 3 - 1
        for y in range(hsp):
            for x in range(wsp):
                yy, xx = y + dy, x + dx
                if 0 <= yy < hsp and 0 <= xx < wsp:
                    m[t, y * wsp + x, yy * wsp + xx] = 1.0
    return m


def _pick_window_tile(nw, S, cap=64):
    """Windows per grid step.  Single tile when small; otherwise the largest divisor of nw
    that is <= cap and keeps the token tile a multiple of 128 lanes (unmasked stores)."""
    if nw <= cap:
        return nw
    for cand in range(cap, 0, -1):
        if nw % cand == 0 and (cand * S) % 128 == 0:
            return cand
    return nw   # TODO(synk): pad nw when no lane-aligned divisor exists at very large sizes.


# ----------------------------- fused Pallas kernel -----------------------------

def cswin_fused_kernel(x_ref, g_ref, b_ref, w_ref, lw_ref, lb_ref, m_ref, pw_ref,
                       y_ref, a_ref=None, *, nw_t, S, heads, scale):
    """One grid step == one CSwin branch x one tile of `nw_t` windows.

    x_ref  : (1, nw_t*S, C)        windowed tokens (window-major, channel-last)
    g_ref  : (1, C), b_ref (1, C)  LayerNorm gamma / beta
    w_ref  : (1, C, 3*Ch)          fused q|k|v projection weights (heads de-interleaved)
    lw_ref : (1, 9, Ch)            lepe depthwise-3x3 tap weights
    lb_ref : (1, 1, Ch)            lepe bias
    m_ref  : (1, 9*S, S)           stacked window-local shift matrices (branch geometry)
    pw_ref : (1, C, Ch)            this branch's half of the 1x1 proj weight
    y_ref  : (1, C, nw_t*S)        partial proj output, lane-dense (bias added by caller)
    a_ref  : (1, heads, nw_t, S, S) attention probabilities (optional, test/debug only)
    """
    Ch = lw_ref.shape[-1]
    chh = Ch // heads
    Lt = nw_t * S

    # ---- LayerNorm over channels (VPU) ----
    x = x_ref[0]                                             # (Lt, C)
    mu = jnp.mean(x, axis=-1, keepdims=True)
    xc = x - mu
    var = jnp.mean(xc * xc, axis=-1, keepdims=True)
    xn = xc * jax.lax.rsqrt(var + LN_EPS) * g_ref[...] + b_ref[...]

    # ---- fused q/k/v projection: one MXU push (K=C, N=3*Ch) ----
    qkv = jnp.dot(xn, w_ref[0], preferred_element_type=jnp.float32)     # (Lt, 3*Ch)
    q = qkv[:, :Ch].reshape(nw_t, S, Ch)
    k = qkv[:, Ch:2 * Ch].reshape(nw_t, S, Ch)
    v = qkv[:, 2 * Ch:].reshape(nw_t, S, Ch)

    # ---- lepe: all 9 depthwise-3x3 taps as ONE batched matmul (M = 9*S) + one weighted
    #      reduce over the tap axis (VPU).  Single broadcast, outside any loop. ----
    m_all = jnp.broadcast_to(m_ref[0][None], (nw_t, 9 * S, S))
    shifted = jnp.einsum('wts,wsc->wtc', m_all, v,
                         preferred_element_type=jnp.float32)            # (nw_t, 9*S, Ch)
    shifted = shifted.reshape(nw_t, 9, S, Ch)
    out = jnp.sum(shifted * lw_ref[0][None, :, None, :], axis=1) + lb_ref[0]   # (nw_t,S,Ch)

    # ---- per-head attention; heads de-interleaved: head h == channels [h*chh, (h+1)*chh) ----
    # TODO(synk): if Mosaic inserts a per-head XLU transpose of kh for the NT einsum at large
    # shapes, pre-transpose k once to (nw_t, Ch, S) before this loop.
    qs = q * scale
    head_outs = []
    for h in range(heads):                                   # static unroll (2 heads)
        lo, hi = h * chh, (h + 1) * chh
        qh, kh, vh = qs[:, :, lo:hi], k[:, :, lo:hi], v[:, :, lo:hi]
        s = jnp.einsum('wqc,wkc->wqk', qh, kh,
                       preferred_element_type=jnp.float32)              # (nw_t, S, S)
        s_max = jnp.max(s, axis=-1, keepdims=True)
        e = jnp.exp(s - s_max)
        p = e * pl.reciprocal(jnp.sum(e, axis=-1, keepdims=True), approx=True)
        if a_ref is not None:
            a_ref[0, h] = p                                  # contiguous per-head block write
        head_outs.append(jnp.einsum('wqk,wkc->wqc', p, vh,
                                    preferred_element_type=jnp.float32))
    out = out + jnp.concatenate(head_outs, axis=-1)          # (nw_t, S, Ch)

    # ---- this branch's half of the 1x1 proj; emit lane-dense (C, Lt) layout ----
    y_ref[0] = jnp.einsum('ck,lk->cl', pw_ref[0], out.reshape(Lt, Ch),
                          preferred_element_type=jnp.float32)


# ----------------------------- full forward (Pallas) -----------------------------

def cswin_forward_pallas(x, params, return_attn=True):
    B, C, H, W = x.shape
    assert H % SP == 0 and W % SP == 0
    # TODO(synk): rectangular H != W would need per-branch block shapes (two pallas_calls).
    assert H == W, "fused kernel assumes square feature maps"
    Ch = C // 2
    L = B * H * W
    Wn, Hn = W // SP, H // SP
    S = H * SP                       # window sequence length (same for both branches)
    nw = B * Wn                      # windows per branch     (same for both branches)
    scale = (C // HEADS) ** (-0.5)   # matches PyTorch: head_dim = dim // num_heads

    w_tile = _pick_window_tile(nw, S)
    n_tiles = nw // w_tile
    l_tile = w_tile * S

    # ---- window-major token layouts (XLA layout plumbing, fused by jit) ----
    x_nhwc = jnp.transpose(x, (0, 2, 3, 1))                  # (B, H, W, C)
    # branch 1 (horizontal SPxW stripes): raster order is already window-major
    xw1 = x_nhwc.reshape(L, C)
    # branch 0 (vertical HxSP stripes): windows (b, W-stripe), sequence (row, col-in-stripe)
    xw0 = x_nhwc.reshape(B, H, Wn, SP, C).transpose(0, 2, 1, 3, 4).reshape(L, C)
    x_win = jnp.stack([xw0, xw1], axis=0)                    # (2, L, C)

    # ---- de-interleave heads: branch channel ch belongs to head ch % HEADS ----
    perm = np.arange(Ch).reshape(-1, HEADS).T.reshape(-1)    # e.g. [0,2,4,6, 1,3,5,7]

    # fused per-branch q|k|v weights, head-de-interleaved: (2, C, 3*Ch)
    wq, wk, wv = jnp.split(params['w_qkv'], 3, axis=1)
    cols = lambda w, b: w[:, b * Ch:(b + 1) * Ch][:, perm]
    w_qkv3 = jnp.stack([jnp.concatenate([cols(wq, b), cols(wk, b), cols(wv, b)], axis=1)
                        for b in range(2)], axis=0)

    # lepe taps (torch (Ch,1,3,3) -> (9, Ch)) and bias, same channel permutation
    lw = jnp.stack([params['lepe_w'][b][perm].reshape(Ch, 9).T for b in range(2)], axis=0)
    lb = jnp.stack([params['lepe_b'][b][perm] for b in range(2)], axis=0).reshape(2, 1, Ch)

    # stacked window-geometry shift matrices (static numpy constants): (2, 9*S, S)
    shift_m = jnp.asarray(np.stack([_shift_mats(H, SP).reshape(9 * S, S),
                                    _shift_mats(SP, W).reshape(9 * S, S)], axis=0))

    # per-branch halves of the 1x1 proj weight (Cout, Ch), same channel permutation
    pw = jnp.stack([params['proj_w'][:, :Ch][:, perm],
                    params['proj_w'][:, Ch:][:, perm]], axis=0)

    kern = functools.partial(cswin_fused_kernel, nw_t=w_tile, S=S, heads=HEADS, scale=scale)
    out_shape = [jax.ShapeDtypeStruct((2, C, L), jnp.float32)]
    out_specs = [pl.BlockSpec((1, C, l_tile), lambda i, j: (i, 0, j))]
    if return_attn:
        out_shape.append(jax.ShapeDtypeStruct((2, HEADS, nw, S, S), jnp.float32))
        out_specs.append(pl.BlockSpec((1, HEADS, w_tile, S, S),
                                      lambda i, j: (i, 0, j, 0, 0)))

    res = pl.pallas_call(
        kern,
        out_shape=tuple(out_shape),
        grid=(2, n_tiles),
        in_specs=[
            pl.BlockSpec((1, l_tile, C), lambda i, j: (i, j, 0)),
            pl.BlockSpec((1, C), lambda i, j: (0, 0)),
            pl.BlockSpec((1, C), lambda i, j: (0, 0)),
            pl.BlockSpec((1, C, 3 * Ch), lambda i, j: (i, 0, 0)),
            pl.BlockSpec((1, 9, Ch), lambda i, j: (i, 0, 0)),
            pl.BlockSpec((1, 1, Ch), lambda i, j: (i, 0, 0)),
            pl.BlockSpec((1, 9 * S, S), lambda i, j: (i, 0, 0)),
            pl.BlockSpec((1, C, Ch), lambda i, j: (i, 0, 0)),
        ],
        out_specs=tuple(out_specs),
        compiler_params=pltpu.CompilerParams(
            dimension_semantics=("parallel", "parallel"),
            vmem_limit_bytes=64 * 1024 * 1024),
    )(x_win, params['ln_g'].reshape(1, C), params['ln_b'].reshape(1, C),
      w_qkv3, lw, lb, shift_m, pw)

    y_t = res[0]                                             # (2, C, L), lane-dense
    # un-permute branch 0 windows, add branch 1 + proj bias; already channel-major (NCHW)
    y0 = y_t[0].reshape(C, B, Wn, H, SP).transpose(1, 0, 3, 2, 4).reshape(B, C, H, W)
    y1 = y_t[1].reshape(C, B, H, W).transpose(1, 0, 2, 3)
    y = y0 + y1 + params['proj_b'].reshape(1, C, 1, 1)

    attns = None
    if return_attn:
        a = res[1]                                           # (2, HEADS, nw, S, S)
        attns = [a[0].transpose(1, 0, 2, 3), a[1].transpose(1, 0, 2, 3)]
    return y, attns


# ----------------------------- pure-JAX reference -----------------------------

def win_part(t, B, h, hsp, w, wsp, heads):
    # 'b (h hsp w wsp) (c head) -> (b h w) head (hsp wsp) c'
    Ch = t.shape[-1]
    c = Ch // heads
    t = t.reshape(B, h, hsp, w, wsp, c, heads)
    t = jnp.transpose(t, (0, 1, 3, 6, 2, 4, 5))
    return t.reshape(B * h * w, heads, hsp * wsp, c)


def win_rev(t, B, h, hsp, w, wsp, heads):
    # '(b h w) head (hsp wsp) c -> b (c head) (h hsp) (w wsp)'
    nw, nh, S, c = t.shape
    t = t.reshape(B, h, w, heads, hsp, wsp, c)
    t = jnp.transpose(t, (0, 6, 3, 1, 4, 2, 5))
    return t.reshape(B, c * heads, h * hsp, w * wsp)


def v_to_lepe_nhwc(vw, hsp, wsp, heads):
    nw, nh, S, c = vw.shape
    t = vw.reshape(nw, heads, hsp, wsp, c)
    t = jnp.transpose(t, (0, 2, 3, 4, 1))
    return t.reshape(nw, hsp, wsp, c * heads)


def lepe_nhwc_to_win(lp, heads):
    nw, hsp, wsp, Ch = lp.shape
    c = Ch // heads
    t = lp.reshape(nw, hsp, wsp, c, heads)
    t = jnp.transpose(t, (0, 4, 1, 2, 3))
    return t.reshape(nw, heads, hsp * wsp, c)


def cswin_forward_ref(x, p):
    B, C, H, W = x.shape
    Ch = C // 2
    scale = (C // HEADS) ** (-0.5)

    xp = jnp.transpose(x, (0, 2, 3, 1)).reshape(B, H * W, C)
    mu = xp.mean(-1, keepdims=True)
    var = ((xp - mu) ** 2).mean(-1, keepdims=True)
    xn = (xp - mu) / jnp.sqrt(var + LN_EPS) * p['ln_g'] + p['ln_b']
    qkv = xn @ p['w_qkv']
    q, k, v = jnp.split(qkv, 3, axis=-1)
    branches = [(q[..., :Ch], k[..., :Ch], v[..., :Ch]),
                (q[..., Ch:], k[..., Ch:], v[..., Ch:])]
    geom = [(1, H, W // SP, SP), (H // SP, SP, 1, W)]

    outs, attns = [], []
    for idx, ((qb, kb, vb), (h, hsp, w, wsp)) in enumerate(zip(branches, geom)):
        qw = win_part(qb, B, h, hsp, w, wsp, HEADS)
        kw = win_part(kb, B, h, hsp, w, wsp, HEADS)
        vw = win_part(vb, B, h, hsp, w, wsp, HEADS)

        lepe_in = v_to_lepe_nhwc(vw, hsp, wsp, HEADS)
        hwio = jnp.transpose(p['lepe_w'][idx], (2, 3, 1, 0))    # (3,3,1,Ch)
        lepe_nhwc = jax.lax.conv_general_dilated(
            lepe_in, hwio, (1, 1), 'SAME',
            dimension_numbers=('NHWC', 'HWIO', 'NHWC'),
            feature_group_count=Ch) + p['lepe_b'][idx]
        lepe = lepe_nhwc_to_win(lepe_nhwc, HEADS)

        s = jnp.einsum('nhqc,nhkc->nhqk', qw * scale, kw)
        pm = jax.nn.softmax(s, axis=-1)
        ow = jnp.einsum('nhqk,nhkc->nhqc', pm, vw) + lepe
        outs.append(win_rev(ow, B, h, hsp, w, wsp, HEADS))
        attns.append(pm)

    xcat = jnp.concatenate(outs, axis=1)
    xf = jnp.transpose(xcat, (0, 2, 3, 1)).reshape(B * H * W, C)
    yf = xf @ p['proj_w'].T + p['proj_b']
    y = yf.reshape(B, H, W, C).transpose(0, 3, 1, 2)
    return y, attns


# ----------------------------- main -----------------------------

if __name__ == "__main__":
    B, C, H, W = 2, 16, 8, 8          # dim = channel = 16, heads = 2, split_size = 4
    Ch = C // 2

    key = jax.random.PRNGKey(0)
    ks = jax.random.split(key, 10)
    params = {
        'ln_g':  1.0 + 0.02 * jax.random.normal(ks[0], (C,), jnp.float32),
        'ln_b':  0.02 * jax.random.normal(ks[1], (C,), jnp.float32),
        'w_qkv': 0.1 * jax.random.normal(ks[2], (C, 3 * C), jnp.float32),
        # TODO(synk): PyTorch's forward() re-creates lepe_conv with fresh random init on every
        # call; here it is a fixed deterministic parameter (one per branch).
        'lepe_w': [0.1 * jax.random.normal(ks[3], (Ch, 1, 3, 3), jnp.float32),
                   0.1 * jax.random.normal(ks[4], (Ch, 1, 3, 3), jnp.float32)],
        'lepe_b': [0.1 * jax.random.normal(ks[5], (Ch,), jnp.float32),
                   0.1 * jax.random.normal(ks[6], (Ch,), jnp.float32)],
        'proj_w': 0.1 * jax.random.normal(ks[7], (C, C), jnp.float32),   # (Cout, Cin)
        'proj_b': 0.1 * jax.random.normal(ks[8], (C,), jnp.float32),
    }
    x = jax.random.normal(ks[9], (B, C, H, W), jnp.float32)

    fwd = jax.jit(functools.partial(cswin_forward_pallas, return_attn=True))
    y, attns = fwd(x, params)
    y = jax.block_until_ready(y)
    attns = [jax.block_until_ready(a) for a in attns]

    y_ref, attns_ref = cswin_forward_ref(x, params)
    np.testing.assert_allclose(np.asarray(y), np.asarray(y_ref), rtol=2e-3, atol=2e-3)
    for a, ar in zip(attns, attns_ref):
        np.testing.assert_allclose(np.asarray(a), np.asarray(ar), rtol=2e-3, atol=2e-3)

    # TODO(synk): only the shift=False / H,W > split_size branch of forward() is exercised
    # (matching this configuration); attn_drop / proj_drop are 0.0 and thus identity.
    print("KERNEL_OK")
</pallas_src>

<mosaic_0001>
module attributes {stable_mosaic.version = 11 : i64} {
  func.func @cswin_fused_kernel(%arg0: i32, %arg1: i32, %arg2: memref<1x128x16xf32, #tpu.memory_space<vmem>>, %arg3: memref<1x16xf32, #tpu.memory_space<vmem>>, %arg4: memref<1x16xf32, #tpu.memory_space<vmem>>, %arg5: memref<1x16x24xf32, #tpu.memory_space<vmem>>, %arg6: memref<1x9x8xf32, #tpu.memory_space<vmem>>, %arg7: memref<1x1x8xf32, #tpu.memory_space<vmem>>, %arg8: memref<1x288x32xf32, #tpu.memory_space<vmem>>, %arg9: memref<1x16x8xf32, #tpu.memory_space<vmem>>, %arg10: memref<1x16x128xf32, #tpu.memory_space<vmem>>, %arg11: memref<1x2x4x32x32xf32, #tpu.memory_space<vmem>>) attributes {dimension_semantics = [#tpu.dimension_semantics<parallel>, #tpu.dimension_semantics<parallel>], iteration_bounds = array<i64: 2, 1>, scalar_prefetch = 0 : i64, scratch_operands = 0 : i64, tpu.core_type = #tpu.core_type<tc>, window_params = [{transform_indices = @transform_0, window_bounds = array<i64: 1, 128, 16>}, {pipeline_mode = #tpu.pipeline_mode<synchronous>, transform_indices = @transform_1, window_bounds = array<i64: 1, 16>}, {pipeline_mode = #tpu.pipeline_mode<synchronous>, transform_indices = @transform_2, window_bounds = array<i64: 1, 16>}, {transform_indices = @transform_3, window_bounds = array<i64: 1, 16, 24>}, {transform_indices = @transform_4, window_bounds = array<i64: 1, 9, 8>}, {transform_indices = @transform_5, window_bounds = array<i64: 1, 1, 8>}, {transform_indices = @transform_6, window_bounds = array<i64: 1, 288, 32>}, {transform_indices = @transform_7, window_bounds = array<i64: 1, 16, 8>}, {transform_indices = @transform_8, window_bounds = array<i64: 1, 16, 128>}, {transform_indices = @transform_9, window_bounds = array<i64: 1, 2, 4, 32, 32>}]} {
    %c0 = arith.constant 0 : index
    %c0_0 = arith.constant 0 : index
    %c0_1 = arith.constant 0 : index
    %0 = vector.load %arg2[%c0, %c0_0, %c0_1] : memref<1x128x16xf32, #tpu.memory_space<vmem>>, vector<1x128x16xf32>
    %1 = vector.shape_cast %0 : vector<1x128x16xf32> to vector<128x16xf32>
    %cst = arith.constant dense<0.000000e+00> : vector<128xf32>
    %2 = vector.multi_reduction <add>, %1, %cst [1] : vector<128x16xf32> to vector<128xf32>
    %3 = vector.shape_cast %2 : vector<128xf32> to vector<128x1xf32>
    %cst_2 = arith.constant 1.600000e+01 : f32
    %4 = vector.broadcast %cst_2 : f32 to vector<128x1xf32>
    %5 = arith.divf %3, %4 : vector<128x1xf32>
    %6 = vector.broadcast %5 : vector<128x1xf32> to vector<128x16xf32>
    %7 = arith.subf %1, %6 : vector<128x16xf32>
    %8 = arith.mulf %7, %7 : vector<128x16xf32>
    %cst_3 = arith.constant dense<0.000000e+00> : vector<128xf32>
    %9 = vector.multi_reduction <add>, %8, %cst_3 [1] : vector<128x16xf32> to vector<128xf32>
    %10 = vector.shape_cast %9 : vector<128xf32> to vector<128x1xf32>
    %cst_4 = arith.constant 1.600000e+01 : f32
    %11 = vector.broadcast %cst_4 : f32 to vector<128x1xf32>
    %12 = arith.divf %10, %11 : vector<128x1xf32>
    %cst_5 = arith.constant 9.99999974E-5 : f32
    %13 = vector.broadcast %cst_5 : f32 to vector<128x1xf32>
    %14 = arith.addf %12, %13 : vector<128x1xf32>
    %15 = math.rsqrt %14 : vector<128x1xf32>
    %16 = vector.broadcast %15 : vector<128x1xf32> to vector<128x16xf32>
    %17 = arith.mulf %7, %16 : vector<128x16xf32>
    %c0_6 = arith.constant 0 : index
    %c0_7 = arith.constant 0 : index
    %18 = vector.load %arg3[%c0_6, %c0_7] : memref<1x16xf32, #tpu.memory_space<vmem>>, vector<1x16xf32>
    %19 = vector.broadcast %18 : vector<1x16xf32> to vector<128x16xf32>
    %20 = arith.mulf %17, %19 : vector<128x16xf32>
    %c0_8 = arith.constant 0 : index
    %c0_9 = arith.constant 0 : index
    %21 = vector.load %arg4[%c0_8, %c0_9] : memref<1x16xf32, #tpu.memory_space<vmem>>, vector<1x16xf32>
    %22 = vector.broadcast %21 : vector<1x16xf32> to vector<128x16xf32>
    %23 = arith.addf %20, %22 : vector<128x16xf32>
    %c0_10 = arith.constant 0 : index
    %c0_11 = arith.constant 0 : index
    %c0_12 = arith.constant 0 : index
    %24 = vector.load %arg5[%c0_10, %c0_11, %c0_12] : memref<1x16x24xf32, #tpu.memory_space<vmem>>, vector<1x16x24xf32>
    %25 = vector.shape_cast %24 : vector<1x16x24xf32> to vector<16x24xf32>
    %cst_13 = arith.constant dense<0.000000e+00> : vector<128x24xf32>
    %26 = tpu.matmul %23, %25, %cst_13 {dimension_numbers = #tpu.dot_dimension_numbers<[1], [0], [0], [1], [0, 0, 1, 1], [], []>} : vector<128x16xf32>, vector<16x24xf32>, vector<128x24xf32> -> vector<128x24xf32>
    %27 = vector.extract_strided_slice %26 {offsets = [0, 0], sizes = [128, 8], strides = [1, 1]} : vector<128x24xf32> to vector<128x8xf32>
    %28 = vector.shape_cast %27 : vector<128x8xf32> to vector<4x32x8xf32>
    %29 = vector.extract_strided_slice %26 {offsets = [0, 8], sizes = [128, 8], strides = [1, 1]} : vector<128x24xf32> to vector<128x8xf32>
    %30 = vector.shape_cast %29 : vector<128x8xf32> to vector<4x32x8xf32>
    %31 = vector.extract_strided_slice %26 {offsets = [0, 16], sizes = [128, 8], strides = [1, 1]} : vector<128x24xf32> to vector<128x8xf32>
    %32 = vector.shape_cast %31 : vector<128x8xf32> to vector<4x32x8xf32>
    %c0_14 = arith.constant 0 : index
    %c0_15 = arith.constant 0 : index
    %c0_16 = arith.constant 0 : index
    %33 = vector.load %arg8[%c0_14, %c0_15, %c0_16] : memref<1x288x32xf32, #tpu.memory_space<vmem>>, vector<1x288x32xf32>
    %34 = vector.shape_cast %33 : vector<1x288x32xf32> to vector<288x32xf32>
    %35 = vector.shape_cast %34 : vector<288x32xf32> to vector<1x288x32xf32>
    %36 = vector.shape_cast %35 : vector<1x288x32xf32> to vector<1x288x32xf32>
    %37 = vector.broadcast %36 : vector<1x288x32xf32> to vector<4x288x32xf32>
    "tpu.trace_start"() <{level = 10 : i32, message = "wts,wsc->wtc"}> : () -> ()
    %cst_17 = arith.constant dense<0.000000e+00> : vector<4x288x8xf32>
    %38 = tpu.matmul %37, %32, %cst_17 {dimension_numbers = #tpu.dot_dimension_numbers<[2], [1], [1], [2], [0, 0, 0, 1, 1, 2], [0], [0]>} : vector<4x288x32xf32>, vector<4x32x8xf32>, vector<4x288x8xf32> -> vector<4x288x8xf32>
    "tpu.trace_stop"() : () -> ()
    %39 = vector.shape_cast %38 : vector<4x288x8xf32> to vector<4x9x32x8xf32>
    %c0_18 = arith.constant 0 : index
    %c0_19 = arith.constant 0 : index
    %c0_20 = arith.constant 0 : index
    %40 = vector.load %arg6[%c0_18, %c0_19, %c0_20] : memref<1x9x8xf32, #tpu.memory_space<vmem>>, vector<1x9x8xf32>
    %41 = vector.shape_cast %40 : vector<1x9x8xf32> to vector<9x8xf32>
    %42 = vector.shape_cast %41 : vector<9x8xf32> to vector<1x9x1x8xf32>
    %43 = vector.broadcast %42 : vector<1x9x1x8xf32> to vector<4x9x32x8xf32>
    %44 = arith.mulf %39, %43 : vector<4x9x32x8xf32>
    %cst_21 = arith.constant dense<0.000000e+00> : vector<4x32x8xf32>
    %45 = vector.multi_reduction <add>, %44, %cst_21 [1] : vector<4x9x32x8xf32> to vector<4x32x8xf32>
    %c0_22 = arith.constant 0 : index
    %c0_23 = arith.constant 0 : index
    %c0_24 = arith.constant 0 : index
    %46 = vector.load %arg7[%c0_22, %c0_23, %c0_24] : memref<1x1x8xf32, #tpu.memory_space<vmem>>, vector<1x1x8xf32>
    %47 = vector.shape_cast %46 : vector<1x1x8xf32> to vector<1x8xf32>
    %48 = vector.shape_cast %47 : vector<1x8xf32> to vector<1x1x8xf32>
    %49 = vector.broadcast %48 : vector<1x1x8xf32> to vector<4x32x8xf32>
    %50 = arith.addf %45, %49 : vector<4x32x8xf32>
    %cst_25 = arith.constant 0.353553385 : f32
    %51 = vector.broadcast %cst_25 : f32 to vector<4x32x8xf32>
    %52 = arith.mulf %28, %51 : vector<4x32x8xf32>
    %53 = vector.extract_strided_slice %52 {offsets = [0, 0, 0], sizes = [4, 32, 4], strides = [1, 1, 1]} : vector<4x32x8xf32> to vector<4x32x4xf32>
    %54 = vector.extract_strided_slice %30 {offsets = [0, 0, 0], sizes = [4, 32, 4], strides = [1, 1, 1]} : vector<4x32x8xf32> to vector<4x32x4xf32>
    %55 = vector.extract_strided_slice %32 {offsets = [0, 0, 0], sizes = [4, 32, 4], strides = [1, 1, 1]} : vector<4x32x8xf32> to vector<4x32x4xf32>
    "tpu.trace_start"() <{level = 10 : i32, message = "wqc,wkc->wqk"}> : () -> ()
    %cst_26 = arith.constant dense<0.000000e+00> : vector<4x32x32xf32>
    %56 = tpu.matmul %53, %54, %cst_26 {dimension_numbers = #tpu.dot_dimension_numbers<[2], [2], [1], [1], [0, 0, 0, 1, 1, 1], [0], [0]>} : vector<4x32x4xf32>, vector<4x32x4xf32>, vector<4x32x32xf32> -> vector<4x32x32xf32>
    "tpu.trace_stop"() : () -> ()
    %cst_27 = arith.constant dense<0xFF800000> : vector<4x32xf32>
    %57 = vector.multi_reduction <maximumf>, %56, %cst_27 [2] : vector<4x32x32xf32> to vector<4x32xf32>
    %58 = vector.shape_cast %57 : vector<4x32xf32> to vector<4x32x1xf32>
    %59 = vector.broadcast %58 : vector<4x32x1xf32> to vector<4x32x32xf32>
    %60 = arith.subf %56, %59 : vector<4x32x32xf32>
    %61 = math.exp %60 : vector<4x32x32xf32>
    %cst_28 = arith.constant dense<0.000000e+00> : vector<4x32xf32>
    %62 = vector.multi_reduction <add>, %61, %cst_28 [2] : vector<4x32x32xf32> to vector<4x32xf32>
    %63 = vector.shape_cast %62 : vector<4x32xf32> to vector<4x32x1xf32>
    %64 = tpu.reciprocal %63 {approx = true} : vector<4x32x1xf32> -> vector<4x32x1xf32>
    %65 = vector.broadcast %64 : vector<4x32x1xf32> to vector<4x32x32xf32>
    %66 = arith.mulf %61, %65 : vector<4x32x32xf32>
    %c0_29 = arith.constant 0 : index
    %c0_30 = arith.constant 0 : index
    %c0_31 = arith.constant 0 : index
    %c0_32 = arith.constant 0 : index
    %c0_33 = arith.constant 0 : index
    %67 = vector.load %arg11[%c0_29, %c0_30, %c0_31, %c0_32, %c0_33] : memref<1x2x4x32x32xf32, #tpu.memory_space<vmem>>, vector<1x1x4x32x32xf32>
    %68 = vector.shape_cast %67 : vector<1x1x4x32x32xf32> to vector<4x32x32xf32>
    %69 = vector.shape_cast %66 : vector<4x32x32xf32> to vector<1x1x4x32x32xf32>
    tpu.vector_store %arg11[%c0_29, %c0_30, %c0_31, %c0_32, %c0_33], %69 {strides = array<i32>} : memref<1x2x4x32x32xf32, #tpu.memory_space<vmem>>, vector<1x1x4x32x32xf32>,
    "tpu.trace_start"() <{level = 10 : i32, message = "wqk,wkc->wqc"}> : () -> ()
    %cst_34 = arith.constant dense<0.000000e+00> : vector<4x32x4xf32>
    %70 = tpu.matmul %66, %55, %cst_34 {dimension_numbers = #tpu.dot_dimension_numbers<[2], [1], [1], [2], [0, 0, 0, 1, 1, 2], [0], [0]>} : vector<4x32x32xf32>, vector<4x32x4xf32>, vector<4x32x4xf32> -> vector<4x32x4xf32>
    "tpu.trace_stop"() : () -> ()
    %71 = vector.extract_strided_slice %52 {offsets = [0, 0, 4], sizes = [4, 32, 4], strides = [1, 1, 1]} : vector<4x32x8xf32> to vector<4x32x4xf32>
    %72 = vector.extract_strided_slice %30 {offsets = [0, 0, 4], sizes = [4, 32, 4], strides = [1, 1, 1]} : vector<4x32x8xf32> to vector<4x32x4xf32>
    %73 = vector.extract_strided_slice %32 {offsets = [0, 0, 4], sizes = [4, 32, 4], strides = [1, 1, 1]} : vector<4x32x8xf32> to vector<4x32x4xf32>
    "tpu.trace_start"() <{level = 10 : i32, message = "wqc,wkc->wqk"}> : () -> ()
    %cst_35 = arith.constant dense<0.000000e+00> : vector<4x32x32xf32>
    %74 = tpu.matmul %71, %72, %cst_35 {dimension_numbers = #tpu.dot_dimension_numbers<[2], [2], [1], [1], [0, 0, 0, 1, 1, 1], [0], [0]>} : vector<4x32x4xf32>, vector<4x32x4xf32>, vector<4x32x32xf32> -> vector<4x32x32xf32>
    "tpu.trace_stop"() : () -> ()
    %cst_36 = arith.constant dense<0xFF800000> : vector<4x32xf32>
    %75 = vector.multi_reduction <maximumf>, %74, %cst_36 [2] : vector<4x32x32xf32> to vector<4x32xf32>
    %76 = vector.shape_cast %75 : vector<4x32xf32> to vector<4x32x1xf32>
    %77 = vector.broadcast %76 : vector<4x32x1xf32> to vector<4x32x32xf32>
    %78 = arith.subf %74, %77 : vector<4x32x32xf32>
    %79 = math.exp %78 : vector<4x32x32xf32>
    %cst_37 = arith.constant dense<0.000000e+00> : vector<4x32xf32>
    %80 = vector.multi_reduction <add>, %79, %cst_37 [2] : vector<4x32x32xf32> to vector<4x32xf32>
    %81 = vector.shape_cast %80 : vector<4x32xf32> to vector<4x32x1xf32>
    %82 = tpu.reciprocal %81 {approx = true} : vector<4x32x1xf32> -> vector<4x32x1xf32>
    %83 = vector.broadcast %82 : vector<4x32x1xf32> to vector<4x32x32xf32>
    %84 = arith.mulf %79, %83 : vector<4x32x32xf32>
    %c0_38 = arith.constant 0 : index
    %c1 = arith.constant 1 : index
    %c0_39 = arith.constant 0 : index
    %c0_40 = arith.constant 0 : index
    %c0_41 = arith.constant 0 : index
    %85 = vector.load %arg11[%c0_38, %c1, %c0_39, %c0_40, %c0_41] : memref<1x2x4x32x32xf32, #tpu.memory_space<vmem>>, vector<1x1x4x32x32xf32>
    %86 = vector.shape_cast %85 : vector<1x1x4x32x32xf32> to vector<4x32x32xf32>
    %87 = vector.shape_cast %84 : vector<4x32x32xf32> to vector<1x1x4x32x32xf32>
    tpu.vector_store %arg11[%c0_38, %c1, %c0_39, %c0_40, %c0_41], %87 {strides = array<i32>} : memref<1x2x4x32x32xf32, #tpu.memory_space<vmem>>, vector<1x1x4x32x32xf32>,
    "tpu.trace_start"() <{level = 10 : i32, message = "wqk,wkc->wqc"}> : () -> ()
    %cst_42 = arith.constant dense<0.000000e+00> : vector<4x32x4xf32>
    %88 = tpu.matmul %84, %73, %cst_42 {dimension_numbers = #tpu.dot_dimension_numbers<[2], [1], [1], [2], [0, 0, 0, 1, 1, 2], [0], [0]>} : vector<4x32x32xf32>, vector<4x32x4xf32>, vector<4x32x4xf32> -> vector<4x32x4xf32>
    "tpu.trace_stop"() : () -> ()
    %89 = tpu.concatenate %70, %88 in 2 : vector<4x32x4xf32>, vector<4x32x4xf32> -> vector<4x32x8xf32>
    %90 = arith.addf %50, %89 : vector<4x32x8xf32>
    %c0_43 = arith.constant 0 : index
    %c0_44 = arith.constant 0 : index
    %c0_45 = arith.constant 0 : index
    %91 = vector.load %arg9[%c0_43, %c0_44, %c0_45] : memref<1x16x8xf32, #tpu.memory_space<vmem>>, vector<1x16x8xf32>
    %92 = vector.shape_cast %91 : vector<1x16x8xf32> to vector<16x8xf32>
    %93 = vector.shape_cast %90 : vector<4x32x8xf32> to vector<128x8xf32>
    "tpu.trace_start"() <{level = 10 : i32, message = "ck,lk->cl"}> : () -> ()
    %cst_46 = arith.constant dense<0.000000e+00> : vector<16x128xf32>
    %94 = tpu.matmul %92, %93, %cst_46 {dimension_numbers = #tpu.dot_dimension_numbers<[1], [1], [0], [0], [0, 0, 1, 0], [], []>} : vector<16x8xf32>, vector<128x8xf32>, vector<16x128xf32> -> vector<16x128xf32>
    "tpu.trace_stop"() : () -> ()
    %c0_47 = arith.constant 0 : index
    %c0_48 = arith.constant 0 : index
    %c0_49 = arith.constant 0 : index
    %95 = vector.load %arg10[%c0_47, %c0_48, %c0_49] : memref<1x16x128xf32, #tpu.memory_space<vmem>>, vector<1x16x128xf32>
    %96 = vector.shape_cast %95 : vector<1x16x128xf32> to vector<16x128xf32>
    %97 = vector.shape_cast %94 : vector<16x128xf32> to vector<1x16x128xf32>
    tpu.vector_store %arg10[%c0_47, %c0_48, %c0_49], %97 {strides = array<i32>} : memref<1x16x128xf32, #tpu.memory_space<vmem>>, vector<1x16x128xf32>,
    return
  }
  func.func @transform_0(%arg0: i32, %arg1: i32) -> (i32, i32, i32) {
    %c0_i32 = arith.constant 0 : i32
    %c0_i32_0 = arith.constant 0 : i32
    return %arg0, %arg1, %c0_i32 : i32, i32, i32
  }
  func.func @transform_1(%arg0: i32, %arg1: i32) -> (i32, i32) {
    %c0_i32 = arith.constant 0 : i32
    %c0_i32_0 = arith.constant 0 : i32
    %c0_i32_1 = arith.constant 0 : i32
    return %c0_i32, %c0_i32_0 : i32, i32
  }
  func.func @transform_2(%arg0: i32, %arg1: i32) -> (i32, i32) {
    %c0_i32 = arith.constant 0 : i32
    %c0_i32_0 = arith.constant 0 : i32
    %c0_i32_1 = arith.constant 0 : i32
    return %c0_i32, %c0_i32_0 : i32, i32
  }
  func.func @transform_3(%arg0: i32, %arg1: i32) -> (i32, i32, i32) {
    %c0_i32 = arith.constant 0 : i32
    %c0_i32_0 = arith.constant 0 : i32
    %c0_i32_1 = arith.constant 0 : i32
    return %arg0, %c0_i32, %c0_i32_0 : i32, i32, i32
  }
  func.func @transform_4(%arg0: i32, %arg1: i32) -> (i32, i32, i32) {
    %c0_i32 = arith.constant 0 : i32
    %c0_i32_0 = arith.constant 0 : i32
    %c0_i32_1 = arith.constant 0 : i32
    return %arg0, %c0_i32, %c0_i32_0 : i32, i32, i32
  }
  func.func @transform_5(%arg0: i32, %arg1: i32) -> (i32, i32, i32) {
    %c0_i32 = arith.constant 0 : i32
    %c0_i32_0 = arith.constant 0 : i32
    %c0_i32_1 = arith.constant 0 : i32
    return %arg0, %c0_i32, %c0_i32_0 : i32, i32, i32
  }
  func.func @transform_6(%arg0: i32, %arg1: i32) -> (i32, i32, i32) {
    %c0_i32 = arith.constant 0 : i32
    %c0_i32_0 = arith.constant 0 : i32
    %c0_i32_1 = arith.constant 0 : i32
    return %arg0, %c0_i32, %c0_i32_0 : i32, i32, i32
  }
  func.func @transform_7(%arg0: i32, %arg1: i32) -> (i32, i32, i32) {
    %c0_i32 = arith.constant 0 : i32
    %c0_i32_0 = arith.constant 0 : i32
    %c0_i32_1 = arith.constant 0 : i32
    return %arg0, %c0_i32, %c0_i32_0 : i32, i32, i32
  }
  func.func @transform_8(%arg0: i32, %arg1: i32) -> (i32, i32, i32) {
    %c0_i32 = arith.constant 0 : i32
    %c0_i32_0 = arith.constant 0 : i32
    return %arg0, %c0_i32, %arg1 : i32, i32, i32
  }
  func.func @transform_9(%arg0: i32, %arg1: i32) -> (i32, i32, i32, i32, i32) {
    %c0_i32 = arith.constant 0 : i32
    %c0_i32_0 = arith.constant 0 : i32
    %c0_i32_1 = arith.constant 0 : i32
    %c0_i32_2 = arith.constant 0 : i32
    return %arg0, %c0_i32, %arg1, %c0_i32_0, %c0_i32_1 : i32, i32, i32, i32, i32
  }
}

</mosaic_0001>

<llo_original>
// kernel: cswin_forward_pallas.1
$region0: #{cswin_forward_pallas.1}
  #allocation0 [shape = 'u32[]', space=smem, size = 0x4, offset = 0x4, fixed_abs, tag = 'smem constant byte address 0x4 - core index']
  #allocation1 [shape = 'u32[144,128]{1,0:T(1,128)}', space=vmem, size = 0x12000, scoped, tag = 'internal scratch']
  %s0 = inlined_call_operand.vmem [shape: f32[2,128,16], index: 0, kind: input, shape index: {}]
  %s1 = inlined_call_operand.vmem [shape: f32[1,16], index: 1, kind: input, shape index: {}]
  %s2 = inlined_call_operand.vmem [shape: f32[1,16], index: 2, kind: input, shape index: {}]
  %s3 = inlined_call_operand.vmem [shape: f32[2,16,24], index: 3, kind: input, shape index: {}]
  %s4 = inlined_call_operand.vmem [shape: f32[2,9,8], index: 4, kind: input, shape index: {}]
  %s5 = inlined_call_operand.vmem [shape: f32[2,1,8], index: 5, kind: input, shape index: {}]
  %s6 = inlined_call_operand.vmem [shape: f32[2,288,32], index: 6, kind: input, shape index: {}]
  %s7 = inlined_call_operand.vmem [shape: f32[2,16,8], index: 7, kind: input, shape index: {}]
  %s8 = inlined_call_operand.vmem [shape: f32[2,16,128], index: 8, kind: output, shape index: {0}]
  %s9 = inlined_call_operand.vmem [shape: f32[2,2,4,32,32], index: 9, kind: output, shape index: {1}]
  %10 = xla_tuple %s8, %s9
  %s11 = sld [smem:[#allocation0]]
  $region73: #{cswin_forward_pallas.1} parent=0
    _
  %s13 = ssub.s32 1, %s11
  %s14 = scalar_select 0, %s13, %s11
  loop: start=0, step=1, limit=4
  $region2: #{cswin_forward_pallas.1} parent=0 // loop_pre_header
    _
  $region3: #{cswin_forward_pallas.1} parent=0 // loop_header
    %s16 = sphi 0, %s20
    %p17 = scmp.ge.s32.totalorder %s16, 4
    %s23 = sphi 0, %s35
    %s24 = sphi 0, %s31
    %s25 = sphi 0, %s23
    %s26 = sphi 0, %s24
    %s27 = sphi 0, %s25
    %s28 = sphi 0, %s26
    %s40 = sphi 0, %s42
    %s43 = sphi 0, %s40
    %s44 = sphi 0, %s43
    %s60 = sphi 0, %s44
    %s64 = sphi 0, %s64
    %s66 = sphi 0, %s64
    %s67 = sphi 0, %s66
    %s81 = sphi 0, %s67
    %s85 = sphi 0, %s85
    %s87 = sphi 0, %s85
    %s88 = sphi 0, %s87
    %s102 = sphi 0, %s88
    %s108 = sphi 0, %s110
    %s111 = sphi 0, %s108
    %s112 = sphi 0, %s111
    %s128 = sphi 0, %s112
    %s134 = sphi 0, %s136
    %s137 = sphi 0, %s134
    %s138 = sphi 0, %s137
    %s154 = sphi 0, %s138
    %s160 = sphi 0, %s162
    %s163 = sphi 0, %s160
    %s164 = sphi 0, %s163
    %s180 = sphi 0, %s164
    %s186 = sphi 0, %s188
    %s189 = sphi 0, %s186
    %s190 = sphi 0, %s189
    %s206 = sphi 0, %s190
    %s212 = sphi 0, %s214
    %s215 = sphi 0, %s212
    %s216 = sphi 0, %s215
    %s232 = sphi 0, %s216
    %s240 = sphi 0, %s242
    %s243 = sphi 0, %s240
    %s244 = sphi 0, %s243
    %s260 = sphi 0, %s244
    %s268 = sphi 0, %s270
    %s271 = sphi 0, %s268
    %s272 = sphi 0, %s271
    %s288 = sphi 0, %s272
  $region4: #{cswin_forward_pallas.1} parent=0 // loop_header_branch
    %19 = sbr.rel (%p17) target = $region8
  $region5: #{cswin_forward_pallas.1} parent=0 // loop_body
    %s21 = ssub.s32 %s16, 1
    %s22 = ssub.s32 %s16, 2
    %s29 = sadd.s32 1, %s24
    %p30 = scmp.ge.s32.totalorder %s29, 1
    %s31 = scalar_select %p30, 0, %s29
    %s32 = sadd.s32 1, %s23
    %s33 = scalar_select %p30, %s32, %s23
    %p34 = scmp.ge.s32.totalorder %s33, 2
    %s35 = scalar_select %p34, 0, %s33
    %s36 = ssub.s32 %s23, %s35
    %s37 = ssub.s32 %s24, %s31
    %s38 = sor.u32 %s36, %s37
    %p39 = scmp.eq.s32.totalorder %s38, 0
    %s41 = sadd.s32 %s40, 1
    %s42 = scalar_select %p39, %s40, %s41
    %p45 = pneg %p39
    %p46 = scmp.eq.s32.totalorder %s16, 1
    %p47 = por %p45, %p46
    %p48 = scmp.ne.s32.totalorder %s40, %s43
    %p49 = scmp.eq.s32.totalorder %s16, 0
    %p50 = por %p48, %p49
    %p51 = scmp.ne.s32.totalorder %s40, %s43
    %p52 = scmp.eq.s32.totalorder %s21, 1
    %p53 = por %p51, %p52
    %p54 = scmp.ne.s32.totalorder %s43, %s44
    %p55 = scmp.eq.s32.totalorder %s21, 0
    %p56 = por %p54, %p55
    %p57 = scmp.ne.s32.totalorder %s43, %s44
    %p58 = scmp.eq.s32.totalorder %s22, 1
    %p59 = por %p57, %p58
    %p61 = scmp.ne.s32.totalorder %s44, %s60
    %p62 = scmp.eq.s32.totalorder %s22, 0
    %p63 = por %p61, %p62
    %s65 = sadd.s32 %s64, 1
    %p68 = scmp.eq.s32.totalorder %s16, 1
    %p69 = scmp.ne.s32.totalorder %s64, %s66
    %p70 = scmp.eq.s32.totalorder %s16, 0
    %p71 = por %p69, %p70
    %p72 = scmp.ne.s32.totalorder %s64, %s66
    %p73 = scmp.eq.s32.totalorder %s21, 1
    %p74 = por %p72, %p73
    %p75 = scmp.ne.s32.totalorder %s66, %s67
    %p76 = scmp.eq.s32.totalorder %s21, 0
    %p77 = por %p75, %p76
    %p78 = scmp.ne.s32.totalorder %s66, %s67
    %p79 = scmp.eq.s32.totalorder %s22, 1
    %p80 = por %p78, %p79
    %p82 = scmp.ne.s32.totalorder %s67, %s81
    %p83 = scmp.eq.s32.totalorder %s22, 0
    %p84 = por %p82, %p83
    %s86 = sadd.s32 %s85, 1
    %p89 = scmp.eq.s32.totalorder %s16, 1
    %p90 = scmp.ne.s32.totalorder %s85, %s87
    %p91 = scmp.eq.s32.totalorder %s16, 0
    %p92 = por %p90, %p91
    %p93 = scmp.ne.s32.totalorder %s85, %s87
    %p94 = scmp.eq.s32.totalorder %s21, 1
    %p95 = por %p93, %p94
    %p96 = scmp.ne.s32.totalorder %s87, %s88
    %p97 = scmp.eq.s32.totalorder %s21, 0
    %p98 = por %p96, %p97
    %p99 = scmp.ne.s32.totalorder %s87, %s88
    %p100 = scmp.eq.s32.totalorder %s22, 1
    %p101 = por %p99, %p100
    %p103 = scmp.ne.s32.totalorder %s88, %s102
    %p104 = scmp.eq.s32.totalorder %s22, 0
    %p105 = por %p103, %p104
    %s106 = ssub.s32 %s23, %s35
    %p107 = scmp.eq.s32.totalorder %s106, 0
    %s109 = sadd.s32 %s108, 1
    %s110 = scalar_select %p107, %s108, %s109
    %p113 = pneg %p107
    %p114 = scmp.eq.s32.totalorder %s16, 1
    %p115 = por %p113, %p114
    %p116 = scmp.ne.s32.totalorder %s108, %s111
    %p117 = scmp.eq.s32.totalorder %s16, 0
    %p118 = por %p116, %p117
    %p119 = scmp.ne.s32.totalorder %s108, %s111
    %p120 = scmp.eq.s32.totalorder %s21, 1
    %p121 = por %p119, %p120
    %p122 = scmp.ne.s32.totalorder %s111, %s112
    %p123 = scmp.eq.s32.totalorder %s21, 0
    %p124 = por %p122, %p123
    %p125 = scmp.ne.s32.totalorder %s111, %s112
    %p126 = scmp.eq.s32.totalorder %s22, 1
    %p127 = por %p125, %p126
    %p129 = scmp.ne.s32.totalorder %s112, %s128
    %p130 = scmp.eq.s32.totalorder %s22, 0
    %p131 = por %p129, %p130
    %s132 = ssub.s32 %s23, %s35
    %p133 = scmp.eq.s32.totalorder %s132, 0
    %s135 = sadd.s32 %s134, 1
    %s136 = scalar_select %p133, %s134, %s135
    %p139 = pneg %p133
    %p140 = scmp.eq.s32.totalorder %s16, 1
    %p141 = por %p139, %p140
    %p142 = scmp.ne.s32.totalorder %s134, %s137
    %p143 = scmp.eq.s32.totalorder %s16, 0
    %p144 = por %p142, %p143
    %p145 = scmp.ne.s32.totalorder %s134, %s137
    %p146 = scmp.eq.s32.totalorder %s21, 1
    %p147 = por %p145, %p146
    %p148 = scmp.ne.s32.totalorder %s137, %s138
    %p149 = scmp.eq.s32.totalorder %s21, 0
    %p150 = por %p148, %p149
    %p151 = scmp.ne.s32.totalorder %s137, %s138
    %p152 = scmp.eq.s32.totalorder %s22, 1
    %p153 = por %p151, %p152
    %p155 = scmp.ne.s32.totalorder %s138, %s154
    %p156 = scmp.eq.s32.totalorder %s22, 0
    %p157 = por %p155, %p156
    %s158 = ssub.s32 %s23, %s35
    %p159 = scmp.eq.s32.totalorder %s158, 0
    %s161 = sadd.s32 %s160, 1
    %s162 = scalar_select %p159, %s160, %s161
    %p165 = pneg %p159
    %p166 = scmp.eq.s32.totalorder %s16, 1
    %p167 = por %p165, %p166
    %p168 = scmp.ne.s32.totalorder %s160, %s163
    %p169 = scmp.eq.s32.totalorder %s16, 0
    %p170 = por %p168, %p169
    %p171 = scmp.ne.s32.totalorder %s160, %s163
    %p172 = scmp.eq.s32.totalorder %s21, 1
    %p173 = por %p171, %p172
    %p174 = scmp.ne.s32.totalorder %s163, %s164
    %p175 = scmp.eq.s32.totalorder %s21, 0
    %p176 = por %p174, %p175
    %p177 = scmp.ne.s32.totalorder %s163, %s164
    %p178 = scmp.eq.s32.totalorder %s22, 1
    %p179 = por %p177, %p178
    %p181 = scmp.ne.s32.totalorder %s164, %s180
    %p182 = scmp.eq.s32.totalorder %s22, 0
    %p183 = por %p181, %p182
    %s184 = ssub.s32 %s23, %s35
    %p185 = scmp.eq.s32.totalorder %s184, 0
    %s187 = sadd.s32 %s186, 1
    %s188 = scalar_select %p185, %s186, %s187
    %p191 = pneg %p185
    %p192 = scmp.eq.s32.totalorder %s16, 1
    %p193 = por %p191, %p192
    %p194 = scmp.ne.s32.totalorder %s186, %s189
    %p195 = scmp.eq.s32.totalorder %s16, 0
    %p196 = por %p194, %p195
    %p197 = scmp.ne.s32.totalorder %s186, %s189
    %p198 = scmp.eq.s32.totalorder %s21, 1
    %p199 = por %p197, %p198
    %p200 = scmp.ne.s32.totalorder %s189, %s190
    %p201 = scmp.eq.s32.totalorder %s21, 0
    %p202 = por %p200, %p201
    %p203 = scmp.ne.s32.totalorder %s189, %s190
    %p204 = scmp.eq.s32.totalorder %s22, 1
    %p205 = por %p203, %p204
    %p207 = scmp.ne.s32.totalorder %s190, %s206
    %p208 = scmp.eq.s32.totalorder %s22, 0
    %p209 = por %p207, %p208
    %s210 = ssub.s32 %s23, %s35
    %p211 = scmp.eq.s32.totalorder %s210, 0
    %s213 = sadd.s32 %s212, 1
    %s214 = scalar_select %p211, %s212, %s213
    %p217 = pneg %p211
    %p218 = scmp.eq.s32.totalorder %s16, 1
    %p219 = por %p217, %p218
    %p220 = scmp.ne.s32.totalorder %s212, %s215
    %p221 = scmp.eq.s32.totalorder %s16, 0
    %p222 = por %p220, %p221
    %p223 = scmp.ne.s32.totalorder %s212, %s215
    %p224 = scmp.eq.s32.totalorder %s21, 1
    %p225 = por %p223, %p224
    %p226 = scmp.ne.s32.totalorder %s215, %s216
    %p227 = scmp.eq.s32.totalorder %s21, 0
    %p228 = por %p226, %p227
    %p229 = scmp.ne.s32.totalorder %s215, %s216
    %p230 = scmp.eq.s32.totalorder %s22, 1
    %p231 = por %p229, %p230
    %p233 = scmp.ne.s32.totalorder %s216, %s232
    %p234 = scmp.eq.s32.totalorder %s22, 0
    %p235 = por %p233, %p234
    %s236 = ssub.s32 %s23, %s35
    %s237 = ssub.s32 %s24, %s31
    %s238 = sor.u32 %s236, %s237
    %p239 = scmp.eq.s32.totalorder %s238, 0
    %s241 = sadd.s32 %s240, 1
    %s242 = scalar_select %p239, %s240, %s241
    %p245 = pneg %p239
    %p246 = scmp.eq.s32.totalorder %s16, 1
    %p247 = por %p245, %p246
    %p248 = scmp.ne.s32.totalorder %s240, %s243
    %p249 = scmp.eq.s32.totalorder %s16, 0
    %p250 = por %p248, %p249
    %p251 = scmp.ne.s32.totalorder %s240, %s243
    %p252 = scmp.eq.s32.totalorder %s21, 1
    %p253 = por %p251, %p252
    %p254 = scmp.ne.s32.totalorder %s243, %s244
    %p255 = scmp.eq.s32.totalorder %s21, 0
    %p256 = por %p254, %p255
    %p257 = scmp.ne.s32.totalorder %s243, %s244
    %p258 = scmp.eq.s32.totalorder %s22, 1
    %p259 = por %p257, %p258
    %p261 = scmp.ne.s32.totalorder %s244, %s260
    %p262 = scmp.eq.s32.totalorder %s22, 0
    %p263 = por %p261, %p262
    %s264 = ssub.s32 %s23, %s35
    %s265 = ssub.s32 %s24, %s31
    %s266 = sor.u32 %s264, %s265
    %p267 = scmp.eq.s32.totalorder %s266, 0
    %s269 = sadd.s32 %s268, 1
    %s270 = scalar_select %p267, %s268, %s269
    %p273 = pneg %p267
    %p274 = scmp.eq.s32.totalorder %s16, 1
    %p275 = por %p273, %p274
    %p276 = scmp.ne.s32.totalorder %s268, %s271
    %p277 = scmp.eq.s32.totalorder %s16, 0
    %p278 = por %p276, %p277
    %p279 = scmp.ne.s32.totalorder %s268, %s271
    %p280 = scmp.eq.s32.totalorder %s21, 1
    %p281 = por %p279, %p280
    %p282 = scmp.ne.s32.totalorder %s271, %s272
    %p283 = scmp.eq.s32.totalorder %s21, 0
    %p284 = por %p282, %p283
    %p285 = scmp.ne.s32.totalorder %s271, %s272
    %p286 = scmp.eq.s32.totalorder %s22, 1
    %p287 = por %p285, %p286
    %p289 = scmp.ne.s32.totalorder %s272, %s288
    %p290 = scmp.eq.s32.totalorder %s22, 0
    %p291 = por %p289, %p290
    %p292 = scmp.le.s32.totalorder 1, %s16
    %p293 = scmp.lt.s32.totalorder %s16, 3
    %p294 = pnand %p292, %p293
    %p295 = pneg %p294
    // Predicated region
    $region9: #{cswin_forward_pallas.1} parent=5 // pred_check
      _
    $region10: #{cswin_forward_pallas.1} parent=5 // pred_check_branch
      %297 = sbr.rel (%p294) target = $region12
    $region11: #{cswin_forward_pallas.1} parent=5 // pred_region
      %s298 = ssub.s32 %s16, 1
      // Predicated region
      $region13: #{cswin_forward_pallas.1} parent=11 // pred_check
        %p299 = pneg %p77
      $region14: #{cswin_forward_pallas.1} parent=11 // pred_check_branch
        %301 = sbr.rel (%p299) target = $region16
      $region15: #{cswin_forward_pallas.1} parent=11 // pred_region
        _
      $region16: #{cswin_forward_pallas.1} parent=11 // pred_fallthru
        _
      // Predicated region
      $region17: #{cswin_forward_pallas.1} parent=11 // pred_check
        %p302 = pneg %p98
      $region18: #{cswin_forward_pallas.1} parent=11 // pred_check_branch
        %304 = sbr.rel (%p302) target = $region20
      $region19: #{cswin_forward_pallas.1} parent=11 // pred_region
        _
      $region20: #{cswin_forward_pallas.1} parent=11 // pred_fallthru
        _
    $region12: #{cswin_forward_pallas.1} parent=5 // pred_fallthru
      _
    %p305 = scmp.lt.s32.totalorder %s16, 2
    // Predicated region
    $region21: #{cswin_forward_pallas.1} parent=5 // pred_check
      %p306 = pneg %p305
    $region22: #{cswin_forward_pallas.1} parent=5 // pred_check_branch
      %308 = sbr.rel (%p306) target = $region24
    $region23: #{cswin_forward_pallas.1} parent=5 // pred_region
      // Predicated region
      $region25: #{cswin_forward_pallas.1} parent=23 // pred_check
        %p309 = pneg %p50
      $region26: #{cswin_forward_pallas.1} parent=23 // pred_check_branch
        %311 = sbr.rel (%p309) target = $region28
      $region27: #{cswin_forward_pallas.1} parent=23 // pred_region
        %s312 = smul.u32 16, %s24
        %p313 = scmp.lt.s32.totalorder %s23, 1
        %s314 = scalar_select %p313, %s23, 1
        %p315 = scmp.lt.s32.totalorder %s312, 15
        %s316 = scalar_select %p315, %s312, 15
        %s317 = smul.addr %s314, 16
        %s318 = sadd.s32 %s316, %s317
        %s319 = smul.addr %s318, 8
        %s320 = scalar_lea.vmem %s0, %s319
        %s321 = smul.u32 16, %s24
      $region28: #{cswin_forward_pallas.1} parent=23 // pred_fallthru
        _
      // Predicated region
      $region29: #{cswin_forward_pallas.1} parent=23 // pred_check
        %p322 = pneg %p118
      $region30: #{cswin_forward_pallas.1} parent=23 // pred_check_branch
        %324 = sbr.rel (%p322) target = $region32
      $region31: #{cswin_forward_pallas.1} parent=23 // pred_region
        %p325 = scmp.lt.s32.totalorder %s23, 1
        %s326 = scalar_select %p325, %s23, 1
        %s327 = smul.addr %s326, 2
        %s328 = smul.addr %s327, 8
        %s329 = scalar_lea.vmem %s3, %s328
      $region32: #{cswin_forward_pallas.1} parent=23 // pred_fallthru
        _
      // Predicated region
      $region33: #{cswin_forward_pallas.1} parent=23 // pred_check
        %p330 = pneg %p144
      $region34: #{cswin_forward_pallas.1} parent=23 // pred_check_branch
        %332 = sbr.rel (%p330) target = $region36
      $region35: #{cswin_forward_pallas.1} parent=23 // pred_region
        %p333 = scmp.lt.s32.totalorder %s23, 1
        %s334 = scalar_select %p333, %s23, 1
        %s335 = smul.addr %s334, 2
        %s336 = smul.addr %s335, 8
        %s337 = scalar_lea.vmem %s4, %s336
      $region36: #{cswin_forward_pallas.1} parent=23 // pred_fallthru
        _
      // Predicated region
      $region37: #{cswin_forward_pallas.1} parent=23 // pred_check
        %p338 = pneg %p170
      $region38: #{cswin_forward_pallas.1} parent=23 // pred_check_branch
        %340 = sbr.rel (%p338) target = $region40
      $region39: #{cswin_forward_pallas.1} parent=23 // pred_region
        %p341 = scmp.lt.s32.totalorder %s23, 1
        %s342 = scalar_select %p341, %s23, 1
        %s343 = scalar_lea.vmem %s5, %s342
      $region40: #{cswin_forward_pallas.1} parent=23 // pred_fallthru
        _
      // Predicated region
      $region41: #{cswin_forward_pallas.1} parent=23 // pred_check
        %p344 = pneg %p196
      $region42: #{cswin_forward_pallas.1} parent=23 // pred_check_branch
        %346 = sbr.rel (%p344) target = $region44
      $region43: #{cswin_forward_pallas.1} parent=23 // pred_region
        %p347 = scmp.lt.s32.totalorder %s23, 1
        %s348 = scalar_select %p347, %s23, 1
        %s349 = smul.addr %s348, 36
        %s350 = smul.addr %s349, 8
        %s351 = scalar_lea.vmem %s6, %s350
      $region44: #{cswin_forward_pallas.1} parent=23 // pred_fallthru
        _
      // Predicated region
      $region45: #{cswin_forward_pallas.1} parent=23 // pred_check
        %p352 = pneg %p222
      $region46: #{cswin_forward_pallas.1} parent=23 // pred_check_branch
        %354 = sbr.rel (%p352) target = $region48
      $region47: #{cswin_forward_pallas.1} parent=23 // pred_region
        %p355 = scmp.lt.s32.totalorder %s23, 1
        %s356 = scalar_select %p355, %s23, 1
        %s357 = smul.addr %s356, 2
        %s358 = smul.addr %s357, 8
        %s359 = scalar_lea.vmem %s7, %s358
      $region48: #{cswin_forward_pallas.1} parent=23 // pred_fallthru
        _
    $region24: #{cswin_forward_pallas.1} parent=5 // pred_fallthru
      _
    %p360 = scmp.le.s32.totalorder 1, %s16
    %p361 = scmp.lt.s32.totalorder %s16, 3
    %p362 = pnand %p360, %p361
    %p363 = pneg %p362
    // Predicated region
    $region49: #{cswin_forward_pallas.1} parent=5 // pred_check
      _
    $region50: #{cswin_forward_pallas.1} parent=5 // pred_check_branch
      %365 = sbr.rel (%p362) target = $region52
    $region51: #{cswin_forward_pallas.1} parent=5 // pred_region
      %s366 = ssub.s32 %s16, 1
      %s367 = smul.u32 16, %s26
      %p368 = scmp.lt.s32.totalorder %s25, 1
      %s369 = scalar_select %p368, %s25, 1
      %p370 = scmp.lt.s32.totalorder %s367, 15
      %s371 = scalar_select %p370, %s367, 15
      %s372 = smul.addr %s369, 16
      %s373 = sadd.s32 %s371, %s372
      %s374 = smul.addr %s373, 8
      %s375 = scalar_lea.vmem %s0, %s374
      %p376 = pneg %p56
      %p377 = pneg %p53
      %p378 = pneg %p77
      %p379 = pneg %p74
      %p380 = pneg %p98
      %p381 = pneg %p95
      %p382 = scmp.lt.s32.totalorder %s25, 1
      %s383 = scalar_select %p382, %s25, 1
      %s384 = smul.addr %s383, 2
      %s385 = smul.addr %s384, 8
      %s386 = scalar_lea.vmem %s3, %s385
      %p387 = pneg %p124
      %p388 = pneg %p121
      %p389 = scmp.lt.s32.totalorder %s25, 1
      %s390 = scalar_select %p389, %s25, 1
      %s391 = smul.addr %s390, 2
      %s392 = smul.addr %s391, 8
      %s393 = scalar_lea.vmem %s4, %s392
      %p394 = pneg %p150
      %p395 = pneg %p147
      %p396 = scmp.lt.s32.totalorder %s25, 1
      %s397 = scalar_select %p396, %s25, 1
      %s398 = scalar_lea.vmem %s5, %s397
      %p399 = pneg %p176
      %p400 = pneg %p173
      %p401 = scmp.lt.s32.totalorder %s25, 1
      %s402 = scalar_select %p401, %s25, 1
      %s403 = smul.addr %s402, 36
      %s404 = smul.addr %s403, 8
      %s405 = scalar_lea.vmem %s6, %s404
      %p406 = pneg %p202
      %p407 = pneg %p199
      %p408 = scmp.lt.s32.totalorder %s25, 1
      %s409 = scalar_select %p408, %s25, 1
      %s410 = smul.addr %s409, 2
      %s411 = smul.addr %s410, 8
      %s412 = scalar_lea.vmem %s7, %s411
      %p413 = pneg %p228
      %p414 = pneg %p225
      %p415 = pneg %p256
      %p416 = pneg %p253
      %p417 = scmp.lt.s32.totalorder %s25, 1
      %s418 = scalar_select %p417, %s25, 1
      %p419 = scmp.lt.s32.totalorder %s26, 0
      %s420 = scalar_select %p419, %s26, 0
      %s421 = smul.addr %s418, 2
      %s422 = sadd.s32 %s420, %s421
      %s423 = smul.addr %s422, 8
      %s424 = scalar_lea.vmem %s8, %s423
      %p425 = pneg %p284
      %p426 = pneg %p281
      %s427 = smul.u32 4, %s26
      %p428 = scmp.lt.s32.totalorder %s25, 1
      %s429 = scalar_select %p428, %s25, 1
      %p430 = scmp.lt.s32.totalorder %s427, 3
      %s431 = scalar_select %p430, %s427, 3
      %s432 = smul.addr %s431, 4
      %s433 = smul.addr %s429, 32
      %s434 = sadd.s32 %s432, %s433
      %s435 = smul.addr %s434, 8
      %s436 = scalar_lea.vmem %s9, %s435
      %s437 = smul.u32 16, %s26
      %p438 = scmp.lt.s32.totalorder %s25, 1
      %s439 = scalar_select %p438, %s25, 1
      %p440 = scmp.lt.s32.totalorder %s437, 15
      %s441 = scalar_select %p440, %s437, 15
      %s442 = smul.addr %s439, 16
      %s443 = sadd.s32 %s441, %s442
      %s444 = smul.addr %s443, 8
      %s445 = scalar_lea.vmem %s0, %s444
      %s446 = smul.u32 16, %s26
      %p447 = scmp.lt.s32.totalorder %s25, 1
      %s448 = scalar_select %p447, %s25, 1
      %s449 = smul.addr %s448, 2
      %s450 = smul.addr %s449, 8
      %s451 = scalar_lea.vmem %s3, %s450
      %p452 = scmp.lt.s32.totalorder %s25, 1
      %s453 = scalar_select %p452, %s25, 1
      %s454 = smul.addr %s453, 2
      %s455 = smul.addr %s454, 8
      %s456 = scalar_lea.vmem %s4, %s455
      %p457 = scmp.lt.s32.totalorder %s25, 1
      %s458 = scalar_select %p457, %s25, 1
      %s459 = scalar_lea.vmem %s5, %s458
      %p460 = scmp.lt.s32.totalorder %s25, 1
      %s461 = scalar_select %p460, %s25, 1
      %s462 = smul.addr %s461, 36
      %s463 = smul.addr %s462, 8
      %s464 = scalar_lea.vmem %s6, %s463
      %p465 = scmp.lt.s32.totalorder %s25, 1
      %s466 = scalar_select %p465, %s25, 1
      %s467 = smul.addr %s466, 2
      %s468 = smul.addr %s467, 8
      %s469 = scalar_lea.vmem %s7, %s468
      %p470 = scmp.lt.s32.totalorder %s25, 1
      %s471 = scalar_select %p470, %s25, 1
      %p472 = scmp.lt.s32.totalorder %s26, 0
      %s473 = scalar_select %p472, %s26, 0
      %s474 = smul.addr %s471, 2
      %s475 = sadd.s32 %s473, %s474
      %s476 = smul.addr %s475, 8
      %s477 = scalar_lea.vmem %s8, %s476
      %s478 = smul.u32 4, %s26
      %p479 = scmp.lt.s32.totalorder %s25, 1
      %s480 = scalar_select %p479, %s25, 1
      %p481 = scmp.lt.s32.totalorder %s478, 3
      %s482 = scalar_select %p481, %s478, 3
      %s483 = smul.addr %s482, 4
      %s484 = smul.addr %s480, 32
      %s485 = sadd.s32 %s483, %s484
      %s486 = smul.addr %s485, 8
      %s487 = scalar_lea.vmem %s9, %s486
      %s488 = smul.u32 4, %s26
      %v489 = vld [vmem:[%s445] sm:$0xff]
      %v490 = vld [vmem:[%s445 + $0x8] sm:$0xff]
      %v491 = vld [vmem:[%s445 + $0x10] sm:$0xff]
      %v492 = vld [vmem:[%s445 + $0x18] sm:$0xff]
      %v493 = vld [vmem:[%s445 + $0x20] sm:$0xff]
      %v494 = vld [vmem:[%s445 + $0x28] sm:$0xff]
      %v495 = vld [vmem:[%s445 + $0x30] sm:$0xff]
      %v496 = vld [vmem:[%s445 + $0x38] sm:$0xff]
      %v497 = vld [vmem:[%s445 + $0x40] sm:$0xff]
      %v498 = vld [vmem:[%s445 + $0x48] sm:$0xff]
      %v499 = vld [vmem:[%s445 + $0x50] sm:$0xff]
      %v500 = vld [vmem:[%s445 + $0x58] sm:$0xff]
      %v501 = vld [vmem:[%s445 + $0x60] sm:$0xff]
      %v502 = vld [vmem:[%s445 + $0x68] sm:$0xff]
      %v503 = vld [vmem:[%s445 + $0x70] sm:$0xff]
      %v504 = vld [vmem:[%s445 + $0x78] sm:$0xff]
      %vm505 = vcmask 130048
      %v506 = vsel %vm505, %v489, 0.0
      %507 = vadd.xlane.f32.xlu0 %v506
      %v508 = vpop.xlane.xlu0 %507
      %v509 = vsel %vm505, %v490, 0.0
      %510 = vadd.xlane.f32.xlu0 %v509
      %v511 = vpop.xlane.xlu0 %510
      %v512 = vsel %vm505, %v491, 0.0
      %513 = vadd.xlane.f32.xlu0 %v512
      %v514 = vpop.xlane.xlu0 %513
      %v515 = vsel %vm505, %v492, 0.0
      %516 = vadd.xlane.f32.xlu0 %v515
      %v517 = vpop.xlane.xlu0 %516
      %v518 = vsel %vm505, %v493, 0.0
      %519 = vadd.xlane.f32.xlu0 %v518
      %v520 = vpop.xlane.xlu0 %519
      %v521 = vsel %vm505, %v494, 0.0
      %522 = vadd.xlane.f32.xlu0 %v521
      %v523 = vpop.xlane.xlu0 %522
      %v524 = vsel %vm505, %v495, 0.0
      %525 = vadd.xlane.f32.xlu0 %v524
      %v526 = vpop.xlane.xlu0 %525
      %v527 = vsel %vm505, %v496, 0.0
      %528 = vadd.xlane.f32.xlu0 %v527
      %v529 = vpop.xlane.xlu0 %528
      %v530 = vsel %vm505, %v497, 0.0
      %531 = vadd.xlane.f32.xlu0 %v530
      %v532 = vpop.xlane.xlu0 %531
      %v533 = vsel %vm505, %v498, 0.0
      %534 = vadd.xlane.f32.xlu0 %v533
      %v535 = vpop.xlane.xlu0 %534
      %v536 = vsel %vm505, %v499, 0.0
      %537 = vadd.xlane.f32.xlu0 %v536
      %v538 = vpop.xlane.xlu0 %537
      %v539 = vsel %vm505, %v500, 0.0
      %540 = vadd.xlane.f32.xlu0 %v539
      %v541 = vpop.xlane.xlu0 %540
      %v542 = vsel %vm505, %v501, 0.0
      %543 = vadd.xlane.f32.xlu0 %v542
      %v544 = vpop.xlane.xlu0 %543
      %v545 = vsel %vm505, %v502, 0.0
      %546 = vadd.xlane.f32.xlu0 %v545
      %v547 = vpop.xlane.xlu0 %546
      %v548 = vsel %vm505, %v503, 0.0
      %549 = vadd.xlane.f32.xlu0 %v548
      %v550 = vpop.xlane.xlu0 %549
      %v551 = vsel %vm505, %v504, 0.0
      %552 = vadd.xlane.f32.xlu0 %v551
      %v553 = vpop.xlane.xlu0 %552
      %v554 = vrcp.pop 16.0
      %v555 = vmul.f32 %v508, %v554
      %v556 = vmul.f32 %v511, %v554
      %v557 = vmul.f32 %v514, %v554
      %v558 = vmul.f32 %v517, %v554
      %v559 = vmul.f32 %v520, %v554
      %v560 = vmul.f32 %v523, %v554
      %v561 = vmul.f32 %v526, %v554
      %v562 = vmul.f32 %v529, %v554
      %v563 = vmul.f32 %v532, %v554
      %v564 = vmul.f32 %v535, %v554
      %v565 = vmul.f32 %v538, %v554
      %v566 = vmul.f32 %v541, %v554
      %v567 = vmul.f32 %v544, %v554
      %v568 = vmul.f32 %v547, %v554
      %v569 = vmul.f32 %v550, %v554
      %v570 = vmul.f32 %v553, %v554
      %v571 = vsub.f32 %v489, %v555
      %v572 = vsub.f32 %v490, %v556
      %v573 = vsub.f32 %v491, %v557
      %v574 = vsub.f32 %v492, %v558
      %v575 = vsub.f32 %v493, %v559
      %v576 = vsub.f32 %v494, %v560
      %v577 = vsub.f32 %v495, %v561
      %v578 = vsub.f32 %v496, %v562
      %v579 = vsub.f32 %v497, %v563
      %v580 = vsub.f32 %v498, %v564
      %v581 = vsub.f32 %v499, %v565
      %v582 = vsub.f32 %v500, %v566
      %v583 = vsub.f32 %v501, %v567
      %v584 = vsub.f32 %v502, %v568
      %v585 = vsub.f32 %v503, %v569
      %v586 = vsub.f32 %v504, %v570
      %v587 = vmul.f32 %v571, %v571
      %v588 = vmul.f32 %v572, %v572
      %v589 = vmul.f32 %v573, %v573
      %v590 = vmul.f32 %v574, %v574
      %v591 = vmul.f32 %v575, %v575
      %v592 = vmul.f32 %v576, %v576
      %v593 = vmul.f32 %v577, %v577
      %v594 = vmul.f32 %v578, %v578
      %v595 = vmul.f32 %v579, %v579
      %v596 = vmul.f32 %v580, %v580
      %v597 = vmul.f32 %v581, %v581
      %v598 = vmul.f32 %v582, %v582
      %v599 = vmul.f32 %v583, %v583
      %v600 = vmul.f32 %v584, %v584
      %v601 = vmul.f32 %v585, %v585
      %v602 = vmul.f32 %v586, %v586
      %v603 = vsel %vm505, %v587, 0.0
      %604 = vadd.xlane.f32.xlu0 %v603
      %v605 = vpop.xlane.xlu0 %604
      %v606 = vsel %vm505, %v588, 0.0
      %607 = vadd.xlane.f32.xlu0 %v606
      %v608 = vpop.xlane.xlu0 %607
      %v609 = vsel %vm505, %v589, 0.0
      %610 = vadd.xlane.f32.xlu0 %v609
      %v611 = vpop.xlane.xlu0 %610
      %v612 = vsel %vm505, %v590, 0.0
      %613 = vadd.xlane.f32.xlu0 %v612
      %v614 = vpop.xlane.xlu0 %613
      %v615 = vsel %vm505, %v591, 0.0
      %616 = vadd.xlane.f32.xlu0 %v615
      %v617 = vpop.xlane.xlu0 %616
      %v618 = vsel %vm505, %v592, 0.0
      %619 = vadd.xlane.f32.xlu0 %v618
      %v620 = vpop.xlane.xlu0 %619
      %v621 = vsel %vm505, %v593, 0.0
      %622 = vadd.xlane.f32.xlu0 %v621
      %v623 = vpop.xlane.xlu0 %622
      %v624 = vsel %vm505, %v594, 0.0
      %625 = vadd.xlane.f32.xlu0 %v624
      %v626 = vpop.xlane.xlu0 %625
      %v627 = vsel %vm505, %v595, 0.0
      %628 = vadd.xlane.f32.xlu0 %v627
      %v629 = vpop.xlane.xlu0 %628
      %v630 = vsel %vm505, %v596, 0.0
      %631 = vadd.xlane.f32.xlu0 %v630
      %v632 = vpop.xlane.xlu0 %631
      %v633 = vsel %vm505, %v597, 0.0
      %634 = vadd.xlane.f32.xlu0 %v633
      %v635 = vpop.xlane.xlu0 %634
      %v636 = vsel %vm505, %v598, 0.0
      %637 = vadd.xlane.f32.xlu0 %v636
      %v638 = vpop.xlane.xlu0 %637
      %v639 = vsel %vm505, %v599, 0.0
      %640 = vadd.xlane.f32.xlu0 %v639
      %v641 = vpop.xlane.xlu0 %640
      %v642 = vsel %vm505, %v600, 0.0
      %643 = vadd.xlane.f32.xlu0 %v642
      %v644 = vpop.xlane.xlu0 %643
      %v645 = vsel %vm505, %v601, 0.0
      %646 = vadd.xlane.f32.xlu0 %v645
      %v647 = vpop.xlane.xlu0 %646
      %v648 = vsel %vm505, %v602, 0.0
      %649 = vadd.xlane.f32.xlu0 %v648
      %v650 = vpop.xlane.xlu0 %649
      %v651 = vmul.f32 %v605, %v554
      %v652 = vmul.f32 %v608, %v554
      %v653 = vmul.f32 %v611, %v554
      %v654 = vmul.f32 %v614, %v554
      %v655 = vmul.f32 %v617, %v554
      %v656 = vmul.f32 %v620, %v554
      %v657 = vmul.f32 %v623, %v554
      %v658 = vmul.f32 %v626, %v554
      %v659 = vmul.f32 %v629, %v554
      %v660 = vmul.f32 %v632, %v554
      %v661 = vmul.f32 %v635, %v554
      %v662 = vmul.f32 %v638, %v554
      %v663 = vmul.f32 %v641, %v554
      %v664 = vmul.f32 %v644, %v554
      %v665 = vmul.f32 %v647, %v554
      %v666 = vmul.f32 %v650, %v554
      %v667 = vadd.f32 %v651, 0.0001
      %v668 = vadd.f32 %v652, 0.0001
      %v669 = vadd.f32 %v653, 0.0001
      %v670 = vadd.f32 %v654, 0.0001
      %v671 = vadd.f32 %v655, 0.0001
      %v672 = vadd.f32 %v656, 0.0001
      %v673 = vadd.f32 %v657, 0.0001
      %v674 = vadd.f32 %v658, 0.0001
      %v675 = vadd.f32 %v659, 0.0001
      %v676 = vadd.f32 %v660, 0.0001
      %v677 = vadd.f32 %v661, 0.0001
      %v678 = vadd.f32 %v662, 0.0001
      %v679 = vadd.f32 %v663, 0.0001
      %v680 = vadd.f32 %v664, 0.0001
      %v681 = vadd.f32 %v665, 0.0001
      %v682 = vadd.f32 %v666, 0.0001
      %v683 = vrsqrt.pop %v667
      %v684 = vrsqrt.pop %v668
      %v685 = vrsqrt.pop %v669
      %v686 = vrsqrt.pop %v670
      %v687 = vrsqrt.pop %v671
      %v688 = vrsqrt.pop %v672
      %v689 = vrsqrt.pop %v673
      %v690 = vrsqrt.pop %v674
      %v691 = vrsqrt.pop %v675
      %v692 = vrsqrt.pop %v676
      %v693 = vrsqrt.pop %v677
      %v694 = vrsqrt.pop %v678
      %v695 = vrsqrt.pop %v679
      %v696 = vrsqrt.pop %v680
      %v697 = vrsqrt.pop %v681
      %v698 = vrsqrt.pop %v682
      %v699 = vmul.f32 %v571, %v683
      %v700 = vmul.f32 %v572, %v684
      %v701 = vmul.f32 %v573, %v685
      %v702 = vmul.f32 %v574, %v686
      %v703 = vmul.f32 %v575, %v687
      %v704 = vmul.f32 %v576, %v688
      %v705 = vmul.f32 %v577, %v689
      %v706 = vmul.f32 %v578, %v690
      %v707 = vmul.f32 %v579, %v691
      %v708 = vmul.f32 %v580, %v692
      %v709 = vmul.f32 %v581, %v693
      %v710 = vmul.f32 %v582, %v694
      %v711 = vmul.f32 %v583, %v695
      %v712 = vmul.f32 %v584, %v696
      %v713 = vmul.f32 %v585, %v697
      %v714 = vmul.f32 %v586, %v698
      %v715 = vld [vmem:[%s1] sm:$0x1]
      %v717 = vlaneseq
      %v718 = vshrl.u32 %v717, 7
      %v719 = vsub.s32 0, %v718
      %v720 = vrot.slane %v715, %v719
      %v722 = vmul.f32 %v699, %v720
      %v723 = vmul.f32 %v700, %v720
      %v724 = vmul.f32 %v701, %v720
      %v725 = vmul.f32 %v702, %v720
      %v726 = vmul.f32 %v703, %v720
      %v727 = vmul.f32 %v704, %v720
      %v728 = vmul.f32 %v705, %v720
      %v729 = vmul.f32 %v706, %v720
      %v730 = vmul.f32 %v707, %v720
      %v731 = vmul.f32 %v708, %v720
      %v732 = vmul.f32 %v709, %v720
      %v733 = vmul.f32 %v710, %v720
      %v734 = vmul.f32 %v711, %v720
      %v735 = vmul.f32 %v712, %v720
      %v736 = vmul.f32 %v713, %v720
      %v737 = vmul.f32 %v714, %v720
      %v738 = vld [vmem:[%s2] sm:$0x1]
      %v740 = vlaneseq
      %v741 = vshrl.u32 %v740, 7
      %v742 = vsub.s32 0, %v741
      %v743 = vrot.slane %v738, %v742
      %v745 = vadd.f32 %v722, %v743
      %v746 = vadd.f32 %v723, %v743
      %v747 = vadd.f32 %v724, %v743
      %v748 = vadd.f32 %v725, %v743
      %v749 = vadd.f32 %v726, %v743
      %v750 = vadd.f32 %v727, %v743
      %v751 = vadd.f32 %v728, %v743
      %v752 = vadd.f32 %v729, %v743
      %v753 = vadd.f32 %v730, %v743
      %v754 = vadd.f32 %v731, %v743
      %v755 = vadd.f32 %v732, %v743
      %v756 = vadd.f32 %v733, %v743
      %v757 = vadd.f32 %v734, %v743
      %v758 = vadd.f32 %v735, %v743
      %v759 = vadd.f32 %v736, %v743
      %v760 = vadd.f32 %v737, %v743
      %v761 = vld [vmem:[%s451] sm:$0xff]
      %v762 = vld [vmem:[%s451 + $0x8] sm:$0xff]
      %v764 = vsel %vm505, %v745, 0
      %v767 = vsel %vm505, %v746, 0
      %v770 = vsel %vm505, %v747, 0
      %v773 = vsel %vm505, %v748, 0
      %v776 = vsel %vm505, %v749, 0
      %v779 = vsel %vm505, %v750, 0
      %v782 = vsel %vm505, %v751, 0
      %v785 = vsel %vm505, %v752, 0
      %v788 = vsel %vm505, %v753, 0
      %v791 = vsel %vm505, %v754, 0
      %v794 = vsel %vm505, %v755, 0
      %v797 = vsel %vm505, %v756, 0
      %v800 = vsel %vm505, %v757, 0
      %v803 = vsel %vm505, %v758, 0
      %v806 = vsel %vm505, %v759, 0
      %v809 = vsel %vm505, %v760, 0
      %811 = vmatprep.subr.mxu0 0.0
      %812 = vmatpush1.msra.mxu0 0.0
      %813 = vmatprep.subr.mxu0 0.0
      %814 = vmatpush1.msra.mxu0 0.0
      %815 = vmatprep.subr.mxu0 0.0
      %816 = vmatpush1.msra.mxu0 0.0
      %817 = vmatprep.subr.mxu0 0.0
      %818 = vmatpush1.msra.mxu0 0.0
      %819 = vmatprep.subr.mxu0 0.0
      %820 = vmatpush1.msra.mxu0 0.0
      %821 = vmatprep.subr.mxu0 0.0
      %822 = vmatpush1.msra.mxu0 0.0
      %823 = vmatprep.subr.mxu0 0.0
      %824 = vmatpush1.msra.mxu0 0.0
      %825 = vmatprep.subr.mxu0 0.0
      %826 = vmatpush1.msra.mxu0 0.0
      %827 = vmatprep.subr.mxu0 0.0
      %828 = vmatpush1.msra.mxu0 0.0
      %829 = vmatprep.subr.mxu0 0.0
      %830 = vmatpush1.msra.mxu0 0.0
      %831 = vmatprep.subr.mxu0 0.0
      %832 = vmatpush1.msra.mxu0 0.0
      %833 = vmatprep.subr.mxu0 0.0
      %834 = vmatpush1.msra.mxu0 0.0
      %835 = vmatprep.subr.mxu0 0.0
      %836 = vmatpush1.msra.mxu0 0.0
      %837 = vmatprep.subr.mxu0 0.0
      %838 = vmatpush1.msra.mxu0 0.0
      %839 = vmatprep.subr.mxu0 0.0
      %840 = vmatpush1.msra.mxu0 %v762
      %841 = vmatprep.subr.mxu0 0.0
      %842 = vmatpush1.msra.mxu0 %v761
      %843 = vmatprep.subr.mxu0 0.0
      %844 = vmatpush2.msra.mxu0 0.0
      %845 = vmatprep.subr.mxu0 0.0
      %846 = vmatpush2.msra.mxu0 0.0
      %847 = vmatprep.subr.mxu0 0.0
      %848 = vmatpush2.msra.mxu0 0.0
      %849 = vmatprep.subr.mxu0 0.0
      %850 = vmatpush2.msra.mxu0 0.0
      %851 = vmatprep.subr.mxu0 0.0
      %852 = vmatpush2.msra.mxu0 0.0
      %853 = vmatprep.subr.mxu0 0.0
      %854 = vmatpush2.msra.mxu0 0.0
      %855 = vmatprep.subr.mxu0 0.0
      %856 = vmatpush2.msra.mxu0 0.0
      %857 = vmatprep.subr.mxu0 0.0
      %858 = vmatpush2.msra.mxu0 0.0
      %859 = vmatprep.subr.mxu0 0.0
      %860 = vmatpush2.msra.mxu0 0.0
      %861 = vmatprep.subr.mxu0 0.0
      %862 = vmatpush2.msra.mxu0 0.0
      %863 = vmatprep.subr.mxu0 0.0
      %864 = vmatpush2.msra.mxu0 0.0
      %865 = vmatprep.subr.mxu0 0.0
      %866 = vmatpush2.msra.mxu0 0.0
      %867 = vmatprep.subr.mxu0 0.0
      %868 = vmatpush2.msra.mxu0 0.0
      %869 = vmatprep.subr.mxu0 0.0
      %870 = vmatpush2.msra.mxu0 0.0
      %871 = vmatprep.subr.mxu0 0.0
      %872 = vmatpush2.msra.mxu0 0.0
      %873 = vmatprep.subr.mxu0 0.0
      %874 = vmatpush2.msra.mxu0 0.0
      %875 = vmatprep.mubr.f32.mxu0 0.0
      %876 = vmatmul.mubr.f32.gmra.mxu0 %v764
      %v877 = vpop.f32.mrf.mxu0
      %v878 = vadd.f32 0.0, %v877
      %v879 = vpop.f32.mrf.mxu0
      %880 = vmatprep.mubr.f32.mxu0 0.0
      %881 = vmatmul.mubr.f32.gmra.mxu0 %v767
      %v882 = vpop.f32.mrf.mxu0
      %v883 = vadd.f32 0.0, %v882
      %v884 = vpop.f32.mrf.mxu0
      %885 = vmatprep.mubr.f32.mxu0 0.0
      %886 = vmatmul.mubr.f32.gmra.mxu0 %v770
      %v887 = vpop.f32.mrf.mxu0
      %v888 = vadd.f32 0.0, %v887
      %v889 = vpop.f32.mrf.mxu0
      %890 = vmatprep.mubr.f32.mxu0 0.0
      %891 = vmatmul.mubr.f32.gmra.mxu0 %v773
      %v892 = vpop.f32.mrf.mxu0
      %v893 = vadd.f32 0.0, %v892
      %v894 = vpop.f32.mrf.mxu0
      %895 = vmatprep.mubr.f32.mxu0 0.0
      %896 = vmatmul.mubr.f32.gmra.mxu0 %v776
      %v897 = vpop.f32.mrf.mxu0
      %v898 = vadd.f32 0.0, %v897
      %v899 = vpop.f32.mrf.mxu0
      %900 = vmatprep.mubr.f32.mxu0 0.0
      %901 = vmatmul.mubr.f32.gmra.mxu0 %v779
      %v902 = vpop.f32.mrf.mxu0
      %v903 = vadd.f32 0.0, %v902
      %v904 = vpop.f32.mrf.mxu0
      %905 = vmatprep.mubr.f32.mxu0 0.0
      %906 = vmatmul.mubr.f32.gmra.mxu0 %v782
      %v907 = vpop.f32.mrf.mxu0
      %v908 = vadd.f32 0.0, %v907
      %v909 = vpop.f32.mrf.mxu0
      %910 = vmatprep.mubr.f32.mxu0 0.0
      %911 = vmatmul.mubr.f32.gmra.mxu0 %v785
      %v912 = vpop.f32.mrf.mxu0
      %v913 = vadd.f32 0.0, %v912
      %v914 = vpop.f32.mrf.mxu0
      %915 = vmatprep.mubr.f32.mxu0 0.0
      %916 = vmatmul.mubr.f32.gmra.mxu0 %v788
      %v917 = vpop.f32.mrf.mxu0
      %v918 = vadd.f32 0.0, %v917
      %v919 = vpop.f32.mrf.mxu0
      %920 = vmatprep.mubr.f32.mxu0 0.0
      %921 = vmatmul.mubr.f32.gmra.mxu0 %v791
      %v922 = vpop.f32.mrf.mxu0
      %v923 = vadd.f32 0.0, %v922
      %v924 = vpop.f32.mrf.mxu0
      %925 = vmatprep.mubr.f32.mxu0 0.0
      %926 = vmatmul.mubr.f32.gmra.mxu0 %v794
      %v927 = vpop.f32.mrf.mxu0
      %v928 = vadd.f32 0.0, %v927
      %v929 = vpop.f32.mrf.mxu0
      %930 = vmatprep.mubr.f32.mxu0 0.0
      %931 = vmatmul.mubr.f32.gmra.mxu0 %v797
      %v932 = vpop.f32.mrf.mxu0
      %v933 = vadd.f32 0.0, %v932
      %v934 = vpop.f32.mrf.mxu0
      %935 = vmatprep.mubr.f32.mxu0 0.0
      %936 = vmatmul.mubr.f32.gmra.mxu0 %v800
      %v937 = vpop.f32.mrf.mxu0
      %v938 = vadd.f32 0.0, %v937
      %v939 = vpop.f32.mrf.mxu0
      %940 = vmatprep.mubr.f32.mxu0 0.0
      %941 = vmatmul.mubr.f32.gmra.mxu0 %v803
      %v942 = vpop.f32.mrf.mxu0
      %v943 = vadd.f32 0.0, %v942
      %v944 = vpop.f32.mrf.mxu0
      %945 = vmatprep.mubr.f32.mxu0 0.0
      %946 = vmatmul.mubr.f32.gmra.mxu0 %v806
      %v947 = vpop.f32.mrf.mxu0
      %v948 = vadd.f32 0.0, %v947
      %v949 = vpop.f32.mrf.mxu0
      %950 = vmatprep.mubr.f32.mxu0 0.0
      %951 = vmatmul.mubr.f32.gmra.mxu0 %v809
      %v952 = vpop.f32.mrf.mxu0
      %v953 = vadd.f32 0.0, %v952
      %v954 = vpop.f32.mrf.mxu0
      %955 = vdwg.mxu0
      %v956 = vld [vmem:[%s464] sm:$0xff]
      %v957 = vld [vmem:[%s464 + $0x8] sm:$0xff]
      %v958 = vld [vmem:[%s464 + $0x10] sm:$0xff]
      %v959 = vld [vmem:[%s464 + $0x18] sm:$0xff]
      %v960 = vld [vmem:[%s464 + $0x20] sm:$0xff]
      %v961 = vld [vmem:[%s464 + $0x28] sm:$0xff]
      %v962 = vld [vmem:[%s464 + $0x30] sm:$0xff]
      %v963 = vld [vmem:[%s464 + $0x38] sm:$0xff]
      %v964 = vld [vmem:[%s464 + $0x40] sm:$0xff]
      %v965 = vld [vmem:[%s464 + $0x48] sm:$0xff]
      %v966 = vld [vmem:[%s464 + $0x50] sm:$0xff]
      %v967 = vld [vmem:[%s464 + $0x58] sm:$0xff]
      %v968 = vld [vmem:[%s464 + $0x60] sm:$0xff]
      %v969 = vld [vmem:[%s464 + $0x68] sm:$0xff]
      %v970 = vld [vmem:[%s464 + $0x70] sm:$0xff]
      %v971 = vld [vmem:[%s464 + $0x78] sm:$0xff]
      %v972 = vld [vmem:[%s464 + $0x80] sm:$0xff]
      %v973 = vld [vmem:[%s464 + $0x88] sm:$0xff]
      %v974 = vld [vmem:[%s464 + $0x90] sm:$0xff]
      %v975 = vld [vmem:[%s464 + $0x98] sm:$0xff]
      %v976 = vld [vmem:[%s464 + $0xa0] sm:$0xff]
      %v977 = vld [vmem:[%s464 + $0xa8] sm:$0xff]
      %v978 = vld [vmem:[%s464 + $0xb0] sm:$0xff]
      %v979 = vld [vmem:[%s464 + $0xb8] sm:$0xff]
      %v980 = vld [vmem:[%s464 + $0xc0] sm:$0xff]
      %v981 = vld [vmem:[%s464 + $0xc8] sm:$0xff]
      %v982 = vld [vmem:[%s464 + $0xd0] sm:$0xff]
      %v983 = vld [vmem:[%s464 + $0xd8] sm:$0xff]
      %v984 = vld [vmem:[%s464 + $0xe0] sm:$0xff]
      %v985 = vld [vmem:[%s464 + $0xe8] sm:$0xff]
      %v986 = vld [vmem:[%s464 + $0xf0] sm:$0xff]
      %v987 = vld [vmem:[%s464 + $0xf8] sm:$0xff]
      %v988 = vld [vmem:[%s464 + $0x100] sm:$0xff]
      %v989 = vld [vmem:[%s464 + $0x108] sm:$0xff]
      %v990 = vld [vmem:[%s464 + $0x110] sm:$0xff]
      %v991 = vld [vmem:[%s464 + $0x118] sm:$0xff]
      %996 = vrot.lane.b32.xlu0 %v878, 112
      %v997 = vpop.permute.xlu0 %996
      %998 = vrot.lane.b32.xlu0 %v883, 112
      %v999 = vpop.permute.xlu0 %998
      %1000 = vrot.lane.b32.xlu0 %v888, 112
      %v1001 = vpop.permute.xlu0 %1000
      %1002 = vrot.lane.b32.xlu0 %v893, 112
      %v1003 = vpop.permute.xlu0 %1002
      %vm1008 = vcmask 261120
      %v1010 = vsel %vm1008, %v956, 0
      %v1013 = vsel %vm1008, %v957, 0
      %v1016 = vsel %vm1008, %v958, 0
      %v1019 = vsel %vm1008, %v959, 0
      %v1022 = vsel %vm1008, %v960, 0
      %v1025 = vsel %vm1008, %v961, 0
      %v1028 = vsel %vm1008, %v962, 0
      %v1031 = vsel %vm1008, %v963, 0
      %v1034 = vsel %vm1008, %v964, 0
      %v1037 = vsel %vm1008, %v965, 0
      %v1040 = vsel %vm1008, %v966, 0
      %v1043 = vsel %vm1008, %v967, 0
      %v1046 = vsel %vm1008, %v968, 0
      %v1049 = vsel %vm1008, %v969, 0
      %v1052 = vsel %vm1008, %v970, 0
      %v1055 = vsel %vm1008, %v971, 0
      %v1058 = vsel %vm1008, %v972, 0
      %v1061 = vsel %vm1008, %v973, 0
      %v1064 = vsel %vm1008, %v974, 0
      %v1067 = vsel %vm1008, %v975, 0
      %v1070 = vsel %vm1008, %v976, 0
      %v1073 = vsel %vm1008, %v977, 0
      %v1076 = vsel %vm1008, %v978, 0
      %v1079 = vsel %vm1008, %v979, 0
      %v1082 = vsel %vm1008, %v980, 0
      %v1085 = vsel %vm1008, %v981, 0
      %v1088 = vsel %vm1008, %v982, 0
      %v1091 = vsel %vm1008, %v983, 0
      %v1094 = vsel %vm1008, %v984, 0
      %v1097 = vsel %vm1008, %v985, 0
      %v1100 = vsel %vm1008, %v986, 0
      %v1103 = vsel %vm1008, %v987, 0
      %v1106 = vsel %vm1008, %v988, 0
      %v1109 = vsel %vm1008, %v989, 0
      %v1112 = vsel %vm1008, %v990, 0
      %v1115 = vsel %vm1008, %v991, 0
      %1117 = vmatprep.subr.mxu0 0.0
      %1118 = vmatpush1.msra.mxu0 0.0
      %1119 = vmatprep.subr.mxu0 0.0
      %1120 = vmatpush1.msra.mxu0 0.0
      %1121 = vmatprep.subr.mxu0 0.0
      %1122 = vmatpush1.msra.mxu0 0.0
      %1123 = vmatprep.subr.mxu0 0.0
      %1124 = vmatpush1.msra.mxu0 0.0
      %1125 = vmatprep.subr.mxu0 0.0
      %1126 = vmatpush1.msra.mxu0 0.0
      %1127 = vmatprep.subr.mxu0 0.0
      %1128 = vmatpush1.msra.mxu0 0.0
      %1129 = vmatprep.subr.mxu0 0.0
      %1130 = vmatpush1.msra.mxu0 0.0
      %1131 = vmatprep.subr.mxu0 0.0
      %1132 = vmatpush1.msra.mxu0 0.0
      %1133 = vmatprep.subr.mxu0 0.0
      %1134 = vmatpush1.msra.mxu0 0.0
      %1135 = vmatprep.subr.mxu0 0.0
      %1136 = vmatpush1.msra.mxu0 0.0
      %1137 = vmatprep.subr.mxu0 0.0
      %1138 = vmatpush1.msra.mxu0 0.0
      %1139 = vmatprep.subr.mxu0 0.0
      %1140 = vmatpush1.msra.mxu0 0.0
      %1141 = vmatprep.subr.mxu0 0.0
      %1142 = vmatpush1.msra.mxu0 %v1003
      %1143 = vmatprep.subr.mxu0 0.0
      %1144 = vmatpush1.msra.mxu0 %v1001
      %1145 = vmatprep.subr.mxu0 0.0
      %1146 = vmatpush1.msra.mxu0 %v999
      %1147 = vmatprep.subr.mxu0 0.0
      %1148 = vmatpush1.msra.mxu0 %v997
      %1149 = vmatprep.subr.mxu0 0.0
      %1150 = vmatpush2.msra.mxu0 0.0
      %1151 = vmatprep.subr.mxu0 0.0
      %1152 = vmatpush2.msra.mxu0 0.0
      %1153 = vmatprep.subr.mxu0 0.0
      %1154 = vmatpush2.msra.mxu0 0.0
      %1155 = vmatprep.subr.mxu0 0.0
      %1156 = vmatpush2.msra.mxu0 0.0
      %1157 = vmatprep.subr.mxu0 0.0
      %1158 = vmatpush2.msra.mxu0 0.0
      %1159 = vmatprep.subr.mxu0 0.0
      %1160 = vmatpush2.msra.mxu0 0.0
      %1161 = vmatprep.subr.mxu0 0.0
      %1162 = vmatpush2.msra.mxu0 0.0
      %1163 = vmatprep.subr.mxu0 0.0
      %1164 = vmatpush2.msra.mxu0 0.0
      %1165 = vmatprep.subr.mxu0 0.0
      %1166 = vmatpush2.msra.mxu0 0.0
      %1167 = vmatprep.subr.mxu0 0.0
      %1168 = vmatpush2.msra.mxu0 0.0
      %1169 = vmatprep.subr.mxu0 0.0
      %1170 = vmatpush2.msra.mxu0 0.0
      %1171 = vmatprep.subr.mxu0 0.0
      %1172 = vmatpush2.msra.mxu0 0.0
      %1173 = vmatprep.subr.mxu0 0.0
      %1174 = vmatpush2.msra.mxu0 0.0
      %1175 = vmatprep.subr.mxu0 0.0
      %1176 = vmatpush2.msra.mxu0 0.0
      %1177 = vmatprep.subr.mxu0 0.0
      %1178 = vmatpush2.msra.mxu0 0.0
      %1179 = vmatprep.subr.mxu0 0.0
      %1180 = vmatpush2.msra.mxu0 0.0
      %1181 = vmatprep.mubr.f32.mxu0 0.0
      %1182 = vmatmul.mubr.f32.gmra.mxu0 %v1010
      %v1183 = vpop.f32.mrf.mxu0
      %v1184 = vadd.f32 0.0, %v1183
      %v1185 = vpop.f32.mrf.mxu0
      %1186 = vmatprep.mubr.f32.mxu0 0.0
      %1187 = vmatmul.mubr.f32.gmra.mxu0 %v1013
      %v1188 = vpop.f32.mrf.mxu0
      %v1189 = vadd.f32 0.0, %v1188
      %v1190 = vpop.f32.mrf.mxu0
      %1191 = vmatprep.mubr.f32.mxu0 0.0
      %1192 = vmatmul.mubr.f32.gmra.mxu0 %v1016
      %v1193 = vpop.f32.mrf.mxu0
      %v1194 = vadd.f32 0.0, %v1193
      %v1195 = vpop.f32.mrf.mxu0
      %1196 = vmatprep.mubr.f32.mxu0 0.0
      %1197 = vmatmul.mubr.f32.gmra.mxu0 %v1019
      %v1198 = vpop.f32.mrf.mxu0
      %v1199 = vadd.f32 0.0, %v1198
      %v1200 = vpop.f32.mrf.mxu0
      %1201 = vmatprep.mubr.f32.mxu0 0.0
      %1202 = vmatmul.mubr.f32.gmra.mxu0 %v1022
      %v1203 = vpop.f32.mrf.mxu0
      %v1204 = vadd.f32 0.0, %v1203
      %v1205 = vpop.f32.mrf.mxu0
      %1206 = vmatprep.mubr.f32.mxu0 0.0
      %1207 = vmatmul.mubr.f32.gmra.mxu0 %v1025
      %v1208 = vpop.f32.mrf.mxu0
      %v1209 = vadd.f32 0.0, %v1208
      %v1210 = vpop.f32.mrf.mxu0
      %1211 = vmatprep.mubr.f32.mxu0 0.0
      %1212 = vmatmul.mubr.f32.gmra.mxu0 %v1028
      %v1213 = vpop.f32.mrf.mxu0
      %v1214 = vadd.f32 0.0, %v1213
      %v1215 = vpop.f32.mrf.mxu0
      %1216 = vmatprep.mubr.f32.mxu0 0.0
      %1217 = vmatmul.mubr.f32.gmra.mxu0 %v1031
      %v1218 = vpop.f32.mrf.mxu0
      %v1219 = vadd.f32 0.0, %v1218
      %v1220 = vpop.f32.mrf.mxu0
      %1221 = vmatprep.mubr.f32.mxu0 0.0
      %1222 = vmatmul.mubr.f32.gmra.mxu0 %v1034
      %v1223 = vpop.f32.mrf.mxu0
      %v1224 = vadd.f32 0.0, %v1223
      %v1225 = vpop.f32.mrf.mxu0
      %1226 = vmatprep.mubr.f32.mxu0 0.0
      %1227 = vmatmul.mubr.f32.gmra.mxu0 %v1037
      %v1228 = vpop.f32.mrf.mxu0
      %v1229 = vadd.f32 0.0, %v1228
      %v1230 = vpop.f32.mrf.mxu0
      %1231 = vmatprep.mubr.f32.mxu0 0.0
      %1232 = vmatmul.mubr.f32.gmra.mxu0 %v1040
      %v1233 = vpop.f32.mrf.mxu0
      %v1234 = vadd.f32 0.0, %v1233
      %v1235 = vpop.f32.mrf.mxu0
      %1236 = vmatprep.mubr.f32.mxu0 0.0
      %1237 = vmatmul.mubr.f32.gmra.mxu0 %v1043
      %v1238 = vpop.f32.mrf.mxu0
      %v1239 = vadd.f32 0.0, %v1238
      %v1240 = vpop.f32.mrf.mxu0
      %1241 = vmatprep.mubr.f32.mxu0 0.0
      %1242 = vmatmul.mubr.f32.gmra.mxu0 %v1046
      %v1243 = vpop.f32.mrf.mxu0
      %v1244 = vadd.f32 0.0, %v1243
      %v1245 = vpop.f32.mrf.mxu0
      %1246 = vmatprep.mubr.f32.mxu0 0.0
      %1247 = vmatmul.mubr.f32.gmra.mxu0 %v1049
      %v1248 = vpop.f32.mrf.mxu0
      %v1249 = vadd.f32 0.0, %v1248
      %v1250 = vpop.f32.mrf.mxu0
      %1251 = vmatprep.mubr.f32.mxu0 0.0
      %1252 = vmatmul.mubr.f32.gmra.mxu0 %v1052
      %v1253 = vpop.f32.mrf.mxu0
      %v1254 = vadd.f32 0.0, %v1253
      %v1255 = vpop.f32.mrf.mxu0
      %1256 = vmatprep.mubr.f32.mxu0 0.0
      %1257 = vmatmul.mubr.f32.gmra.mxu0 %v1055
      %v1258 = vpop.f32.mrf.mxu0
      %v1259 = vadd.f32 0.0, %v1258
      %v1260 = vpop.f32.mrf.mxu0
      %1261 = vmatprep.mubr.f32.mxu0 0.0
      %1262 = vmatmul.mubr.f32.gmra.mxu0 %v1058
      %v1263 = vpop.f32.mrf.mxu0
      %v1264 = vadd.f32 0.0, %v1263
      %v1265 = vpop.f32.mrf.mxu0
      %1266 = vmatprep.mubr.f32.mxu0 0.0
      %1267 = vmatmul.mubr.f32.gmra.mxu0 %v1061
      %v1268 = vpop.f32.mrf.mxu0
      %v1269 = vadd.f32 0.0, %v1268
      %v1270 = vpop.f32.mrf.mxu0
      %1271 = vmatprep.mubr.f32.mxu0 0.0
      %1272 = vmatmul.mubr.f32.gmra.mxu0 %v1064
      %v1273 = vpop.f32.mrf.mxu0
      %v1274 = vadd.f32 0.0, %v1273
      %v1275 = vpop.f32.mrf.mxu0
      %1276 = vmatprep.mubr.f32.mxu0 0.0
      %1277 = vmatmul.mubr.f32.gmra.mxu0 %v1067
      %v1278 = vpop.f32.mrf.mxu0
      %v1279 = vadd.f32 0.0, %v1278
      %v1280 = vpop.f32.mrf.mxu0
      %1281 = vmatprep.mubr.f32.mxu0 0.0
      %1282 = vmatmul.mubr.f32.gmra.mxu0 %v1070
      %v1283 = vpop.f32.mrf.mxu0
      %v1284 = vadd.f32 0.0, %v1283
      %v1285 = vpop.f32.mrf.mxu0
      %1286 = vmatprep.mubr.f32.mxu0 0.0
      %1287 = vmatmul.mubr.f32.gmra.mxu0 %v1073
      %v1288 = vpop.f32.mrf.mxu0
      %v1289 = vadd.f32 0.0, %v1288
      %v1290 = vpop.f32.mrf.mxu0
      %1291 = vmatprep.mubr.f32.mxu0 0.0
      %1292 = vmatmul.mubr.f32.gmra.mxu0 %v1076
      %v1293 = vpop.f32.mrf.mxu0
      %v1294 = vadd.f32 0.0, %v1293
      %v1295 = vpop.f32.mrf.mxu0
      %1296 = vmatprep.mubr.f32.mxu0 0.0
      %1297 = vmatmul.mubr.f32.gmra.mxu0 %v1079
      %v1298 = vpop.f32.mrf.mxu0
      %v1299 = vadd.f32 0.0, %v1298
      %v1300 = vpop.f32.mrf.mxu0
      %1301 = vmatprep.mubr.f32.mxu0 0.0
      %1302 = vmatmul.mubr.f32.gmra.mxu0 %v1082
      %v1303 = vpop.f32.mrf.mxu0
      %v1304 = vadd.f32 0.0, %v1303
      %v1305 = vpop.f32.mrf.mxu0
      %1306 = vmatprep.mubr.f32.mxu0 0.0
      %1307 = vmatmul.mubr.f32.gmra.mxu0 %v1085
      %v1308 = vpop.f32.mrf.mxu0
      %v1309 = vadd.f32 0.0, %v1308
      %v1310 = vpop.f32.mrf.mxu0
      %1311 = vmatprep.mubr.f32.mxu0 0.0
      %1312 = vmatmul.mubr.f32.gmra.mxu0 %v1088
      %v1313 = vpop.f32.mrf.mxu0
      %v1314 = vadd.f32 0.0, %v1313
      %v1315 = vpop.f32.mrf.mxu0
      %1316 = vmatprep.mubr.f32.mxu0 0.0
      %1317 = vmatmul.mubr.f32.gmra.mxu0 %v1091
      %v1318 = vpop.f32.mrf.mxu0
      %v1319 = vadd.f32 0.0, %v1318
      %v1320 = vpop.f32.mrf.mxu0
      %1321 = vmatprep.mubr.f32.mxu0 0.0
      %1322 = vmatmul.mubr.f32.gmra.mxu0 %v1094
      %v1323 = vpop.f32.mrf.mxu0
      %v1324 = vadd.f32 0.0, %v1323
      %v1325 = vpop.f32.mrf.mxu0
      %1326 = vmatprep.mubr.f32.mxu0 0.0
      %1327 = vmatmul.mubr.f32.gmra.mxu0 %v1097
      %v1328 = vpop.f32.mrf.mxu0
      %v1329 = vadd.f32 0.0, %v1328
      %v1330 = vpop.f32.mrf.mxu0
      %1331 = vmatprep.mubr.f32.mxu0 0.0
      %1332 = vmatmul.mubr.f32.gmra.mxu0 %v1100
      %v1333 = vpop.f32.mrf.mxu0
      %v1334 = vadd.f32 0.0, %v1333
      %v1335 = vpop.f32.mrf.mxu0
      %1336 = vmatprep.mubr.f32.mxu0 0.0
      %1337 = vmatmul.mubr.f32.gmra.mxu0 %v1103
      %v1338 = vpop.f32.mrf.mxu0
      %v1339 = vadd.f32 0.0, %v1338
      %v1340 = vpop.f32.mrf.mxu0
      %1341 = vmatprep.mubr.f32.mxu0 0.0
      %1342 = vmatmul.mubr.f32.gmra.mxu0 %v1106
      %v1343 = vpop.f32.mrf.mxu0
      %v1344 = vadd.f32 0.0, %v1343
      %v1345 = vpop.f32.mrf.mxu0
      %1346 = vmatprep.mubr.f32.mxu0 0.0
      %1347 = vmatmul.mubr.f32.gmra.mxu0 %v1109
      %v1348 = vpop.f32.mrf.mxu0
      %v1349 = vadd.f32 0.0, %v1348
      %v1350 = vpop.f32.mrf.mxu0
      %1351 = vmatprep.mubr.f32.mxu0 0.0
      %1352 = vmatmul.mubr.f32.gmra.mxu0 %v1112
      %v1353 = vpop.f32.mrf.mxu0
      %v1354 = vadd.f32 0.0, %v1353
      %v1355 = vpop.f32.mrf.mxu0
      %1356 = vmatprep.mubr.f32.mxu0 0.0
      %1357 = vmatmul.mubr.f32.gmra.mxu0 %v1115
      %v1358 = vpop.f32.mrf.mxu0
      %v1359 = vadd.f32 0.0, %v1358
      %v1360 = vpop.f32.mrf.mxu0
      %1361 = vdwg.mxu0
      %1366 = vrot.lane.b32.xlu0 %v898, 112
      %v1367 = vpop.permute.xlu0 %1366
      %1368 = vrot.lane.b32.xlu0 %v903, 112
      %v1369 = vpop.permute.xlu0 %1368
      %1370 = vrot.lane.b32.xlu0 %v908, 112
      %v1371 = vpop.permute.xlu0 %1370
      %1372 = vrot.lane.b32.xlu0 %v913, 112
      %v1373 = vpop.permute.xlu0 %1372
      %1378 = vmatprep.subr.mxu0 0.0
      %1379 = vmatpush1.msra.mxu0 0.0
      %1380 = vmatprep.subr.mxu0 0.0
      %1381 = vmatpush1.msra.mxu0 0.0
      %1382 = vmatprep.subr.mxu0 0.0
      %1383 = vmatpush1.msra.mxu0 0.0
      %1384 = vmatprep.subr.mxu0 0.0
      %1385 = vmatpush1.msra.mxu0 0.0
      %1386 = vmatprep.subr.mxu0 0.0
      %1387 = vmatpush1.msra.mxu0 0.0
      %1388 = vmatprep.subr.mxu0 0.0
      %1389 = vmatpush1.msra.mxu0 0.0
      %1390 = vmatprep.subr.mxu0 0.0
      %1391 = vmatpush1.msra.mxu0 0.0
      %1392 = vmatprep.subr.mxu0 0.0
      %1393 = vmatpush1.msra.mxu0 0.0
      %1394 = vmatprep.subr.mxu0 0.0
      %1395 = vmatpush1.msra.mxu0 0.0
      %1396 = vmatprep.subr.mxu0 0.0
      %1397 = vmatpush1.msra.mxu0 0.0
      %1398 = vmatprep.subr.mxu0 0.0
      %1399 = vmatpush1.msra.mxu0 0.0
      %1400 = vmatprep.subr.mxu0 0.0
      %1401 = vmatpush1.msra.mxu0 0.0
      %1402 = vmatprep.subr.mxu0 0.0
      %1403 = vmatpush1.msra.mxu0 %v1373
      %1404 = vmatprep.subr.mxu0 0.0
      %1405 = vmatpush1.msra.mxu0 %v1371
      %1406 = vmatprep.subr.mxu0 0.0
      %1407 = vmatpush1.msra.mxu0 %v1369
      %1408 = vmatprep.subr.mxu0 0.0
      %1409 = vmatpush1.msra.mxu0 %v1367
      %1410 = vmatprep.subr.mxu0 0.0
      %1411 = vmatpush2.msra.mxu0 0.0
      %1412 = vmatprep.subr.mxu0 0.0
      %1413 = vmatpush2.msra.mxu0 0.0
      %1414 = vmatprep.subr.mxu0 0.0
      %1415 = vmatpush2.msra.mxu0 0.0
      %1416 = vmatprep.subr.mxu0 0.0
      %1417 = vmatpush2.msra.mxu0 0.0
      %1418 = vmatprep.subr.mxu0 0.0
      %1419 = vmatpush2.msra.mxu0 0.0
      %1420 = vmatprep.subr.mxu0 0.0
      %1421 = vmatpush2.msra.mxu0 0.0
      %1422 = vmatprep.subr.mxu0 0.0
      %1423 = vmatpush2.msra.mxu0 0.0
      %1424 = vmatprep.subr.mxu0 0.0
      %1425 = vmatpush2.msra.mxu0 0.0
      %1426 = vmatprep.subr.mxu0 0.0
      %1427 = vmatpush2.msra.mxu0 0.0
      %1428 = vmatprep.subr.mxu0 0.0
      %1429 = vmatpush2.msra.mxu0 0.0
      %1430 = vmatprep.subr.mxu0 0.0
      %1431 = vmatpush2.msra.mxu0 0.0
      %1432 = vmatprep.subr.mxu0 0.0
      %1433 = vmatpush2.msra.mxu0 0.0
      %1434 = vmatprep.subr.mxu0 0.0
      %1435 = vmatpush2.msra.mxu0 0.0
      %1436 = vmatprep.subr.mxu0 0.0
      %1437 = vmatpush2.msra.mxu0 0.0
      %1438 = vmatprep.subr.mxu0 0.0
      %1439 = vmatpush2.msra.mxu0 0.0
      %1440 = vmatprep.subr.mxu0 0.0
      %1441 = vmatpush2.msra.mxu0 0.0
      %1442 = vmatprep.mubr.f32.mxu0 0.0
      %1443 = vmatmul.mubr.f32.gmra.mxu0 %v1010
      %v1444 = vpop.f32.mrf.mxu0
      %v1445 = vadd.f32 0.0, %v1444
      %v1446 = vpop.f32.mrf.mxu0
      %1447 = vmatprep.mubr.f32.mxu0 0.0
      %1448 = vmatmul.mubr.f32.gmra.mxu0 %v1013
      %v1449 = vpop.f32.mrf.mxu0
      %v1450 = vadd.f32 0.0, %v1449
      %v1451 = vpop.f32.mrf.mxu0
      %1452 = vmatprep.mubr.f32.mxu0 0.0
      %1453 = vmatmul.mubr.f32.gmra.mxu0 %v1016
      %v1454 = vpop.f32.mrf.mxu0
      %v1455 = vadd.f32 0.0, %v1454
      %v1456 = vpop.f32.mrf.mxu0
      %1457 = vmatprep.mubr.f32.mxu0 0.0
      %1458 = vmatmul.mubr.f32.gmra.mxu0 %v1019
      %v1459 = vpop.f32.mrf.mxu0
      %v1460 = vadd.f32 0.0, %v1459
      %v1461 = vpop.f32.mrf.mxu0
      %1462 = vmatprep.mubr.f32.mxu0 0.0
      %1463 = vmatmul.mubr.f32.gmra.mxu0 %v1022
      %v1464 = vpop.f32.mrf.mxu0
      %v1465 = vadd.f32 0.0, %v1464
      %v1466 = vpop.f32.mrf.mxu0
      %1467 = vmatprep.mubr.f32.mxu0 0.0
      %1468 = vmatmul.mubr.f32.gmra.mxu0 %v1025
      %v1469 = vpop.f32.mrf.mxu0
      %v1470 = vadd.f32 0.0, %v1469
      %v1471 = vpop.f32.mrf.mxu0
      %1472 = vmatprep.mubr.f32.mxu0 0.0
      %1473 = vmatmul.mubr.f32.gmra.mxu0 %v1028
      %v1474 = vpop.f32.mrf.mxu0
      %v1475 = vadd.f32 0.0, %v1474
      %v1476 = vpop.f32.mrf.mxu0
      %1477 = vmatprep.mubr.f32.mxu0 0.0
      %1478 = vmatmul.mubr.f32.gmra.mxu0 %v1031
      %v1479 = vpop.f32.mrf.mxu0
      %v1480 = vadd.f32 0.0, %v1479
      %v1481 = vpop.f32.mrf.mxu0
      %1482 = vmatprep.mubr.f32.mxu0 0.0
      %1483 = vmatmul.mubr.f32.gmra.mxu0 %v1034
      %v1484 = vpop.f32.mrf.mxu0
      %v1485 = vadd.f32 0.0, %v1484
      %v1486 = vpop.f32.mrf.mxu0
      %1487 = vmatprep.mubr.f32.mxu0 0.0
      %1488 = vmatmul.mubr.f32.gmra.mxu0 %v1037
      %v1489 = vpop.f32.mrf.mxu0
      %v1490 = vadd.f32 0.0, %v1489
      %v1491 = vpop.f32.mrf.mxu0
      %1492 = vmatprep.mubr.f32.mxu0 0.0
      %1493 = vmatmul.mubr.f32.gmra.mxu0 %v1040
      %v1494 = vpop.f32.mrf.mxu0
      %v1495 = vadd.f32 0.0, %v1494
      %v1496 = vpop.f32.mrf.mxu0
      %1497 = vmatprep.mubr.f32.mxu0 0.0
      %1498 = vmatmul.mubr.f32.gmra.mxu0 %v1043
      %v1499 = vpop.f32.mrf.mxu0
      %v1500 = vadd.f32 0.0, %v1499
      %v1501 = vpop.f32.mrf.mxu0
      %1502 = vmatprep.mubr.f32.mxu0 0.0
      %1503 = vmatmul.mubr.f32.gmra.mxu0 %v1046
      %v1504 = vpop.f32.mrf.mxu0
      %v1505 = vadd.f32 0.0, %v1504
      %v1506 = vpop.f32.mrf.mxu0
      %1507 = vmatprep.mubr.f32.mxu0 0.0
      %1508 = vmatmul.mubr.f32.gmra.mxu0 %v1049
      %v1509 = vpop.f32.mrf.mxu0
      %v1510 = vadd.f32 0.0, %v1509
      %v1511 = vpop.f32.mrf.mxu0
      %1512 = vmatprep.mubr.f32.mxu0 0.0
      %1513 = vmatmul.mubr.f32.gmra.mxu0 %v1052
      %v1514 = vpop.f32.mrf.mxu0
      %v1515 = vadd.f32 0.0, %v1514
      %v1516 = vpop.f32.mrf.mxu0
      %1517 = vmatprep.mubr.f32.mxu0 0.0
      %1518 = vmatmul.mubr.f32.gmra.mxu0 %v1055
      %v1519 = vpop.f32.mrf.mxu0
      %v1520 = vadd.f32 0.0, %v1519
      %v1521 = vpop.f32.mrf.mxu0
      %1522 = vmatprep.mubr.f32.mxu0 0.0
      %1523 = vmatmul.mubr.f32.gmra.mxu0 %v1058
      %v1524 = vpop.f32.mrf.mxu0
      %v1525 = vadd.f32 0.0, %v1524
      %v1526 = vpop.f32.mrf.mxu0
      %1527 = vmatprep.mubr.f32.mxu0 0.0
      %1528 = vmatmul.mubr.f32.gmra.mxu0 %v1061
      %v1529 = vpop.f32.mrf.mxu0
      %v1530 = vadd.f32 0.0, %v1529
      %v1531 = vpop.f32.mrf.mxu0
      %1532 = vmatprep.mubr.f32.mxu0 0.0
      %1533 = vmatmul.mubr.f32.gmra.mxu0 %v1064
      %v1534 = vpop.f32.mrf.mxu0
      %v1535 = vadd.f32 0.0, %v1534
      %v1536 = vpop.f32.mrf.mxu0
      %1537 = vmatprep.mubr.f32.mxu0 0.0
      %1538 = vmatmul.mubr.f32.gmra.mxu0 %v1067
      %v1539 = vpop.f32.mrf.mxu0
      %v1540 = vadd.f32 0.0, %v1539
      %v1541 = vpop.f32.mrf.mxu0
      %1542 = vmatprep.mubr.f32.mxu0 0.0
      %1543 = vmatmul.mubr.f32.gmra.mxu0 %v1070
      %v1544 = vpop.f32.mrf.mxu0
      %v1545 = vadd.f32 0.0, %v1544
      %v1546 = vpop.f32.mrf.mxu0
      %1547 = vmatprep.mubr.f32.mxu0 0.0
      %1548 = vmatmul.mubr.f32.gmra.mxu0 %v1073
      %v1549 = vpop.f32.mrf.mxu0
      %v1550 = vadd.f32 0.0, %v1549
      %v1551 = vpop.f32.mrf.mxu0
      %1552 = vmatprep.mubr.f32.mxu0 0.0
      %1553 = vmatmul.mubr.f32.gmra.mxu0 %v1076
      %v1554 = vpop.f32.mrf.mxu0
      %v1555 = vadd.f32 0.0, %v1554
      %v1556 = vpop.f32.mrf.mxu0
      %1557 = vmatprep.mubr.f32.mxu0 0.0
      %1558 = vmatmul.mubr.f32.gmra.mxu0 %v1079
      %v1559 = vpop.f32.mrf.mxu0
      %v1560 = vadd.f32 0.0, %v1559
      %v1561 = vpop.f32.mrf.mxu0
      %1562 = vmatprep.mubr.f32.mxu0 0.0
      %1563 = vmatmul.mubr.f32.gmra.mxu0 %v1082
      %v1564 = vpop.f32.mrf.mxu0
      %v1565 = vadd.f32 0.0, %v1564
      %v1566 = vpop.f32.mrf.mxu0
      %1567 = vmatprep.mubr.f32.mxu0 0.0
      %1568 = vmatmul.mubr.f32.gmra.mxu0 %v1085
      %v1569 = vpop.f32.mrf.mxu0
      %v1570 = vadd.f32 0.0, %v1569
      %v1571 = vpop.f32.mrf.mxu0
      %1572 = vmatprep.mubr.f32.mxu0 0.0
      %1573 = vmatmul.mubr.f32.gmra.mxu0 %v1088
      %v1574 = vpop.f32.mrf.mxu0
      %v1575 = vadd.f32 0.0, %v1574
      %v1576 = vpop.f32.mrf.mxu0
      %1577 = vmatprep.mubr.f32.mxu0 0.0
      %1578 = vmatmul.mubr.f32.gmra.mxu0 %v1091
      %v1579 = vpop.f32.mrf.mxu0
      %v1580 = vadd.f32 0.0, %v1579
      %v1581 = vpop.f32.mrf.mxu0
      %1582 = vmatprep.mubr.f32.mxu0 0.0
      %1583 = vmatmul.mubr.f32.gmra.mxu0 %v1094
      %v1584 = vpop.f32.mrf.mxu0
      %v1585 = vadd.f32 0.0, %v1584
      %v1586 = vpop.f32.mrf.mxu0
      %1587 = vmatprep.mubr.f32.mxu0 0.0
      %1588 = vmatmul.mubr.f32.gmra.mxu0 %v1097
      %v1589 = vpop.f32.mrf.mxu0
      %v1590 = vadd.f32 0.0, %v1589
      %v1591 = vpop.f32.mrf.mxu0
      %1592 = vmatprep.mubr.f32.mxu0 0.0
      %1593 = vmatmul.mubr.f32.gmra.mxu0 %v1100
      %v1594 = vpop.f32.mrf.mxu0
      %v1595 = vadd.f32 0.0, %v1594
      %v1596 = vpop.f32.mrf.mxu0
      %1597 = vmatprep.mubr.f32.mxu0 0.0
      %1598 = vmatmul.mubr.f32.gmra.mxu0 %v1103
      %v1599 = vpop.f32.mrf.mxu0
      %v1600 = vadd.f32 0.0, %v1599
      %v1601 = vpop.f32.mrf.mxu0
      %1602 = vmatprep.mubr.f32.mxu0 0.0
      %1603 = vmatmul.mubr.f32.gmra.mxu0 %v1106
      %v1604 = vpop.f32.mrf.mxu0
      %v1605 = vadd.f32 0.0, %v1604
      %v1606 = vpop.f32.mrf.mxu0
      %1607 = vmatprep.mubr.f32.mxu0 0.0
      %1608 = vmatmul.mubr.f32.gmra.mxu0 %v1109
      %v1609 = vpop.f32.mrf.mxu0
      %v1610 = vadd.f32 0.0, %v1609
      %v1611 = vpop.f32.mrf.mxu0
      %1612 = vmatprep.mubr.f32.mxu0 0.0
      %1613 = vmatmul.mubr.f32.gmra.mxu0 %v1112
      %v1614 = vpop.f32.mrf.mxu0
      %v1615 = vadd.f32 0.0, %v1614
      %v1616 = vpop.f32.mrf.mxu0
      %1617 = vmatprep.mubr.f32.mxu0 0.0
      %1618 = vmatmul.mubr.f32.gmra.mxu0 %v1115
      %v1619 = vpop.f32.mrf.mxu0
      %v1620 = vadd.f32 0.0, %v1619
      %v1621 = vpop.f32.mrf.mxu0
      %1622 = vdwg.mxu0
      %1627 = vrot.lane.b32.xlu0 %v918, 112
      %v1628 = vpop.permute.xlu0 %1627
      %1629 = vrot.lane.b32.xlu0 %v923, 112
      %v1630 = vpop.permute.xlu0 %1629
      %1631 = vrot.lane.b32.xlu0 %v928, 112
      %v1632 = vpop.permute.xlu0 %1631
      %1633 = vrot.lane.b32.xlu0 %v933, 112
      %v1634 = vpop.permute.xlu0 %1633
      %1639 = vmatprep.subr.mxu0 0.0
      %1640 = vmatpush1.msra.mxu0 0.0
      %1641 = vmatprep.subr.mxu0 0.0
      %1642 = vmatpush1.msra.mxu0 0.0
      %1643 = vmatprep.subr.mxu0 0.0
      %1644 = vmatpush1.msra.mxu0 0.0
      %1645 = vmatprep.subr.mxu0 0.0
      %1646 = vmatpush1.msra.mxu0 0.0
      %1647 = vmatprep.subr.mxu0 0.0
      %1648 = vmatpush1.msra.mxu0 0.0
      %1649 = vmatprep.subr.mxu0 0.0
      %1650 = vmatpush1.msra.mxu0 0.0
      %1651 = vmatprep.subr.mxu0 0.0
      %1652 = vmatpush1.msra.mxu0 0.0
      %1653 = vmatprep.subr.mxu0 0.0
      %1654 = vmatpush1.msra.mxu0 0.0
      %1655 = vmatprep.subr.mxu0 0.0
      %1656 = vmatpush1.msra.mxu0 0.0
      %1657 = vmatprep.subr.mxu0 0.0
      %1658 = vmatpush1.msra.mxu0 0.0
      %1659 = vmatprep.subr.mxu0 0.0
      %1660 = vmatpush1.msra.mxu0 0.0
      %1661 = vmatprep.subr.mxu0 0.0
      %1662 = vmatpush1.msra.mxu0 0.0
      %1663 = vmatprep.subr.mxu0 0.0
      %1664 = vmatpush1.msra.mxu0 %v1634
      %1665 = vmatprep.subr.mxu0 0.0
      %1666 = vmatpush1.msra.mxu0 %v1632
      %1667 = vmatprep.subr.mxu0 0.0
      %1668 = vmatpush1.msra.mxu0 %v1630
      %1669 = vmatprep.subr.mxu0 0.0
      %1670 = vmatpush1.msra.mxu0 %v1628
      %1671 = vmatprep.subr.mxu0 0.0
      %1672 = vmatpush2.msra.mxu0 0.0
      %1673 = vmatprep.subr.mxu0 0.0
      %1674 = vmatpush2.msra.mxu0 0.0
      %1675 = vmatprep.subr.mxu0 0.0
      %1676 = vmatpush2.msra.mxu0 0.0
      %1677 = vmatprep.subr.mxu0 0.0
      %1678 = vmatpush2.msra.mxu0 0.0
      %1679 = vmatprep.subr.mxu0 0.0
      %1680 = vmatpush2.msra.mxu0 0.0
      %1681 = vmatprep.subr.mxu0 0.0
      %1682 = vmatpush2.msra.mxu0 0.0
      %1683 = vmatprep.subr.mxu0 0.0
      %1684 = vmatpush2.msra.mxu0 0.0
      %1685 = vmatprep.subr.mxu0 0.0
      %1686 = vmatpush2.msra.mxu0 0.0
      %1687 = vmatprep.subr.mxu0 0.0
      %1688 = vmatpush2.msra.mxu0 0.0
      %1689 = vmatprep.subr.mxu0 0.0
      %1690 = vmatpush2.msra.mxu0 0.0
      %1691 = vmatprep.subr.mxu0 0.0
      %1692 = vmatpush2.msra.mxu0 0.0
      %1693 = vmatprep.subr.mxu0 0.0
      %1694 = vmatpush2.msra.mxu0 0.0
      %1695 = vmatprep.subr.mxu0 0.0
      %1696 = vmatpush2.msra.mxu0 0.0
      %1697 = vmatprep.subr.mxu0 0.0
      %1698 = vmatpush2.msra.mxu0 0.0
      %1699 = vmatprep.subr.mxu0 0.0
      %1700 = vmatpush2.msra.mxu0 0.0
      %1701 = vmatprep.subr.mxu0 0.0
      %1702 = vmatpush2.msra.mxu0 0.0
      %1703 = vmatprep.mubr.f32.mxu0 0.0
      %1704 = vmatmul.mubr.f32.gmra.mxu0 %v1010
      %v1705 = vpop.f32.mrf.mxu0
      %v1706 = vadd.f32 0.0, %v1705
      %v1707 = vpop.f32.mrf.mxu0
      %1708 = vmatprep.mubr.f32.mxu0 0.0
      %1709 = vmatmul.mubr.f32.gmra.mxu0 %v1013
      %v1710 = vpop.f32.mrf.mxu0
      %v1711 = vadd.f32 0.0, %v1710
      %v1712 = vpop.f32.mrf.mxu0
      %1713 = vmatprep.mubr.f32.mxu0 0.0
      %1714 = vmatmul.mubr.f32.gmra.mxu0 %v1016
      %v1715 = vpop.f32.mrf.mxu0
      %v1716 = vadd.f32 0.0, %v1715
      %v1717 = vpop.f32.mrf.mxu0
      %1718 = vmatprep.mubr.f32.mxu0 0.0
      %1719 = vmatmul.mubr.f32.gmra.mxu0 %v1019
      %v1720 = vpop.f32.mrf.mxu0
      %v1721 = vadd.f32 0.0, %v1720
      %v1722 = vpop.f32.mrf.mxu0
      %1723 = vmatprep.mubr.f32.mxu0 0.0
      %1724 = vmatmul.mubr.f32.gmra.mxu0 %v1022
      %v1725 = vpop.f32.mrf.mxu0
      %v1726 = vadd.f32 0.0, %v1725
      %v1727 = vpop.f32.mrf.mxu0
      %1728 = vmatprep.mubr.f32.mxu0 0.0
      %1729 = vmatmul.mubr.f32.gmra.mxu0 %v1025
      %v1730 = vpop.f32.mrf.mxu0
      %v1731 = vadd.f32 0.0, %v1730
      %v1732 = vpop.f32.mrf.mxu0
      %1733 = vmatprep.mubr.f32.mxu0 0.0
      %1734 = vmatmul.mubr.f32.gmra.mxu0 %v1028
      %v1735 = vpop.f32.mrf.mxu0
      %v1736 = vadd.f32 0.0, %v1735
      %v1737 = vpop.f32.mrf.mxu0
      %1738 = vmatprep.mubr.f32.mxu0 0.0
      %1739 = vmatmul.mubr.f32.gmra.mxu0 %v1031
      %v1740 = vpop.f32.mrf.mxu0
      %v1741 = vadd.f32 0.0, %v1740
      %v1742 = vpop.f32.mrf.mxu0
      %1743 = vmatprep.mubr.f32.mxu0 0.0
      %1744 = vmatmul.mubr.f32.gmra.mxu0 %v1034
      %v1745 = vpop.f32.mrf.mxu0
      %v1746 = vadd.f32 0.0, %v1745
      %v1747 = vpop.f32.mrf.mxu0
      %1748 = vmatprep.mubr.f32.mxu0 0.0
      %1749 = vmatmul.mubr.f32.gmra.mxu0 %v1037
      %v1750 = vpop.f32.mrf.mxu0
      %v1751 = vadd.f32 0.0, %v1750
      %v1752 = vpop.f32.mrf.mxu0
      %1753 = vmatprep.mubr.f32.mxu0 0.0
      %1754 = vmatmul.mubr.f32.gmra.mxu0 %v1040
      %v1755 = vpop.f32.mrf.mxu0
      %v1756 = vadd.f32 0.0, %v1755
      %v1757 = vpop.f32.mrf.mxu0
      %1758 = vmatprep.mubr.f32.mxu0 0.0
      %1759 = vmatmul.mubr.f32.gmra.mxu0 %v1043
      %v1760 = vpop.f32.mrf.mxu0
      %v1761 = vadd.f32 0.0, %v1760
      %v1762 = vpop.f32.mrf.mxu0
      %1763 = vmatprep.mubr.f32.mxu0 0.0
      %1764 = vmatmul.mubr.f32.gmra.mxu0 %v1046
      %v1765 = vpop.f32.mrf.mxu0
      %v1766 = vadd.f32 0.0, %v1765
      %v1767 = vpop.f32.mrf.mxu0
      %1768 = vmatprep.mubr.f32.mxu0 0.0
      %1769 = vmatmul.mubr.f32.gmra.mxu0 %v1049
      %v1770 = vpop.f32.mrf.mxu0
      %v1771 = vadd.f32 0.0, %v1770
      %v1772 = vpop.f32.mrf.mxu0
      %1773 = vmatprep.mubr.f32.mxu0 0.0
      %1774 = vmatmul.mubr.f32.gmra.mxu0 %v1052
      %v1775 = vpop.f32.mrf.mxu0
      %v1776 = vadd.f32 0.0, %v1775
      %v1777 = vpop.f32.mrf.mxu0
      %1778 = vmatprep.mubr.f32.mxu0 0.0
      %1779 = vmatmul.mubr.f32.gmra.mxu0 %v1055
      %v1780 = vpop.f32.mrf.mxu0
      %v1781 = vadd.f32 0.0, %v1780
      %v1782 = vpop.f32.mrf.mxu0
      %1783 = vmatprep.mubr.f32.mxu0 0.0
      %1784 = vmatmul.mubr.f32.gmra.mxu0 %v1058
      %v1785 = vpop.f32.mrf.mxu0
      %v1786 = vadd.f32 0.0, %v1785
      %v1787 = vpop.f32.mrf.mxu0
      %1788 = vmatprep.mubr.f32.mxu0 0.0
      %1789 = vmatmul.mubr.f32.gmra.mxu0 %v1061
      %v1790 = vpop.f32.mrf.mxu0
      %v1791 = vadd.f32 0.0, %v1790
      %v1792 = vpop.f32.mrf.mxu0
      %1793 = vmatprep.mubr.f32.mxu0 0.0
      %1794 = vmatmul.mubr.f32.gmra.mxu0 %v1064
      %v1795 = vpop.f32.mrf.mxu0
      %v1796 = vadd.f32 0.0, %v1795
      %v1797 = vpop.f32.mrf.mxu0
      %1798 = vmatprep.mubr.f32.mxu0 0.0
      %1799 = vmatmul.mubr.f32.gmra.mxu0 %v1067
      %v1800 = vpop.f32.mrf.mxu0
      %v1801 = vadd.f32 0.0, %v1800
      %v1802 = vpop.f32.mrf.mxu0
      %1803 = vmatprep.mubr.f32.mxu0 0.0
      %1804 = vmatmul.mubr.f32.gmra.mxu0 %v1070
      %v1805 = vpop.f32.mrf.mxu0
      %v1806 = vadd.f32 0.0, %v1805
      %v1807 = vpop.f32.mrf.mxu0
      %1808 = vmatprep.mubr.f32.mxu0 0.0
      %1809 = vmatmul.mubr.f32.gmra.mxu0 %v1073
      %v1810 = vpop.f32.mrf.mxu0
      %v1811 = vadd.f32 0.0, %v1810
      %v1812 = vpop.f32.mrf.mxu0
      %1813 = vmatprep.mubr.f32.mxu0 0.0
      %1814 = vmatmul.mubr.f32.gmra.mxu0 %v1076
      %v1815 = vpop.f32.mrf.mxu0
      %v1816 = vadd.f32 0.0, %v1815
      %v1817 = vpop.f32.mrf.mxu0
      %1818 = vmatprep.mubr.f32.mxu0 0.0
      %1819 = vmatmul.mubr.f32.gmra.mxu0 %v1079
      %v1820 = vpop.f32.mrf.mxu0
      %v1821 = vadd.f32 0.0, %v1820
      %v1822 = vpop.f32.mrf.mxu0
      %1823 = vmatprep.mubr.f32.mxu0 0.0
      %1824 = vmatmul.mubr.f32.gmra.mxu0 %v1082
      %v1825 = vpop.f32.mrf.mxu0
      %v1826 = vadd.f32 0.0, %v1825
      %v1827 = vpop.f32.mrf.mxu0
      %1828 = vmatprep.mubr.f32.mxu0 0.0
      %1829 = vmatmul.mubr.f32.gmra.mxu0 %v1085
      %v1830 = vpop.f32.mrf.mxu0
      %v1831 = vadd.f32 0.0, %v1830
      %v1832 = vpop.f32.mrf.mxu0
      %1833 = vmatprep.mubr.f32.mxu0 0.0
      %1834 = vmatmul.mubr.f32.gmra.mxu0 %v1088
      %v1835 = vpop.f32.mrf.mxu0
      %v1836 = vadd.f32 0.0, %v1835
      %v1837 = vpop.f32.mrf.mxu0
      %1838 = vmatprep.mubr.f32.mxu0 0.0
      %1839 = vmatmul.mubr.f32.gmra.mxu0 %v1091
      %v1840 = vpop.f32.mrf.mxu0
      %v1841 = vadd.f32 0.0, %v1840
      %v1842 = vpop.f32.mrf.mxu0
      %1843 = vmatprep.mubr.f32.mxu0 0.0
      %1844 = vmatmul.mubr.f32.gmra.mxu0 %v1094
      %v1845 = vpop.f32.mrf.mxu0
      %v1846 = vadd.f32 0.0, %v1845
      %v1847 = vpop.f32.mrf.mxu0
      %1848 = vmatprep.mubr.f32.mxu0 0.0
      %1849 = vmatmul.mubr.f32.gmra.mxu0 %v1097
      %v1850 = vpop.f32.mrf.mxu0
      %v1851 = vadd.f32 0.0, %v1850
      %v1852 = vpop.f32.mrf.mxu0
      %1853 = vmatprep.mubr.f32.mxu0 0.0
      %1854 = vmatmul.mubr.f32.gmra.mxu0 %v1100
      %v1855 = vpop.f32.mrf.mxu0
      %v1856 = vadd.f32 0.0, %v1855
      %v1857 = vpop.f32.mrf.mxu0
      %1858 = vmatprep.mubr.f32.mxu0 0.0
      %1859 = vmatmul.mubr.f32.gmra.mxu0 %v1103
      %v1860 = vpop.f32.mrf.mxu0
      %v1861 = vadd.f32 0.0, %v1860
      %v1862 = vpop.f32.mrf.mxu0
      %1863 = vmatprep.mubr.f32.mxu0 0.0
      %1864 = vmatmul.mubr.f32.gmra.mxu0 %v1106
      %v1865 = vpop.f32.mrf.mxu0
      %v1866 = vadd.f32 0.0, %v1865
      %v1867 = vpop.f32.mrf.mxu0
      %1868 = vmatprep.mubr.f32.mxu0 0.0
      %1869 = vmatmul.mubr.f32.gmra.mxu0 %v1109
      %v1870 = vpop.f32.mrf.mxu0
      %v1871 = vadd.f32 0.0, %v1870
      %v1872 = vpop.f32.mrf.mxu0
      %1873 = vmatprep.mubr.f32.mxu0 0.0
      %1874 = vmatmul.mubr.f32.gmra.mxu0 %v1112
      %v1875 = vpop.f32.mrf.mxu0
      %v1876 = vadd.f32 0.0, %v1875
      %v1877 = vpop.f32.mrf.mxu0
      %1878 = vmatprep.mubr.f32.mxu0 0.0
      %1879 = vmatmul.mubr.f32.gmra.mxu0 %v1115
      %v1880 = vpop.f32.mrf.mxu0
      %v1881 = vadd.f32 0.0, %v1880
      %v1882 = vpop.f32.mrf.mxu0
      %1883 = vdwg.mxu0
      %1888 = vrot.lane.b32.xlu0 %v938, 112
      %v1889 = vpop.permute.xlu0 %1888
      %1890 = vrot.lane.b32.xlu0 %v943, 112
      %v1891 = vpop.permute.xlu0 %1890
      %1892 = vrot.lane.b32.xlu0 %v948, 112
      %v1893 = vpop.permute.xlu0 %1892
      %1894 = vrot.lane.b32.xlu0 %v953, 112
      %v1895 = vpop.permute.xlu0 %1894
      %1900 = vmatprep.subr.mxu0 0.0
      %1901 = vmatpush1.msra.mxu0 0.0
      %1902 = vmatprep.subr.mxu0 0.0
      %1903 = vmatpush1.msra.mxu0 0.0
      %1904 = vmatprep.subr.mxu0 0.0
      %1905 = vmatpush1.msra.mxu0 0.0
      %1906 = vmatprep.subr.mxu0 0.0
      %1907 = vmatpush1.msra.mxu0 0.0
      %1908 = vmatprep.subr.mxu0 0.0
      %1909 = vmatpush1.msra.mxu0 0.0
      %1910 = vmatprep.subr.mxu0 0.0
      %1911 = vmatpush1.msra.mxu0 0.0
      %1912 = vmatprep.subr.mxu0 0.0
      %1913 = vmatpush1.msra.mxu0 0.0
      %1914 = vmatprep.subr.mxu0 0.0
      %1915 = vmatpush1.msra.mxu0 0.0
      %1916 = vmatprep.subr.mxu0 0.0
      %1917 = vmatpush1.msra.mxu0 0.0
      %1918 = vmatprep.subr.mxu0 0.0
      %1919 = vmatpush1.msra.mxu0 0.0
      %1920 = vmatprep.subr.mxu0 0.0
      %1921 = vmatpush1.msra.mxu0 0.0
      %1922 = vmatprep.subr.mxu0 0.0
      %1923 = vmatpush1.msra.mxu0 0.0
      %1924 = vmatprep.subr.mxu0 0.0
      %1925 = vmatpush1.msra.mxu0 %v1895
      %1926 = vmatprep.subr.mxu0 0.0
      %1927 = vmatpush1.msra.mxu0 %v1893
      %1928 = vmatprep.subr.mxu0 0.0
      %1929 = vmatpush1.msra.mxu0 %v1891
      %1930 = vmatprep.subr.mxu0 0.0
      %1931 = vmatpush1.msra.mxu0 %v1889
      %1932 = vmatprep.subr.mxu0 0.0
      %1933 = vmatpush2.msra.mxu0 0.0
      %1934 = vmatprep.subr.mxu0 0.0
      %1935 = vmatpush2.msra.mxu0 0.0
      %1936 = vmatprep.subr.mxu0 0.0
      %1937 = vmatpush2.msra.mxu0 0.0
      %1938 = vmatprep.subr.mxu0 0.0
      %1939 = vmatpush2.msra.mxu0 0.0
      %1940 = vmatprep.subr.mxu0 0.0
      %1941 = vmatpush2.msra.mxu0 0.0
      %1942 = vmatprep.subr.mxu0 0.0
      %1943 = vmatpush2.msra.mxu0 0.0
      %1944 = vmatprep.subr.mxu0 0.0
      %1945 = vmatpush2.msra.mxu0 0.0
      %1946 = vmatprep.subr.mxu0 0.0
      %1947 = vmatpush2.msra.mxu0 0.0
      %1948 = vmatprep.subr.mxu0 0.0
      %1949 = vmatpush2.msra.mxu0 0.0
      %1950 = vmatprep.subr.mxu0 0.0
      %1951 = vmatpush2.msra.mxu0 0.0
      %1952 = vmatprep.subr.mxu0 0.0
      %1953 = vmatpush2.msra.mxu0 0.0
      %1954 = vmatprep.subr.mxu0 0.0
      %1955 = vmatpush2.msra.mxu0 0.0
      %1956 = vmatprep.subr.mxu0 0.0
      %1957 = vmatpush2.msra.mxu0 0.0
      %1958 = vmatprep.subr.mxu0 0.0
      %1959 = vmatpush2.msra.mxu0 0.0
      %1960 = vmatprep.subr.mxu0 0.0
      %1961 = vmatpush2.msra.mxu0 0.0
      %1962 = vmatprep.subr.mxu0 0.0
      %1963 = vmatpush2.msra.mxu0 0.0
      %1964 = vmatprep.mubr.f32.mxu0 0.0
      %1965 = vmatmul.mubr.f32.gmra.mxu0 %v1010
      %v1966 = vpop.f32.mrf.mxu0
      %v1967 = vadd.f32 0.0, %v1966
      %v1968 = vpop.f32.mrf.mxu0
      %1969 = vmatprep.mubr.f32.mxu0 0.0
      %1970 = vmatmul.mubr.f32.gmra.mxu0 %v1013
      %v1971 = vpop.f32.mrf.mxu0
      %v1972 = vadd.f32 0.0, %v1971
      %v1973 = vpop.f32.mrf.mxu0
      %1974 = vmatprep.mubr.f32.mxu0 0.0
      %1975 = vmatmul.mubr.f32.gmra.mxu0 %v1016
      %v1976 = vpop.f32.mrf.mxu0
      %v1977 = vadd.f32 0.0, %v1976
      %v1978 = vpop.f32.mrf.mxu0
      %1979 = vmatprep.mubr.f32.mxu0 0.0
      %1980 = vmatmul.mubr.f32.gmra.mxu0 %v1019
      %v1981 = vpop.f32.mrf.mxu0
      %v1982 = vadd.f32 0.0, %v1981
      %v1983 = vpop.f32.mrf.mxu0
      %1984 = vmatprep.mubr.f32.mxu0 0.0
      %1985 = vmatmul.mubr.f32.gmra.mxu0 %v1022
      %v1986 = vpop.f32.mrf.mxu0
      %v1987 = vadd.f32 0.0, %v1986
      %v1988 = vpop.f32.mrf.mxu0
      %1989 = vmatprep.mubr.f32.mxu0 0.0
      %1990 = vmatmul.mubr.f32.gmra.mxu0 %v1025
      %v1991 = vpop.f32.mrf.mxu0
      %v1992 = vadd.f32 0.0, %v1991
      %v1993 = vpop.f32.mrf.mxu0
      %1994 = vmatprep.mubr.f32.mxu0 0.0
      %1995 = vmatmul.mubr.f32.gmra.mxu0 %v1028
      %v1996 = vpop.f32.mrf.mxu0
      %v1997 = vadd.f32 0.0, %v1996
      %v1998 = vpop.f32.mrf.mxu0
      %1999 = vmatprep.mubr.f32.mxu0 0.0
      %2000 = vmatmul.mubr.f32.gmra.mxu0 %v1031
      %v2001 = vpop.f32.mrf.mxu0
      %v2002 = vadd.f32 0.0, %v2001
      %v2003 = vpop.f32.mrf.mxu0
      %2004 = vmatprep.mubr.f32.mxu0 0.0
      %2005 = vmatmul.mubr.f32.gmra.mxu0 %v1034
      %v2006 = vpop.f32.mrf.mxu0
      %v2007 = vadd.f32 0.0, %v2006
      %v2008 = vpop.f32.mrf.mxu0
      %2009 = vmatprep.mubr.f32.mxu0 0.0
      %2010 = vmatmul.mubr.f32.gmra.mxu0 %v1037
      %v2011 = vpop.f32.mrf.mxu0
      %v2012 = vadd.f32 0.0, %v2011
      %v2013 = vpop.f32.mrf.mxu0
      %2014 = vmatprep.mubr.f32.mxu0 0.0
      %2015 = vmatmul.mubr.f32.gmra.mxu0 %v1040
      %v2016 = vpop.f32.mrf.mxu0
      %v2017 = vadd.f32 0.0, %v2016
      %v2018 = vpop.f32.mrf.mxu0
      %2019 = vmatprep.mubr.f32.mxu0 0.0
      %2020 = vmatmul.mubr.f32.gmra.mxu0 %v1043
      %v2021 = vpop.f32.mrf.mxu0
      %v2022 = vadd.f32 0.0, %v2021
      %v2023 = vpop.f32.mrf.mxu0
      %2024 = vmatprep.mubr.f32.mxu0 0.0
      %2025 = vmatmul.mubr.f32.gmra.mxu0 %v1046
      %v2026 = vpop.f32.mrf.mxu0
      %v2027 = vadd.f32 0.0, %v2026
      %v2028 = vpop.f32.mrf.mxu0
      %2029 = vmatprep.mubr.f32.mxu0 0.0
      %2030 = vmatmul.mubr.f32.gmra.mxu0 %v1049
      %v2031 = vpop.f32.mrf.mxu0
      %v2032 = vadd.f32 0.0, %v2031
      %v2033 = vpop.f32.mrf.mxu0
      %2034 = vmatprep.mubr.f32.mxu0 0.0
      %2035 = vmatmul.mubr.f32.gmra.mxu0 %v1052
      %v2036 = vpop.f32.mrf.mxu0
      %v2037 = vadd.f32 0.0, %v2036
      %v2038 = vpop.f32.mrf.mxu0
      %2039 = vmatprep.mubr.f32.mxu0 0.0
      %2040 = vmatmul.mubr.f32.gmra.mxu0 %v1055
      %v2041 = vpop.f32.mrf.mxu0
      %v2042 = vadd.f32 0.0, %v2041
      %v2043 = vpop.f32.mrf.mxu0
      %2044 = vmatprep.mubr.f32.mxu0 0.0
      %2045 = vmatmul.mubr.f32.gmra.mxu0 %v1058
      %v2046 = vpop.f32.mrf.mxu0
      %v2047 = vadd.f32 0.0, %v2046
      %v2048 = vpop.f32.mrf.mxu0
      %2049 = vmatprep.mubr.f32.mxu0 0.0
      %2050 = vmatmul.mubr.f32.gmra.mxu0 %v1061
      %v2051 = vpop.f32.mrf.mxu0
      %v2052 = vadd.f32 0.0, %v2051
      %v2053 = vpop.f32.mrf.mxu0
      %2054 = vmatprep.mubr.f32.mxu0 0.0
      %2055 = vmatmul.mubr.f32.gmra.mxu0 %v1064
      %v2056 = vpop.f32.mrf.mxu0
      %v2057 = vadd.f32 0.0, %v2056
      %v2058 = vpop.f32.mrf.mxu0
      %2059 = vmatprep.mubr.f32.mxu0 0.0
      %2060 = vmatmul.mubr.f32.gmra.mxu0 %v1067
      %v2061 = vpop.f32.mrf.mxu0
      %v2062 = vadd.f32 0.0, %v2061
      %v2063 = vpop.f32.mrf.mxu0
      %2064 = vmatprep.mubr.f32.mxu0 0.0
      %2065 = vmatmul.mubr.f32.gmra.mxu0 %v1070
      %v2066 = vpop.f32.mrf.mxu0
      %v2067 = vadd.f32 0.0, %v2066
      %v2068 = vpop.f32.mrf.mxu0
      %2069 = vmatprep.mubr.f32.mxu0 0.0
      %2070 = vmatmul.mubr.f32.gmra.mxu0 %v1073
      %v2071 = vpop.f32.mrf.mxu0
      %v2072 = vadd.f32 0.0, %v2071
      %v2073 = vpop.f32.mrf.mxu0
      %2074 = vmatprep.mubr.f32.mxu0 0.0
      %2075 = vmatmul.mubr.f32.gmra.mxu0 %v1076
      %v2076 = vpop.f32.mrf.mxu0
      %v2077 = vadd.f32 0.0, %v2076
      %v2078 = vpop.f32.mrf.mxu0
      %2079 = vmatprep.mubr.f32.mxu0 0.0
      %2080 = vmatmul.mubr.f32.gmra.mxu0 %v1079
      %v2081 = vpop.f32.mrf.mxu0
      %v2082 = vadd.f32 0.0, %v2081
      %v2083 = vpop.f32.mrf.mxu0
      %2084 = vmatprep.mubr.f32.mxu0 0.0
      %2085 = vmatmul.mubr.f32.gmra.mxu0 %v1082
      %v2086 = vpop.f32.mrf.mxu0
      %v2087 = vadd.f32 0.0, %v2086
      %v2088 = vpop.f32.mrf.mxu0
      %2089 = vmatprep.mubr.f32.mxu0 0.0
      %2090 = vmatmul.mubr.f32.gmra.mxu0 %v1085
      %v2091 = vpop.f32.mrf.mxu0
      %v2092 = vadd.f32 0.0, %v2091
      %v2093 = vpop.f32.mrf.mxu0
      %2094 = vmatprep.mubr.f32.mxu0 0.0
      %2095 = vmatmul.mubr.f32.gmra.mxu0 %v1088
      %v2096 = vpop.f32.mrf.mxu0
      %v2097 = vadd.f32 0.0, %v2096
      %v2098 = vpop.f32.mrf.mxu0
      %2099 = vmatprep.mubr.f32.mxu0 0.0
      %2100 = vmatmul.mubr.f32.gmra.mxu0 %v1091
      %v2101 = vpop.f32.mrf.mxu0
      %v2102 = vadd.f32 0.0, %v2101
      %v2103 = vpop.f32.mrf.mxu0
      %2104 = vmatprep.mubr.f32.mxu0 0.0
      %2105 = vmatmul.mubr.f32.gmra.mxu0 %v1094
      %v2106 = vpop.f32.mrf.mxu0
      %v2107 = vadd.f32 0.0, %v2106
      %v2108 = vpop.f32.mrf.mxu0
      %2109 = vmatprep.mubr.f32.mxu0 0.0
      %2110 = vmatmul.mubr.f32.gmra.mxu0 %v1097
      %v2111 = vpop.f32.mrf.mxu0
      %v2112 = vadd.f32 0.0, %v2111
      %v2113 = vpop.f32.mrf.mxu0
      %2114 = vmatprep.mubr.f32.mxu0 0.0
      %2115 = vmatmul.mubr.f32.gmra.mxu0 %v1100
      %v2116 = vpop.f32.mrf.mxu0
      %v2117 = vadd.f32 0.0, %v2116
      %v2118 = vpop.f32.mrf.mxu0
      %2119 = vmatprep.mubr.f32.mxu0 0.0
      %2120 = vmatmul.mubr.f32.gmra.mxu0 %v1103
      %v2121 = vpop.f32.mrf.mxu0
      %v2122 = vadd.f32 0.0, %v2121
      %v2123 = vpop.f32.mrf.mxu0
      %2124 = vmatprep.mubr.f32.mxu0 0.0
      %2125 = vmatmul.mubr.f32.gmra.mxu0 %v1106
      %v2126 = vpop.f32.mrf.mxu0
      %v2127 = vadd.f32 0.0, %v2126
      %v2128 = vpop.f32.mrf.mxu0
      %2129 = vmatprep.mubr.f32.mxu0 0.0
      %2130 = vmatmul.mubr.f32.gmra.mxu0 %v1109
      %v2131 = vpop.f32.mrf.mxu0
      %v2132 = vadd.f32 0.0, %v2131
      %v2133 = vpop.f32.mrf.mxu0
      %2134 = vmatprep.mubr.f32.mxu0 0.0
      %2135 = vmatmul.mubr.f32.gmra.mxu0 %v1112
      %v2136 = vpop.f32.mrf.mxu0
      %v2137 = vadd.f32 0.0, %v2136
      %v2138 = vpop.f32.mrf.mxu0
      %2139 = vmatprep.mubr.f32.mxu0 0.0
      %2140 = vmatmul.mubr.f32.gmra.mxu0 %v1115
      %v2141 = vpop.f32.mrf.mxu0
      %v2142 = vadd.f32 0.0, %v2141
      %v2143 = vpop.f32.mrf.mxu0
      %2144 = vdwg.mxu0
      %v2145 = vld [vmem:[%s456] sm:$0xff]
      %v2146 = vld [vmem:[%s456 + $0x8] sm:$0x1]
      %v2149 = vcombine.high %v2145, %v2145
      %v2151 = vunpack.c.l.s4 1966171168
      %v2152 = vunpack.c.0.s8 %v2151
      %v2153 = vlaneseq
      %v2154 = vshrl.u32 %v2153, 7
      %v2155 = vsub.s32 %v2152, %v2154
      %v2156 = vrot.slane %v2145, %v2155
      %v2158 = vunpack.c.l.s4 1966171168
      %v2159 = vunpack.c.0.s8 %v2158
      %v2160 = vlaneseq
      %v2161 = vshrl.u32 %v2160, 7
      %v2162 = vsub.s32 %v2159, %v2161
      %v2163 = vrot.slane %v2149, %v2162
      %v2164 = vcombine.high %v2156, %v2156
      %v2165 = vcombine.high %v2163, %v2163
      %v2167 = vunpack.c.l.s4 1966171168
      %v2168 = vunpack.c.0.s8 %v2167
      %v2169 = vlaneseq
      %v2170 = vshrl.u32 %v2169, 7
      %v2171 = vsub.s32 %v2168, %v2170
      %v2172 = vrot.slane %v2156, %v2171
      %v2174 = vunpack.c.l.s4 1966171168
      %v2175 = vunpack.c.0.s8 %v2174
      %v2176 = vlaneseq
      %v2177 = vshrl.u32 %v2176, 7
      %v2178 = vsub.s32 %v2175, %v2177
      %v2179 = vrot.slane %v2163, %v2178
      %v2181 = vunpack.c.l.s4 1966171168
      %v2182 = vunpack.c.0.s8 %v2181
      %v2183 = vlaneseq
      %v2184 = vshrl.u32 %v2183, 7
      %v2185 = vsub.s32 %v2182, %v2184
      %v2186 = vrot.slane %v2164, %v2185
      %v2188 = vunpack.c.l.s4 1966171168
      %v2189 = vunpack.c.0.s8 %v2188
      %v2190 = vlaneseq
      %v2191 = vshrl.u32 %v2190, 7
      %v2192 = vsub.s32 %v2189, %v2191
      %v2193 = vrot.slane %v2165, %v2192
      %v2194 = vcombine.high %v2172, %v2172
      %v2195 = vcombine.high %v2179, %v2179
      %v2196 = vcombine.high %v2186, %v2186
      %v2197 = vcombine.high %v2193, %v2193
      %v2199 = vunpack.c.l.s4 1966171168
      %v2200 = vunpack.c.0.s8 %v2199
      %v2201 = vlaneseq
      %v2202 = vshrl.u32 %v2201, 7
      %v2203 = vsub.s32 %v2200, %v2202
      %v2204 = vrot.slane %v2146, %v2203
      %v2206 = vunpack.c.l.s4 1966171168
      %v2207 = vunpack.c.0.s8 %v2206
      %v2208 = vlaneseq
      %v2209 = vshrl.u32 %v2208, 7
      %v2210 = vsub.s32 %v2207, %v2209
      %v2211 = vrot.slane %v2204, %v2210
      %v2212 = vlaneseq
      %v2213 = vshrl.u32 %v2212, 7
      %v2214 = vsub.s32 0, %v2213
      %v2215 = vrot.slane %v2172, %v2214
      %v2216 = vlaneseq
      %v2217 = vshrl.u32 %v2216, 7
      %v2218 = vsub.s32 0, %v2217
      %v2219 = vrot.slane %v2186, %v2218
      %v2220 = vlaneseq
      %v2221 = vshrl.u32 %v2220, 7
      %v2222 = vsub.s32 0, %v2221
      %v2223 = vrot.slane %v2194, %v2222
      %v2224 = vlaneseq
      %v2225 = vshrl.u32 %v2224, 7
      %v2226 = vsub.s32 0, %v2225
      %v2227 = vrot.slane %v2196, %v2226
      %v2228 = vlaneseq
      %v2229 = vshrl.u32 %v2228, 7
      %v2230 = vsub.s32 0, %v2229
      %v2231 = vrot.slane %v2179, %v2230
      %v2232 = vlaneseq
      %v2233 = vshrl.u32 %v2232, 7
      %v2234 = vsub.s32 0, %v2233
      %v2235 = vrot.slane %v2193, %v2234
      %v2236 = vlaneseq
      %v2237 = vshrl.u32 %v2236, 7
      %v2238 = vsub.s32 0, %v2237
      %v2239 = vrot.slane %v2195, %v2238
      %v2240 = vlaneseq
      %v2241 = vshrl.u32 %v2240, 7
      %v2242 = vsub.s32 0, %v2241
      %v2243 = vrot.slane %v2197, %v2242
      %v2244 = vlaneseq
      %v2245 = vshrl.u32 %v2244, 7
      %v2246 = vsub.s32 0, %v2245
      %v2247 = vrot.slane %v2211, %v2246
      %v2257 = vmul.f32 %v1184, %v2215
      %v2258 = vmul.f32 %v1189, %v2215
      %v2259 = vmul.f32 %v1194, %v2215
      %v2260 = vmul.f32 %v1199, %v2215
      %v2261 = vmul.f32 %v1204, %v2219
      %v2262 = vmul.f32 %v1209, %v2219
      %v2263 = vmul.f32 %v1214, %v2219
      %v2264 = vmul.f32 %v1219, %v2219
      %v2265 = vmul.f32 %v1224, %v2223
      %v2266 = vmul.f32 %v1229, %v2223
      %v2267 = vmul.f32 %v1234, %v2223
      %v2268 = vmul.f32 %v1239, %v2223
      %v2269 = vmul.f32 %v1244, %v2227
      %v2270 = vmul.f32 %v1249, %v2227
      %v2271 = vmul.f32 %v1254, %v2227
      %v2272 = vmul.f32 %v1259, %v2227
      %v2273 = vmul.f32 %v1264, %v2231
      %v2274 = vmul.f32 %v1269, %v2231
      %v2275 = vmul.f32 %v1274, %v2231
      %v2276 = vmul.f32 %v1279, %v2231
      %v2277 = vmul.f32 %v1284, %v2235
      %v2278 = vmul.f32 %v1289, %v2235
      %v2279 = vmul.f32 %v1294, %v2235
      %v2280 = vmul.f32 %v1299, %v2235
      %v2281 = vmul.f32 %v1304, %v2239
      %v2282 = vmul.f32 %v1309, %v2239
      %v2283 = vmul.f32 %v1314, %v2239
      %v2284 = vmul.f32 %v1319, %v2239
      %v2285 = vmul.f32 %v1324, %v2243
      %v2286 = vmul.f32 %v1329, %v2243
      %v2287 = vmul.f32 %v1334, %v2243
      %v2288 = vmul.f32 %v1339, %v2243
      %v2289 = vmul.f32 %v1344, %v2247
      %v2290 = vmul.f32 %v1349, %v2247
      %v2291 = vmul.f32 %v1354, %v2247
      %v2292 = vmul.f32 %v1359, %v2247
      %v2293 = vmul.f32 %v1445, %v2215
      %v2294 = vmul.f32 %v1450, %v2215
      %v2295 = vmul.f32 %v1455, %v2215
      %v2296 = vmul.f32 %v1460, %v2215
      %v2297 = vmul.f32 %v1465, %v2219
      %v2298 = vmul.f32 %v1470, %v2219
      %v2299 = vmul.f32 %v1475, %v2219
      %v2300 = vmul.f32 %v1480, %v2219
      %v2301 = vmul.f32 %v1485, %v2223
      %v2302 = vmul.f32 %v1490, %v2223
      %v2303 = vmul.f32 %v1495, %v2223
      %v2304 = vmul.f32 %v1500, %v2223
      %v2305 = vmul.f32 %v1505, %v2227
      %v2306 = vmul.f32 %v1510, %v2227
      %v2307 = vmul.f32 %v1515, %v2227
      %v2308 = vmul.f32 %v1520, %v2227
      %v2309 = vmul.f32 %v1525, %v2231
      %v2310 = vmul.f32 %v1530, %v2231
      %v2311 = vmul.f32 %v1535, %v2231
      %v2312 = vmul.f32 %v1540, %v2231
      %v2313 = vmul.f32 %v1545, %v2235
      %v2314 = vmul.f32 %v1550, %v2235
      %v2315 = vmul.f32 %v1555, %v2235
      %v2316 = vmul.f32 %v1560, %v2235
      %v2317 = vmul.f32 %v1565, %v2239
      %v2318 = vmul.f32 %v1570, %v2239
      %v2319 = vmul.f32 %v1575, %v2239
      %v2320 = vmul.f32 %v1580, %v2239
      %v2321 = vmul.f32 %v1585, %v2243
      %v2322 = vmul.f32 %v1590, %v2243
      %v2323 = vmul.f32 %v1595, %v2243
      %v2324 = vmul.f32 %v1600, %v2243
      %v2325 = vmul.f32 %v1605, %v2247
      %v2326 = vmul.f32 %v1610, %v2247
      %v2327 = vmul.f32 %v1615, %v2247
      %v2328 = vmul.f32 %v1620, %v2247
      %v2329 = vmul.f32 %v1706, %v2215
      %v2330 = vmul.f32 %v1711, %v2215
      %v2331 = vmul.f32 %v1716, %v2215
      %v2332 = vmul.f32 %v1721, %v2215
      %v2333 = vmul.f32 %v1726, %v2219
      %v2334 = vmul.f32 %v1731, %v2219
      %v2335 = vmul.f32 %v1736, %v2219
      %v2336 = vmul.f32 %v1741, %v2219
      %v2337 = vmul.f32 %v1746, %v2223
      %v2338 = vmul.f32 %v1751, %v2223
      %v2339 = vmul.f32 %v1756, %v2223
      %v2340 = vmul.f32 %v1761, %v2223
      %v2341 = vmul.f32 %v1766, %v2227
      %v2342 = vmul.f32 %v1771, %v2227
      %v2343 = vmul.f32 %v1776, %v2227
      %v2344 = vmul.f32 %v1781, %v2227
      %v2345 = vmul.f32 %v1786, %v2231
      %v2346 = vmul.f32 %v1791, %v2231
      %v2347 = vmul.f32 %v1796, %v2231
      %v2348 = vmul.f32 %v1801, %v2231
      %v2349 = vmul.f32 %v1806, %v2235
      %v2350 = vmul.f32 %v1811, %v2235
      %v2351 = vmul.f32 %v1816, %v2235
      %v2352 = vmul.f32 %v1821, %v2235
      %v2353 = vmul.f32 %v1826, %v2239
      %v2354 = vmul.f32 %v1831, %v2239
      %v2355 = vmul.f32 %v1836, %v2239
      %v2356 = vmul.f32 %v1841, %v2239
      %v2357 = vmul.f32 %v1846, %v2243
      %v2358 = vmul.f32 %v1851, %v2243
      %v2359 = vmul.f32 %v1856, %v2243
      %v2360 = vmul.f32 %v1861, %v2243
      %v2361 = vmul.f32 %v1866, %v2247
      %v2362 = vmul.f32 %v1871, %v2247
      %v2363 = vmul.f32 %v1876, %v2247
      %v2364 = vmul.f32 %v1881, %v2247
      %v2365 = vmul.f32 %v1967, %v2215
      %v2366 = vmul.f32 %v1972, %v2215
      %v2367 = vmul.f32 %v1977, %v2215
      %v2368 = vmul.f32 %v1982, %v2215
      %v2369 = vmul.f32 %v1987, %v2219
      %v2370 = vmul.f32 %v1992, %v2219
      %v2371 = vmul.f32 %v1997, %v2219
      %v2372 = vmul.f32 %v2002, %v2219
      %v2373 = vmul.f32 %v2007, %v2223
      %v2374 = vmul.f32 %v2012, %v2223
      %v2375 = vmul.f32 %v2017, %v2223
      %v2376 = vmul.f32 %v2022, %v2223
      %v2377 = vmul.f32 %v2027, %v2227
      %v2378 = vmul.f32 %v2032, %v2227
      %v2379 = vmul.f32 %v2037, %v2227
      %v2380 = vmul.f32 %v2042, %v2227
      %v2381 = vmul.f32 %v2047, %v2231
      %v2382 = vmul.f32 %v2052, %v2231
      %v2383 = vmul.f32 %v2057, %v2231
      %v2384 = vmul.f32 %v2062, %v2231
      %v2385 = vmul.f32 %v2067, %v2235
      %v2386 = vmul.f32 %v2072, %v2235
      %v2387 = vmul.f32 %v2077, %v2235
      %v2388 = vmul.f32 %v2082, %v2235
      %v2389 = vmul.f32 %v2087, %v2239
      %v2390 = vmul.f32 %v2092, %v2239
      %v2391 = vmul.f32 %v2097, %v2239
      %v2392 = vmul.f32 %v2102, %v2239
      %v2393 = vmul.f32 %v2107, %v2243
      %v2394 = vmul.f32 %v2112, %v2243
      %v2395 = vmul.f32 %v2117, %v2243
      %v2396 = vmul.f32 %v2122, %v2243
      %v2397 = vmul.f32 %v2127, %v2247
      %v2398 = vmul.f32 %v2132, %v2247
      %v2399 = vmul.f32 %v2137, %v2247
      %v2400 = vmul.f32 %v2142, %v2247
      %vm2401 = vcmask 64512
      %v2402 = vsel %vm2401, %v2257, 0.0
      %v2403 = vsel %vm2401, %v2261, 0.0
      %v2404 = vadd.f32 %v2402, %v2403
      %v2405 = vsel %vm2401, %v2265, 0.0
      %v2406 = vadd.f32 %v2404, %v2405
      %v2407 = vsel %vm2401, %v2269, 0.0
      %v2408 = vadd.f32 %v2406, %v2407
      %v2409 = vsel %vm2401, %v2273, 0.0
      %v2410 = vadd.f32 %v2408, %v2409
      %v2411 = vsel %vm2401, %v2277, 0.0
      %v2412 = vadd.f32 %v2410, %v2411
      %v2413 = vsel %vm2401, %v2281, 0.0
      %v2414 = vadd.f32 %v2412, %v2413
      %v2415 = vsel %vm2401, %v2285, 0.0
      %v2416 = vadd.f32 %v2414, %v2415
      %v2417 = vsel %vm2401, %v2289, 0.0
      %v2418 = vadd.f32 %v2416, %v2417
      %v2419 = vsel %vm2401, %v2258, 0.0
      %v2420 = vsel %vm2401, %v2262, 0.0
      %v2421 = vadd.f32 %v2419, %v2420
      %v2422 = vsel %vm2401, %v2266, 0.0
      %v2423 = vadd.f32 %v2421, %v2422
      %v2424 = vsel %vm2401, %v2270, 0.0
      %v2425 = vadd.f32 %v2423, %v2424
      %v2426 = vsel %vm2401, %v2274, 0.0
      %v2427 = vadd.f32 %v2425, %v2426
      %v2428 = vsel %vm2401, %v2278, 0.0
      %v2429 = vadd.f32 %v2427, %v2428
      %v2430 = vsel %vm2401, %v2282, 0.0
      %v2431 = vadd.f32 %v2429, %v2430
      %v2432 = vsel %vm2401, %v2286, 0.0
      %v2433 = vadd.f32 %v2431, %v2432
      %v2434 = vsel %vm2401, %v2290, 0.0
      %v2435 = vadd.f32 %v2433, %v2434
      %v2436 = vsel %vm2401, %v2259, 0.0
      %v2437 = vsel %vm2401, %v2263, 0.0
      %v2438 = vadd.f32 %v2436, %v2437
      %v2439 = vsel %vm2401, %v2267, 0.0
      %v2440 = vadd.f32 %v2438, %v2439
      %v2441 = vsel %vm2401, %v2271, 0.0
      %v2442 = vadd.f32 %v2440, %v2441
      %v2443 = vsel %vm2401, %v2275, 0.0
      %v2444 = vadd.f32 %v2442, %v2443
      %v2445 = vsel %vm2401, %v2279, 0.0
      %v2446 = vadd.f32 %v2444, %v2445
      %v2447 = vsel %vm2401, %v2283, 0.0
      %v2448 = vadd.f32 %v2446, %v2447
      %v2449 = vsel %vm2401, %v2287, 0.0
      %v2450 = vadd.f32 %v2448, %v2449
      %v2451 = vsel %vm2401, %v2291, 0.0
      %v2452 = vadd.f32 %v2450, %v2451
      %v2453 = vsel %vm2401, %v2260, 0.0
      %v2454 = vsel %vm2401, %v2264, 0.0
      %v2455 = vadd.f32 %v2453, %v2454
      %v2456 = vsel %vm2401, %v2268, 0.0
      %v2457 = vadd.f32 %v2455, %v2456
      %v2458 = vsel %vm2401, %v2272, 0.0
      %v2459 = vadd.f32 %v2457, %v2458
      %v2460 = vsel %vm2401, %v2276, 0.0
      %v2461 = vadd.f32 %v2459, %v2460
      %v2462 = vsel %vm2401, %v2280, 0.0
      %v2463 = vadd.f32 %v2461, %v2462
      %v2464 = vsel %vm2401, %v2284, 0.0
      %v2465 = vadd.f32 %v2463, %v2464
      %v2466 = vsel %vm2401, %v2288, 0.0
      %v2467 = vadd.f32 %v2465, %v2466
      %v2468 = vsel %vm2401, %v2292, 0.0
      %v2469 = vadd.f32 %v2467, %v2468
      %v2470 = vsel %vm2401, %v2293, 0.0
      %v2471 = vsel %vm2401, %v2297, 0.0
      %v2472 = vadd.f32 %v2470, %v2471
      %v2473 = vsel %vm2401, %v2301, 0.0
      %v2474 = vadd.f32 %v2472, %v2473
      %v2475 = vsel %vm2401, %v2305, 0.0
      %v2476 = vadd.f32 %v2474, %v2475
      %v2477 = vsel %vm2401, %v2309, 0.0
      %v2478 = vadd.f32 %v2476, %v2477
      %v2479 = vsel %vm2401, %v2313, 0.0
      %v2480 = vadd.f32 %v2478, %v2479
      %v2481 = vsel %vm2401, %v2317, 0.0
      %v2482 = vadd.f32 %v2480, %v2481
      %v2483 = vsel %vm2401, %v2321, 0.0
      %v2484 = vadd.f32 %v2482, %v2483
      %v2485 = vsel %vm2401, %v2325, 0.0
      %v2486 = vadd.f32 %v2484, %v2485
      %v2487 = vsel %vm2401, %v2294, 0.0
      %v2488 = vsel %vm2401, %v2298, 0.0
      %v2489 = vadd.f32 %v2487, %v2488
      %v2490 = vsel %vm2401, %v2302, 0.0
      %v2491 = vadd.f32 %v2489, %v2490
      %v2492 = vsel %vm2401, %v2306, 0.0
      %v2493 = vadd.f32 %v2491, %v2492
      %v2494 = vsel %vm2401, %v2310, 0.0
      %v2495 = vadd.f32 %v2493, %v2494
      %v2496 = vsel %vm2401, %v2314, 0.0
      %v2497 = vadd.f32 %v2495, %v2496
      %v2498 = vsel %vm2401, %v2318, 0.0
      %v2499 = vadd.f32 %v2497, %v2498
      %v2500 = vsel %vm2401, %v2322, 0.0
      %v2501 = vadd.f32 %v2499, %v2500
      %v2502 = vsel %vm2401, %v2326, 0.0
      %v2503 = vadd.f32 %v2501, %v2502
      %v2504 = vsel %vm2401, %v2295, 0.0
      %v2505 = vsel %vm2401, %v2299, 0.0
      %v2506 = vadd.f32 %v2504, %v2505
      %v2507 = vsel %vm2401, %v2303, 0.0
      %v2508 = vadd.f32 %v2506, %v2507
      %v2509 = vsel %vm2401, %v2307, 0.0
      %v2510 = vadd.f32 %v2508, %v2509
      %v2511 = vsel %vm2401, %v2311, 0.0
      %v2512 = vadd.f32 %v2510, %v2511
      %v2513 = vsel %vm2401, %v2315, 0.0
      %v2514 = vadd.f32 %v2512, %v2513
      %v2515 = vsel %vm2401, %v2319, 0.0
      %v2516 = vadd.f32 %v2514, %v2515
      %v2517 = vsel %vm2401, %v2323, 0.0
      %v2518 = vadd.f32 %v2516, %v2517
      %v2519 = vsel %vm2401, %v2327, 0.0
      %v2520 = vadd.f32 %v2518, %v2519
      %v2521 = vsel %vm2401, %v2296, 0.0
      %v2522 = vsel %vm2401, %v2300, 0.0
      %v2523 = vadd.f32 %v2521, %v2522
      %v2524 = vsel %vm2401, %v2304, 0.0
      %v2525 = vadd.f32 %v2523, %v2524
      %v2526 = vsel %vm2401, %v2308, 0.0
      %v2527 = vadd.f32 %v2525, %v2526
      %v2528 = vsel %vm2401, %v2312, 0.0
      %v2529 = vadd.f32 %v2527, %v2528
      %v2530 = vsel %vm2401, %v2316, 0.0
      %v2531 = vadd.f32 %v2529, %v2530
      %v2532 = vsel %vm2401, %v2320, 0.0
      %v2533 = vadd.f32 %v2531, %v2532
      %v2534 = vsel %vm2401, %v2324, 0.0
      %v2535 = vadd.f32 %v2533, %v2534
      %v2536 = vsel %vm2401, %v2328, 0.0
      %v2537 = vadd.f32 %v2535, %v2536
      %v2538 = vsel %vm2401, %v2329, 0.0
      %v2539 = vsel %vm2401, %v2333, 0.0
      %v2540 = vadd.f32 %v2538, %v2539
      %v2541 = vsel %vm2401, %v2337, 0.0
      %v2542 = vadd.f32 %v2540, %v2541
      %v2543 = vsel %vm2401, %v2341, 0.0
      %v2544 = vadd.f32 %v2542, %v2543
      %v2545 = vsel %vm2401, %v2345, 0.0
      %v2546 = vadd.f32 %v2544, %v2545
      %v2547 = vsel %vm2401, %v2349, 0.0
      %v2548 = vadd.f32 %v2546, %v2547
      %v2549 = vsel %vm2401, %v2353, 0.0
      %v2550 = vadd.f32 %v2548, %v2549
      %v2551 = vsel %vm2401, %v2357, 0.0
      %v2552 = vadd.f32 %v2550, %v2551
      %v2553 = vsel %vm2401, %v2361, 0.0
      %v2554 = vadd.f32 %v2552, %v2553
      %v2555 = vsel %vm2401, %v2330, 0.0
      %v2556 = vsel %vm2401, %v2334, 0.0
      %v2557 = vadd.f32 %v2555, %v2556
      %v2558 = vsel %vm2401, %v2338, 0.0
      %v2559 = vadd.f32 %v2557, %v2558
      %v2560 = vsel %vm2401, %v2342, 0.0
      %v2561 = vadd.f32 %v2559, %v2560
      %v2562 = vsel %vm2401, %v2346, 0.0
      %v2563 = vadd.f32 %v2561, %v2562
      %v2564 = vsel %vm2401, %v2350, 0.0
      %v2565 = vadd.f32 %v2563, %v2564
      %v2566 = vsel %vm2401, %v2354, 0.0
      %v2567 = vadd.f32 %v2565, %v2566
      %v2568 = vsel %vm2401, %v2358, 0.0
      %v2569 = vadd.f32 %v2567, %v2568
      %v2570 = vsel %vm2401, %v2362, 0.0
      %v2571 = vadd.f32 %v2569, %v2570
      %v2572 = vsel %vm2401, %v2331, 0.0
      %v2573 = vsel %vm2401, %v2335, 0.0
      %v2574 = vadd.f32 %v2572, %v2573
      %v2575 = vsel %vm2401, %v2339, 0.0
      %v2576 = vadd.f32 %v2574, %v2575
      %v2577 = vsel %vm2401, %v2343, 0.0
      %v2578 = vadd.f32 %v2576, %v2577
      %v2579 = vsel %vm2401, %v2347, 0.0
      %v2580 = vadd.f32 %v2578, %v2579
      %v2581 = vsel %vm2401, %v2351, 0.0
      %v2582 = vadd.f32 %v2580, %v2581
      %v2583 = vsel %vm2401, %v2355, 0.0
      %v2584 = vadd.f32 %v2582, %v2583
      %v2585 = vsel %vm2401, %v2359, 0.0
      %v2586 = vadd.f32 %v2584, %v2585
      %v2587 = vsel %vm2401, %v2363, 0.0
      %v2588 = vadd.f32 %v2586, %v2587
      %v2589 = vsel %vm2401, %v2332, 0.0
      %v2590 = vsel %vm2401, %v2336, 0.0
      %v2591 = vadd.f32 %v2589, %v2590
      %v2592 = vsel %vm2401, %v2340, 0.0
      %v2593 = vadd.f32 %v2591, %v2592
      %v2594 = vsel %vm2401, %v2344, 0.0
      %v2595 = vadd.f32 %v2593, %v2594
      %v2596 = vsel %vm2401, %v2348, 0.0
      %v2597 = vadd.f32 %v2595, %v2596
      %v2598 = vsel %vm2401, %v2352, 0.0
      %v2599 = vadd.f32 %v2597, %v2598
      %v2600 = vsel %vm2401, %v2356, 0.0
      %v2601 = vadd.f32 %v2599, %v2600
      %v2602 = vsel %vm2401, %v2360, 0.0
      %v2603 = vadd.f32 %v2601, %v2602
      %v2604 = vsel %vm2401, %v2364, 0.0
      %v2605 = vadd.f32 %v2603, %v2604
      %v2606 = vsel %vm2401, %v2365, 0.0
      %v2607 = vsel %vm2401, %v2369, 0.0
      %v2608 = vadd.f32 %v2606, %v2607
      %v2609 = vsel %vm2401, %v2373, 0.0
      %v2610 = vadd.f32 %v2608, %v2609
      %v2611 = vsel %vm2401, %v2377, 0.0
      %v2612 = vadd.f32 %v2610, %v2611
      %v2613 = vsel %vm2401, %v2381, 0.0
      %v2614 = vadd.f32 %v2612, %v2613
      %v2615 = vsel %vm2401, %v2385, 0.0
      %v2616 = vadd.f32 %v2614, %v2615
      %v2617 = vsel %vm2401, %v2389, 0.0
      %v2618 = vadd.f32 %v2616, %v2617
      %v2619 = vsel %vm2401, %v2393, 0.0
      %v2620 = vadd.f32 %v2618, %v2619
      %v2621 = vsel %vm2401, %v2397, 0.0
      %v2622 = vadd.f32 %v2620, %v2621
      %v2623 = vsel %vm2401, %v2366, 0.0
      %v2624 = vsel %vm2401, %v2370, 0.0
      %v2625 = vadd.f32 %v2623, %v2624
      %v2626 = vsel %vm2401, %v2374, 0.0
      %v2627 = vadd.f32 %v2625, %v2626
      %v2628 = vsel %vm2401, %v2378, 0.0
      %v2629 = vadd.f32 %v2627, %v2628
      %v2630 = vsel %vm2401, %v2382, 0.0
      %v2631 = vadd.f32 %v2629, %v2630
      %v2632 = vsel %vm2401, %v2386, 0.0
      %v2633 = vadd.f32 %v2631, %v2632
      %v2634 = vsel %vm2401, %v2390, 0.0
      %v2635 = vadd.f32 %v2633, %v2634
      %v2636 = vsel %vm2401, %v2394, 0.0
      %v2637 = vadd.f32 %v2635, %v2636
      %v2638 = vsel %vm2401, %v2398, 0.0
      %v2639 = vadd.f32 %v2637, %v2638
      %v2640 = vsel %vm2401, %v2367, 0.0
      %v2641 = vsel %vm2401, %v2371, 0.0
      %v2642 = vadd.f32 %v2640, %v2641
      %v2643 = vsel %vm2401, %v2375, 0.0
      %v2644 = vadd.f32 %v2642, %v2643
      %v2645 = vsel %vm2401, %v2379, 0.0
      %v2646 = vadd.f32 %v2644, %v2645
      %v2647 = vsel %vm2401, %v2383, 0.0
      %v2648 = vadd.f32 %v2646, %v2647
      %v2649 = vsel %vm2401, %v2387, 0.0
      %v2650 = vadd.f32 %v2648, %v2649
      %v2651 = vsel %vm2401, %v2391, 0.0
      %v2652 = vadd.f32 %v2650, %v2651
      %v2653 = vsel %vm2401, %v2395, 0.0
      %v2654 = vadd.f32 %v2652, %v2653
      %v2655 = vsel %vm2401, %v2399, 0.0
      %v2656 = vadd.f32 %v2654, %v2655
      %v2657 = vsel %vm2401, %v2368, 0.0
      %v2658 = vsel %vm2401, %v2372, 0.0
      %v2659 = vadd.f32 %v2657, %v2658
      %v2660 = vsel %vm2401, %v2376, 0.0
      %v2661 = vadd.f32 %v2659, %v2660
      %v2662 = vsel %vm2401, %v2380, 0.0
      %v2663 = vadd.f32 %v2661, %v2662
      %v2664 = vsel %vm2401, %v2384, 0.0
      %v2665 = vadd.f32 %v2663, %v2664
      %v2666 = vsel %vm2401, %v2388, 0.0
      %v2667 = vadd.f32 %v2665, %v2666
      %v2668 = vsel %vm2401, %v2392, 0.0
      %v2669 = vadd.f32 %v2667, %v2668
      %v2670 = vsel %vm2401, %v2396, 0.0
      %v2671 = vadd.f32 %v2669, %v2670
      %v2672 = vsel %vm2401, %v2400, 0.0
      %v2673 = vadd.f32 %v2671, %v2672
      %v2674 = vld [vmem:[%s459] sm:$0x1]
      %v2676 = vlaneseq
      %v2677 = vshrl.u32 %v2676, 7
      %v2678 = vsub.s32 0, %v2677
      %v2679 = vrot.slane %v2674, %v2678
      %v2681 = vadd.f32 %v2418, %v2679
      %v2682 = vadd.f32 %v2435, %v2679
      %v2683 = vadd.f32 %v2452, %v2679
      %v2684 = vadd.f32 %v2469, %v2679
      %v2685 = vadd.f32 %v2486, %v2679
      %v2686 = vadd.f32 %v2503, %v2679
      %v2687 = vadd.f32 %v2520, %v2679
      %v2688 = vadd.f32 %v2537, %v2679
      %v2689 = vadd.f32 %v2554, %v2679
      %v2690 = vadd.f32 %v2571, %v2679
      %v2691 = vadd.f32 %v2588, %v2679
      %v2692 = vadd.f32 %v2605, %v2679
      %v2693 = vadd.f32 %v2622, %v2679
      %v2694 = vadd.f32 %v2639, %v2679
      %v2695 = vadd.f32 %v2656, %v2679
      %v2696 = vadd.f32 %v2673, %v2679
      %v2697 = vmul.f32 %v878, 0.35355338
      %v2698 = vmul.f32 %v883, 0.35355338
      %v2699 = vmul.f32 %v888, 0.35355338
      %v2700 = vmul.f32 %v893, 0.35355338
      %v2701 = vmul.f32 %v898, 0.35355338
      %v2702 = vmul.f32 %v903, 0.35355338
      %v2703 = vmul.f32 %v908, 0.35355338
      %v2704 = vmul.f32 %v913, 0.35355338
      %v2705 = vmul.f32 %v918, 0.35355338
      %v2706 = vmul.f32 %v923, 0.35355338
      %v2707 = vmul.f32 %v928, 0.35355338
      %v2708 = vmul.f32 %v933, 0.35355338
      %v2709 = vmul.f32 %v938, 0.35355338
      %v2710 = vmul.f32 %v943, 0.35355338
      %v2711 = vmul.f32 %v948, 0.35355338
      %v2712 = vmul.f32 %v953, 0.35355338
      %2713 = vrot.lane.b32.xlu0 %v878, 120
      %v2714 = vpop.permute.xlu0 %2713
      %2715 = vrot.lane.b32.xlu0 %v883, 120
      %v2716 = vpop.permute.xlu0 %2715
      %2717 = vrot.lane.b32.xlu0 %v888, 120
      %v2718 = vpop.permute.xlu0 %2717
      %2719 = vrot.lane.b32.xlu0 %v893, 120
      %v2720 = vpop.permute.xlu0 %2719
      %vm2721 = vcmask 31744
      %v2723 = vsel %vm2721, %v2697, 0
      %v2726 = vsel %vm2721, %v2698, 0
      %v2729 = vsel %vm2721, %v2699, 0
      %v2732 = vsel %vm2721, %v2700, 0
      %v2734 = vsel %vm2721, %v2714, 0
      %v2736 = vsel %vm2721, %v2716, 0
      %v2738 = vsel %vm2721, %v2718, 0
      %v2740 = vsel %vm2721, %v2720, 0
      %2742 = vmatprep.subr.mxu0 0.0
      %2743 = vmatpush1.xpose.msra.mxu0 0.0
      %2744 = vmatprep.subr.mxu0 0.0
      %2745 = vmatpush1.xpose.msra.mxu0 0.0
      %2746 = vmatprep.subr.mxu0 0.0
      %2747 = vmatpush1.xpose.msra.mxu0 0.0
      %2748 = vmatprep.subr.mxu0 0.0
      %2749 = vmatpush1.xpose.msra.mxu0 0.0
      %2750 = vmatprep.subr.mxu0 0.0
      %2751 = vmatpush1.xpose.msra.mxu0 0.0
      %2752 = vmatprep.subr.mxu0 0.0
      %2753 = vmatpush1.xpose.msra.mxu0 0.0
      %2754 = vmatprep.subr.mxu0 0.0
      %2755 = vmatpush1.xpose.msra.mxu0 0.0
      %2756 = vmatprep.subr.mxu0 0.0
      %2757 = vmatpush1.xpose.msra.mxu0 0.0
      %2758 = vmatprep.subr.mxu0 0.0
      %2759 = vmatpush1.xpose.msra.mxu0 0.0
      %2760 = vmatprep.subr.mxu0 0.0
      %2761 = vmatpush1.xpose.msra.mxu0 0.0
      %2762 = vmatprep.subr.mxu0 0.0
      %2763 = vmatpush1.xpose.msra.mxu0 0.0
      %2764 = vmatprep.subr.mxu0 0.0
      %2765 = vmatpush1.xpose.msra.mxu0 0.0
      %2766 = vmatprep.subr.mxu0 0.0
      %2767 = vmatpush1.xpose.msra.mxu0 %v2740
      %2768 = vmatprep.subr.mxu0 0.0
      %2769 = vmatpush1.xpose.msra.mxu0 %v2738
      %2770 = vmatprep.subr.mxu0 0.0
      %2771 = vmatpush1.xpose.msra.mxu0 %v2736
      %2772 = vmatprep.subr.mxu0 0.0
      %2773 = vmatpush1.xpose.msra.mxu0 %v2734
      %2774 = vmatprep.subr.mxu0 0.0
      %2775 = vmatpush2.xpose.msra.mxu0 0.0
      %2776 = vmatprep.subr.mxu0 0.0
      %2777 = vmatpush2.xpose.msra.mxu0 0.0
      %2778 = vmatprep.subr.mxu0 0.0
      %2779 = vmatpush2.xpose.msra.mxu0 0.0
      %2780 = vmatprep.subr.mxu0 0.0
      %2781 = vmatpush2.xpose.msra.mxu0 0.0
      %2782 = vmatprep.subr.mxu0 0.0
      %2783 = vmatpush2.xpose.msra.mxu0 0.0
      %2784 = vmatprep.subr.mxu0 0.0
      %2785 = vmatpush2.xpose.msra.mxu0 0.0
      %2786 = vmatprep.subr.mxu0 0.0
      %2787 = vmatpush2.xpose.msra.mxu0 0.0
      %2788 = vmatprep.subr.mxu0 0.0
      %2789 = vmatpush2.xpose.msra.mxu0 0.0
      %2790 = vmatprep.subr.mxu0 0.0
      %2791 = vmatpush2.xpose.msra.mxu0 0.0
      %2792 = vmatprep.subr.mxu0 0.0
      %2793 = vmatpush2.xpose.msra.mxu0 0.0
      %2794 = vmatprep.subr.mxu0 0.0
      %2795 = vmatpush2.xpose.msra.mxu0 0.0
      %2796 = vmatprep.subr.mxu0 0.0
      %2797 = vmatpush2.xpose.msra.mxu0 0.0
      %2798 = vmatprep.subr.mxu0 0.0
      %2799 = vmatpush2.xpose.msra.mxu0 0.0
      %2800 = vmatprep.subr.mxu0 0.0
      %2801 = vmatpush2.xpose.msra.mxu0 0.0
      %2802 = vmatprep.subr.mxu0 0.0
      %2803 = vmatpush2.xpose.msra.mxu0 0.0
      %2804 = vmatprep.subr.mxu0 0.0
      %2805 = vmatpush2.xpose.msra.mxu0 0.0
      %2806 = vmatprep.mubr.f32.mxu0 0.0
      %2807 = vmatmul.mubr.f32.gmra.mxu0 %v2723
      %v2808 = vpop.f32.mrf.mxu0
      %v2809 = vadd.f32 0.0, %v2808
      %v2810 = vpop.f32.mrf.mxu0
      %2811 = vmatprep.mubr.f32.mxu0 0.0
      %2812 = vmatmul.mubr.f32.gmra.mxu0 %v2726
      %v2813 = vpop.f32.mrf.mxu0
      %v2814 = vadd.f32 0.0, %v2813
      %v2815 = vpop.f32.mrf.mxu0
      %2816 = vmatprep.mubr.f32.mxu0 0.0
      %2817 = vmatmul.mubr.f32.gmra.mxu0 %v2729
      %v2818 = vpop.f32.mrf.mxu0
      %v2819 = vadd.f32 0.0, %v2818
      %v2820 = vpop.f32.mrf.mxu0
      %2821 = vmatprep.mubr.f32.mxu0 0.0
      %2822 = vmatmul.mubr.f32.gmra.mxu0 %v2732
      %v2823 = vpop.f32.mrf.mxu0
      %v2824 = vadd.f32 0.0, %v2823
      %v2825 = vpop.f32.mrf.mxu0
      %2826 = vdwg.mxu0
      %2827 = vrot.lane.b32.xlu0 %v898, 120
      %v2828 = vpop.permute.xlu0 %2827
      %2829 = vrot.lane.b32.xlu0 %v903, 120
      %v2830 = vpop.permute.xlu0 %2829
      %2831 = vrot.lane.b32.xlu0 %v908, 120
      %v2832 = vpop.permute.xlu0 %2831
      %2833 = vrot.lane.b32.xlu0 %v913, 120
      %v2834 = vpop.permute.xlu0 %2833
      %v2836 = vsel %vm2721, %v2701, 0
      %v2839 = vsel %vm2721, %v2702, 0
      %v2842 = vsel %vm2721, %v2703, 0
      %v2845 = vsel %vm2721, %v2704, 0
      %v2847 = vsel %vm2721, %v2828, 0
      %v2849 = vsel %vm2721, %v2830, 0
      %v2851 = vsel %vm2721, %v2832, 0
      %v2853 = vsel %vm2721, %v2834, 0
      %2855 = vmatprep.subr.mxu0 0.0
      %2856 = vmatpush1.xpose.msra.mxu0 0.0
      %2857 = vmatprep.subr.mxu0 0.0
      %2858 = vmatpush1.xpose.msra.mxu0 0.0
      %2859 = vmatprep.subr.mxu0 0.0
      %2860 = vmatpush1.xpose.msra.mxu0 0.0
      %2861 = vmatprep.subr.mxu0 0.0
      %2862 = vmatpush1.xpose.msra.mxu0 0.0
      %2863 = vmatprep.subr.mxu0 0.0
      %2864 = vmatpush1.xpose.msra.mxu0 0.0
      %2865 = vmatprep.subr.mxu0 0.0
      %2866 = vmatpush1.xpose.msra.mxu0 0.0
      %2867 = vmatprep.subr.mxu0 0.0
      %2868 = vmatpush1.xpose.msra.mxu0 0.0
      %2869 = vmatprep.subr.mxu0 0.0
      %2870 = vmatpush1.xpose.msra.mxu0 0.0
      %2871 = vmatprep.subr.mxu0 0.0
      %2872 = vmatpush1.xpose.msra.mxu0 0.0
      %2873 = vmatprep.subr.mxu0 0.0
      %2874 = vmatpush1.xpose.msra.mxu0 0.0
      %2875 = vmatprep.subr.mxu0 0.0
      %2876 = vmatpush1.xpose.msra.mxu0 0.0
      %2877 = vmatprep.subr.mxu0 0.0
      %2878 = vmatpush1.xpose.msra.mxu0 0.0
      %2879 = vmatprep.subr.mxu0 0.0
      %2880 = vmatpush1.xpose.msra.mxu0 %v2853
      %2881 = vmatprep.subr.mxu0 0.0
      %2882 = vmatpush1.xpose.msra.mxu0 %v2851
      %2883 = vmatprep.subr.mxu0 0.0
      %2884 = vmatpush1.xpose.msra.mxu0 %v2849
      %2885 = vmatprep.subr.mxu0 0.0
      %2886 = vmatpush1.xpose.msra.mxu0 %v2847
      %2887 = vmatprep.subr.mxu0 0.0
      %2888 = vmatpush2.xpose.msra.mxu0 0.0
      %2889 = vmatprep.subr.mxu0 0.0
      %2890 = vmatpush2.xpose.msra.mxu0 0.0
      %2891 = vmatprep.subr.mxu0 0.0
      %2892 = vmatpush2.xpose.msra.mxu0 0.0
      %2893 = vmatprep.subr.mxu0 0.0
      %2894 = vmatpush2.xpose.msra.mxu0 0.0
      %2895 = vmatprep.subr.mxu0 0.0
      %2896 = vmatpush2.xpose.msra.mxu0 0.0
      %2897 = vmatprep.subr.mxu0 0.0
      %2898 = vmatpush2.xpose.msra.mxu0 0.0
      %2899 = vmatprep.subr.mxu0 0.0
      %2900 = vmatpush2.xpose.msra.mxu0 0.0
      %2901 = vmatprep.subr.mxu0 0.0
      %2902 = vmatpush2.xpose.msra.mxu0 0.0
      %2903 = vmatprep.subr.mxu0 0.0
      %2904 = vmatpush2.xpose.msra.mxu0 0.0
      %2905 = vmatprep.subr.mxu0 0.0
      %2906 = vmatpush2.xpose.msra.mxu0 0.0
      %2907 = vmatprep.subr.mxu0 0.0
      %2908 = vmatpush2.xpose.msra.mxu0 0.0
      %2909 = vmatprep.subr.mxu0 0.0
      %2910 = vmatpush2.xpose.msra.mxu0 0.0
      %2911 = vmatprep.subr.mxu0 0.0
      %2912 = vmatpush2.xpose.msra.mxu0 0.0
      %2913 = vmatprep.subr.mxu0 0.0
      %2914 = vmatpush2.xpose.msra.mxu0 0.0
      %2915 = vmatprep.subr.mxu0 0.0
      %2916 = vmatpush2.xpose.msra.mxu0 0.0
      %2917 = vmatprep.subr.mxu0 0.0
      %2918 = vmatpush2.xpose.msra.mxu0 0.0
      %2919 = vmatprep.mubr.f32.mxu0 0.0
      %2920 = vmatmul.mubr.f32.gmra.mxu0 %v2836
      %v2921 = vpop.f32.mrf.mxu0
      %v2922 = vadd.f32 0.0, %v2921
      %v2923 = vpop.f32.mrf.mxu0
      %2924 = vmatprep.mubr.f32.mxu0 0.0
      %2925 = vmatmul.mubr.f32.gmra.mxu0 %v2839
      %v2926 = vpop.f32.mrf.mxu0
      %v2927 = vadd.f32 0.0, %v2926
      %v2928 = vpop.f32.mrf.mxu0
      %2929 = vmatprep.mubr.f32.mxu0 0.0
      %2930 = vmatmul.mubr.f32.gmra.mxu0 %v2842
      %v2931 = vpop.f32.mrf.mxu0
      %v2932 = vadd.f32 0.0, %v2931
      %v2933 = vpop.f32.mrf.mxu0
      %2934 = vmatprep.mubr.f32.mxu0 0.0
      %2935 = vmatmul.mubr.f32.gmra.mxu0 %v2845
      %v2936 = vpop.f32.mrf.mxu0
      %v2937 = vadd.f32 0.0, %v2936
      %v2938 = vpop.f32.mrf.mxu0
      %2939 = vdwg.mxu0
      %2940 = vrot.lane.b32.xlu0 %v918, 120
      %v2941 = vpop.permute.xlu0 %2940
      %2942 = vrot.lane.b32.xlu0 %v923, 120
      %v2943 = vpop.permute.xlu0 %2942
      %2944 = vrot.lane.b32.xlu0 %v928, 120
      %v2945 = vpop.permute.xlu0 %2944
      %2946 = vrot.lane.b32.xlu0 %v933, 120
      %v2947 = vpop.permute.xlu0 %2946
      %v2949 = vsel %vm2721, %v2705, 0
      %v2952 = vsel %vm2721, %v2706, 0
      %v2955 = vsel %vm2721, %v2707, 0
      %v2958 = vsel %vm2721, %v2708, 0
      %v2960 = vsel %vm2721, %v2941, 0
      %v2962 = vsel %vm2721, %v2943, 0
      %v2964 = vsel %vm2721, %v2945, 0
      %v2966 = vsel %vm2721, %v2947, 0
      %2968 = vmatprep.subr.mxu0 0.0
      %2969 = vmatpush1.xpose.msra.mxu0 0.0
      %2970 = vmatprep.subr.mxu0 0.0
      %2971 = vmatpush1.xpose.msra.mxu0 0.0
      %2972 = vmatprep.subr.mxu0 0.0
      %2973 = vmatpush1.xpose.msra.mxu0 0.0
      %2974 = vmatprep.subr.mxu0 0.0
      %2975 = vmatpush1.xpose.msra.mxu0 0.0
      %2976 = vmatprep.subr.mxu0 0.0
      %2977 = vmatpush1.xpose.msra.mxu0 0.0
      %2978 = vmatprep.subr.mxu0 0.0
      %2979 = vmatpush1.xpose.msra.mxu0 0.0
      %2980 = vmatprep.subr.mxu0 0.0
      %2981 = vmatpush1.xpose.msra.mxu0 0.0
      %2982 = vmatprep.subr.mxu0 0.0
      %2983 = vmatpush1.xpose.msra.mxu0 0.0
      %2984 = vmatprep.subr.mxu0 0.0
      %2985 = vmatpush1.xpose.msra.mxu0 0.0
      %2986 = vmatprep.subr.mxu0 0.0
      %2987 = vmatpush1.xpose.msra.mxu0 0.0
      %2988 = vmatprep.subr.mxu0 0.0
      %2989 = vmatpush1.xpose.msra.mxu0 0.0
      %2990 = vmatprep.subr.mxu0 0.0
      %2991 = vmatpush1.xpose.msra.mxu0 0.0
      %2992 = vmatprep.subr.mxu0 0.0
      %2993 = vmatpush1.xpose.msra.mxu0 %v2966
      %2994 = vmatprep.subr.mxu0 0.0
      %2995 = vmatpush1.xpose.msra.mxu0 %v2964
      %2996 = vmatprep.subr.mxu0 0.0
      %2997 = vmatpush1.xpose.msra.mxu0 %v2962
      %2998 = vmatprep.subr.mxu0 0.0
      %2999 = vmatpush1.xpose.msra.mxu0 %v2960
      %3000 = vmatprep.subr.mxu0 0.0
      %3001 = vmatpush2.xpose.msra.mxu0 0.0
      %3002 = vmatprep.subr.mxu0 0.0
      %3003 = vmatpush2.xpose.msra.mxu0 0.0
      %3004 = vmatprep.subr.mxu0 0.0
      %3005 = vmatpush2.xpose.msra.mxu0 0.0
      %3006 = vmatprep.subr.mxu0 0.0
      %3007 = vmatpush2.xpose.msra.mxu0 0.0
      %3008 = vmatprep.subr.mxu0 0.0
      %3009 = vmatpush2.xpose.msra.mxu0 0.0
      %3010 = vmatprep.subr.mxu0 0.0
      %3011 = vmatpush2.xpose.msra.mxu0 0.0
      %3012 = vmatprep.subr.mxu0 0.0
      %3013 = vmatpush2.xpose.msra.mxu0 0.0
      %3014 = vmatprep.subr.mxu0 0.0
      %3015 = vmatpush2.xpose.msra.mxu0 0.0
      %3016 = vmatprep.subr.mxu0 0.0
      %3017 = vmatpush2.xpose.msra.mxu0 0.0
      %3018 = vmatprep.subr.mxu0 0.0
      %3019 = vmatpush2.xpose.msra.mxu0 0.0
      %3020 = vmatprep.subr.mxu0 0.0
      %3021 = vmatpush2.xpose.msra.mxu0 0.0
      %3022 = vmatprep.subr.mxu0 0.0
      %3023 = vmatpush2.xpose.msra.mxu0 0.0
      %3024 = vmatprep.subr.mxu0 0.0
      %3025 = vmatpush2.xpose.msra.mxu0 0.0
      %3026 = vmatprep.subr.mxu0 0.0
      %3027 = vmatpush2.xpose.msra.mxu0 0.0
      %3028 = vmatprep.subr.mxu0 0.0
      %3029 = vmatpush2.xpose.msra.mxu0 0.0
      %3030 = vmatprep.subr.mxu0 0.0
      %3031 = vmatpush2.xpose.msra.mxu0 0.0
      %3032 = vmatprep.mubr.f32.mxu0 0.0
      %3033 = vmatmul.mubr.f32.gmra.mxu0 %v2949
      %v3034 = vpop.f32.mrf.mxu0
      %v3035 = vadd.f32 0.0, %v3034
      %v3036 = vpop.f32.mrf.mxu0
      %3037 = vmatprep.mubr.f32.mxu0 0.0
      %3038 = vmatmul.mubr.f32.gmra.mxu0 %v2952
      %v3039 = vpop.f32.mrf.mxu0
      %v3040 = vadd.f32 0.0, %v3039
      %v3041 = vpop.f32.mrf.mxu0
      %3042 = vmatprep.mubr.f32.mxu0 0.0
      %3043 = vmatmul.mubr.f32.gmra.mxu0 %v2955
      %v3044 = vpop.f32.mrf.mxu0
      %v3045 = vadd.f32 0.0, %v3044
      %v3046 = vpop.f32.mrf.mxu0
      %3047 = vmatprep.mubr.f32.mxu0 0.0
      %3048 = vmatmul.mubr.f32.gmra.mxu0 %v2958
      %v3049 = vpop.f32.mrf.mxu0
      %v3050 = vadd.f32 0.0, %v3049
      %v3051 = vpop.f32.mrf.mxu0
      %3052 = vdwg.mxu0
      %3053 = vrot.lane.b32.xlu0 %v938, 120
      %v3054 = vpop.permute.xlu0 %3053
      %3055 = vrot.lane.b32.xlu0 %v943, 120
      %v3056 = vpop.permute.xlu0 %3055
      %3057 = vrot.lane.b32.xlu0 %v948, 120
      %v3058 = vpop.permute.xlu0 %3057
      %3059 = vrot.lane.b32.xlu0 %v953, 120
      %v3060 = vpop.permute.xlu0 %3059
      %v3062 = vsel %vm2721, %v2709, 0
      %v3065 = vsel %vm2721, %v2710, 0
      %v3068 = vsel %vm2721, %v2711, 0
      %v3071 = vsel %vm2721, %v2712, 0
      %v3073 = vsel %vm2721, %v3054, 0
      %v3075 = vsel %vm2721, %v3056, 0
      %v3077 = vsel %vm2721, %v3058, 0
      %v3079 = vsel %vm2721, %v3060, 0
      %3081 = vmatprep.subr.mxu0 0.0
      %3082 = vmatpush1.xpose.msra.mxu0 0.0
      %3083 = vmatprep.subr.mxu0 0.0
      %3084 = vmatpush1.xpose.msra.mxu0 0.0
      %3085 = vmatprep.subr.mxu0 0.0
      %3086 = vmatpush1.xpose.msra.mxu0 0.0
      %3087 = vmatprep.subr.mxu0 0.0
      %3088 = vmatpush1.xpose.msra.mxu0 0.0
      %3089 = vmatprep.subr.mxu0 0.0
      %3090 = vmatpush1.xpose.msra.mxu0 0.0
      %3091 = vmatprep.subr.mxu0 0.0
      %3092 = vmatpush1.xpose.msra.mxu0 0.0
      %3093 = vmatprep.subr.mxu0 0.0
      %3094 = vmatpush1.xpose.msra.mxu0 0.0
      %3095 = vmatprep.subr.mxu0 0.0
      %3096 = vmatpush1.xpose.msra.mxu0 0.0
      %3097 = vmatprep.subr.mxu0 0.0
      %3098 = vmatpush1.xpose.msra.mxu0 0.0
      %3099 = vmatprep.subr.mxu0 0.0
      %3100 = vmatpush1.xpose.msra.mxu0 0.0
      %3101 = vmatprep.subr.mxu0 0.0
      %3102 = vmatpush1.xpose.msra.mxu0 0.0
      %3103 = vmatprep.subr.mxu0 0.0
      %3104 = vmatpush1.xpose.msra.mxu0 0.0
      %3105 = vmatprep.subr.mxu0 0.0
      %3106 = vmatpush1.xpose.msra.mxu0 %v3079
      %3107 = vmatprep.subr.mxu0 0.0
      %3108 = vmatpush1.xpose.msra.mxu0 %v3077
      %3109 = vmatprep.subr.mxu0 0.0
      %3110 = vmatpush1.xpose.msra.mxu0 %v3075
      %3111 = vmatprep.subr.mxu0 0.0
      %3112 = vmatpush1.xpose.msra.mxu0 %v3073
      %3113 = vmatprep.subr.mxu0 0.0
      %3114 = vmatpush2.xpose.msra.mxu0 0.0
      %3115 = vmatprep.subr.mxu0 0.0
      %3116 = vmatpush2.xpose.msra.mxu0 0.0
      %3117 = vmatprep.subr.mxu0 0.0
      %3118 = vmatpush2.xpose.msra.mxu0 0.0
      %3119 = vmatprep.subr.mxu0 0.0
      %3120 = vmatpush2.xpose.msra.mxu0 0.0
      %3121 = vmatprep.subr.mxu0 0.0
      %3122 = vmatpush2.xpose.msra.mxu0 0.0
      %3123 = vmatprep.subr.mxu0 0.0
      %3124 = vmatpush2.xpose.msra.mxu0 0.0
      %3125 = vmatprep.subr.mxu0 0.0
      %3126 = vmatpush2.xpose.msra.mxu0 0.0
      %3127 = vmatprep.subr.mxu0 0.0
      %3128 = vmatpush2.xpose.msra.mxu0 0.0
      %3129 = vmatprep.subr.mxu0 0.0
      %3130 = vmatpush2.xpose.msra.mxu0 0.0
      %3131 = vmatprep.subr.mxu0 0.0
      %3132 = vmatpush2.xpose.msra.mxu0 0.0
      %3133 = vmatprep.subr.mxu0 0.0
      %3134 = vmatpush2.xpose.msra.mxu0 0.0
      %3135 = vmatprep.subr.mxu0 0.0
      %3136 = vmatpush2.xpose.msra.mxu0 0.0
      %3137 = vmatprep.subr.mxu0 0.0
      %3138 = vmatpush2.xpose.msra.mxu0 0.0
      %3139 = vmatprep.subr.mxu0 0.0
      %3140 = vmatpush2.xpose.msra.mxu0 0.0
      %3141 = vmatprep.subr.mxu0 0.0
      %3142 = vmatpush2.xpose.msra.mxu0 0.0
      %3143 = vmatprep.subr.mxu0 0.0
      %3144 = vmatpush2.xpose.msra.mxu0 0.0
      %3145 = vmatprep.mubr.f32.mxu0 0.0
      %3146 = vmatmul.mubr.f32.gmra.mxu0 %v3062
      %v3147 = vpop.f32.mrf.mxu0
      %v3148 = vadd.f32 0.0, %v3147
      %v3149 = vpop.f32.mrf.mxu0
      %3150 = vmatprep.mubr.f32.mxu0 0.0
      %3151 = vmatmul.mubr.f32.gmra.mxu0 %v3065
      %v3152 = vpop.f32.mrf.mxu0
      %v3153 = vadd.f32 0.0, %v3152
      %v3154 = vpop.f32.mrf.mxu0
      %3155 = vmatprep.mubr.f32.mxu0 0.0
      %3156 = vmatmul.mubr.f32.gmra.mxu0 %v3068
      %v3157 = vpop.f32.mrf.mxu0
      %v3158 = vadd.f32 0.0, %v3157
      %v3159 = vpop.f32.mrf.mxu0
      %3160 = vmatprep.mubr.f32.mxu0 0.0
      %3161 = vmatmul.mubr.f32.gmra.mxu0 %v3071
      %v3162 = vpop.f32.mrf.mxu0
      %v3163 = vadd.f32 0.0, %v3162
      %v3164 = vpop.f32.mrf.mxu0
      %3165 = vdwg.mxu0
      %v3166 = vsel %vm1008, %v2809, -inf
      %3167 = vmax.xlane.f32.xlu0 %v3166
      %v3168 = vpop.xlane.xlu0 %3167
      %v3169 = vsel %vm1008, %v2814, -inf
      %3170 = vmax.xlane.f32.xlu0 %v3169
      %v3171 = vpop.xlane.xlu0 %3170
      %v3172 = vsel %vm1008, %v2819, -inf
      %3173 = vmax.xlane.f32.xlu0 %v3172
      %v3174 = vpop.xlane.xlu0 %3173
      %v3175 = vsel %vm1008, %v2824, -inf
      %3176 = vmax.xlane.f32.xlu0 %v3175
      %v3177 = vpop.xlane.xlu0 %3176
      %v3178 = vsel %vm1008, %v2922, -inf
      %3179 = vmax.xlane.f32.xlu0 %v3178
      %v3180 = vpop.xlane.xlu0 %3179
      %v3181 = vsel %vm1008, %v2927, -inf
      %3182 = vmax.xlane.f32.xlu0 %v3181
      %v3183 = vpop.xlane.xlu0 %3182
      %v3184 = vsel %vm1008, %v2932, -inf
      %3185 = vmax.xlane.f32.xlu0 %v3184
      %v3186 = vpop.xlane.xlu0 %3185
      %v3187 = vsel %vm1008, %v2937, -inf
      %3188 = vmax.xlane.f32.xlu0 %v3187
      %v3189 = vpop.xlane.xlu0 %3188
      %v3190 = vsel %vm1008, %v3035, -inf
      %3191 = vmax.xlane.f32.xlu0 %v3190
      %v3192 = vpop.xlane.xlu0 %3191
      %v3193 = vsel %vm1008, %v3040, -inf
      %3194 = vmax.xlane.f32.xlu0 %v3193
      %v3195 = vpop.xlane.xlu0 %3194
      %v3196 = vsel %vm1008, %v3045, -inf
      %3197 = vmax.xlane.f32.xlu0 %v3196
      %v3198 = vpop.xlane.xlu0 %3197
      %v3199 = vsel %vm1008, %v3050, -inf
      %3200 = vmax.xlane.f32.xlu0 %v3199
      %v3201 = vpop.xlane.xlu0 %3200
      %v3202 = vsel %vm1008, %v3148, -inf
      %3203 = vmax.xlane.f32.xlu0 %v3202
      %v3204 = vpop.xlane.xlu0 %3203
      %v3205 = vsel %vm1008, %v3153, -inf
      %3206 = vmax.xlane.f32.xlu0 %v3205
      %v3207 = vpop.xlane.xlu0 %3206
      %v3208 = vsel %vm1008, %v3158, -inf
      %3209 = vmax.xlane.f32.xlu0 %v3208
      %v3210 = vpop.xlane.xlu0 %3209
      %v3211 = vsel %vm1008, %v3163, -inf
      %3212 = vmax.xlane.f32.xlu0 %v3211
      %v3213 = vpop.xlane.xlu0 %3212
      %v3214 = vsub.f32 %v2809, %v3168
      %v3215 = vsub.f32 %v2814, %v3171
      %v3216 = vsub.f32 %v2819, %v3174
      %v3217 = vsub.f32 %v2824, %v3177
      %v3218 = vsub.f32 %v2922, %v3180
      %v3219 = vsub.f32 %v2927, %v3183
      %v3220 = vsub.f32 %v2932, %v3186
      %v3221 = vsub.f32 %v2937, %v3189
      %v3222 = vsub.f32 %v3035, %v3192
      %v3223 = vsub.f32 %v3040, %v3195
      %v3224 = vsub.f32 %v3045, %v3198
      %v3225 = vsub.f32 %v3050, %v3201
      %v3226 = vsub.f32 %v3148, %v3204
      %v3227 = vsub.f32 %v3153, %v3207
      %v3228 = vsub.f32 %v3158, %v3210
      %v3229 = vsub.f32 %v3163, %v3213
      %v3230 = vmul.f32 %v3214, 1.442695
      %v3231 = vpow.pop %v3230
      %v3232 = vmul.f32 %v3215, 1.442695
      %v3233 = vpow.pop %v3232
      %v3234 = vmul.f32 %v3216, 1.442695
      %v3235 = vpow.pop %v3234
      %v3236 = vmul.f32 %v3217, 1.442695
      %v3237 = vpow.pop %v3236
      %v3238 = vmul.f32 %v3218, 1.442695
      %v3239 = vpow.pop %v3238
      %v3240 = vmul.f32 %v3219, 1.442695
      %v3241 = vpow.pop %v3240
      %v3242 = vmul.f32 %v3220, 1.442695
      %v3243 = vpow.pop %v3242
      %v3244 = vmul.f32 %v3221, 1.442695
      %v3245 = vpow.pop %v3244
      %v3246 = vmul.f32 %v3222, 1.442695
      %v3247 = vpow.pop %v3246
      %v3248 = vmul.f32 %v3223, 1.442695
      %v3249 = vpow.pop %v3248
      %v3250 = vmul.f32 %v3224, 1.442695
      %v3251 = vpow.pop %v3250
      %v3252 = vmul.f32 %v3225, 1.442695
      %v3253 = vpow.pop %v3252
      %v3254 = vmul.f32 %v3226, 1.442695
      %v3255 = vpow.pop %v3254
      %v3256 = vmul.f32 %v3227, 1.442695
      %v3257 = vpow.pop %v3256
      %v3258 = vmul.f32 %v3228, 1.442695
      %v3259 = vpow.pop %v3258
      %v3260 = vmul.f32 %v3229, 1.442695
      %v3261 = vpow.pop %v3260
      %v3262 = vsel %vm1008, %v3231, 0.0
      %3263 = vadd.xlane.f32.xlu0 %v3262
      %v3264 = vpop.xlane.xlu0 %3263
      %v3265 = vsel %vm1008, %v3233, 0.0
      %3266 = vadd.xlane.f32.xlu0 %v3265
      %v3267 = vpop.xlane.xlu0 %3266
      %v3268 = vsel %vm1008, %v3235, 0.0
      %3269 = vadd.xlane.f32.xlu0 %v3268
      %v3270 = vpop.xlane.xlu0 %3269
      %v3271 = vsel %vm1008, %v3237, 0.0
      %3272 = vadd.xlane.f32.xlu0 %v3271
      %v3273 = vpop.xlane.xlu0 %3272
      %v3274 = vsel %vm1008, %v3239, 0.0
      %3275 = vadd.xlane.f32.xlu0 %v3274
      %v3276 = vpop.xlane.xlu0 %3275
      %v3277 = vsel %vm1008, %v3241, 0.0
      %3278 = vadd.xlane.f32.xlu0 %v3277
      %v3279 = vpop.xlane.xlu0 %3278
      %v3280 = vsel %vm1008, %v3243, 0.0
      %3281 = vadd.xlane.f32.xlu0 %v3280
      %v3282 = vpop.xlane.xlu0 %3281
      %v3283 = vsel %vm1008, %v3245, 0.0
      %3284 = vadd.xlane.f32.xlu0 %v3283
      %v3285 = vpop.xlane.xlu0 %3284
      %v3286 = vsel %vm1008, %v3247, 0.0
      %3287 = vadd.xlane.f32.xlu0 %v3286
      %v3288 = vpop.xlane.xlu0 %3287
      %v3289 = vsel %vm1008, %v3249, 0.0
      %3290 = vadd.xlane.f32.xlu0 %v3289
      %v3291 = vpop.xlane.xlu0 %3290
      %v3292 = vsel %vm1008, %v3251, 0.0
      %3293 = vadd.xlane.f32.xlu0 %v3292
      %v3294 = vpop.xlane.xlu0 %3293
      %v3295 = vsel %vm1008, %v3253, 0.0
      %3296 = vadd.xlane.f32.xlu0 %v3295
      %v3297 = vpop.xlane.xlu0 %3296
      %v3298 = vsel %vm1008, %v3255, 0.0
      %3299 = vadd.xlane.f32.xlu0 %v3298
      %v3300 = vpop.xlane.xlu0 %3299
      %v3301 = vsel %vm1008, %v3257, 0.0
      %3302 = vadd.xlane.f32.xlu0 %v3301
      %v3303 = vpop.xlane.xlu0 %3302
      %v3304 = vsel %vm1008, %v3259, 0.0
      %3305 = vadd.xlane.f32.xlu0 %v3304
      %v3306 = vpop.xlane.xlu0 %3305
      %v3307 = vsel %vm1008, %v3261, 0.0
      %3308 = vadd.xlane.f32.xlu0 %v3307
      %v3309 = vpop.xlane.xlu0 %3308
      %v3310 = vrcp.pop %v3264
      %v3311 = vrcp.pop %v3267
      %v3312 = vrcp.pop %v3270
      %v3313 = vrcp.pop %v3273
      %v3314 = vrcp.pop %v3276
      %v3315 = vrcp.pop %v3279
      %v3316 = vrcp.pop %v3282
      %v3317 = vrcp.pop %v3285
      %v3318 = vrcp.pop %v3288
      %v3319 = vrcp.pop %v3291
      %v3320 = vrcp.pop %v3294
      %v3321 = vrcp.pop %v3297
      %v3322 = vrcp.pop %v3300
      %v3323 = vrcp.pop %v3303
      %v3324 = vrcp.pop %v3306
      %v3325 = vrcp.pop %v3309
      %v3326 = vmul.f32 %v3231, %v3310
      %v3327 = vmul.f32 %v3233, %v3311
      %v3328 = vmul.f32 %v3235, %v3312
      %v3329 = vmul.f32 %v3237, %v3313
      %v3330 = vmul.f32 %v3239, %v3314
      %v3331 = vmul.f32 %v3241, %v3315
      %v3332 = vmul.f32 %v3243, %v3316
      %v3333 = vmul.f32 %v3245, %v3317
      %v3334 = vmul.f32 %v3247, %v3318
      %v3335 = vmul.f32 %v3249, %v3319
      %v3336 = vmul.f32 %v3251, %v3320
      %v3337 = vmul.f32 %v3253, %v3321
      %v3338 = vmul.f32 %v3255, %v3322
      %v3339 = vmul.f32 %v3257, %v3323
      %v3340 = vmul.f32 %v3259, %v3324
      %v3341 = vmul.f32 %v3261, %v3325
      %3342 = vst.msk [vmem:[%s487] sm:$0xff] %vm1008, %v3326
      %3343 = vst.msk [vmem:[%s487 + $0x8] sm:$0xff] %vm1008, %v3327
      %3344 = vst.msk [vmem:[%s487 + $0x10] sm:$0xff] %vm1008, %v3328
      %3345 = vst.msk [vmem:[%s487 + $0x18] sm:$0xff] %vm1008, %v3329
      %3346 = vst.msk [vmem:[%s487 + $0x20] sm:$0xff] %vm1008, %v3330
      %3347 = vst.msk [vmem:[%s487 + $0x28] sm:$0xff] %vm1008, %v3331
      %3348 = vst.msk [vmem:[%s487 + $0x30] sm:$0xff] %vm1008, %v3332
      %3349 = vst.msk [vmem:[%s487 + $0x38] sm:$0xff] %vm1008, %v3333
      %3350 = vst.msk [vmem:[%s487 + $0x40] sm:$0xff] %vm1008, %v3334
      %3351 = vst.msk [vmem:[%s487 + $0x48] sm:$0xff] %vm1008, %v3335
      %3352 = vst.msk [vmem:[%s487 + $0x50] sm:$0xff] %vm1008, %v3336
      %3353 = vst.msk [vmem:[%s487 + $0x58] sm:$0xff] %vm1008, %v3337
      %3354 = vst.msk [vmem:[%s487 + $0x60] sm:$0xff] %vm1008, %v3338
      %3355 = vst.msk [vmem:[%s487 + $0x68] sm:$0xff] %vm1008, %v3339
      %3356 = vst.msk [vmem:[%s487 + $0x70] sm:$0xff] %vm1008, %v3340
      %3357 = vst.msk [vmem:[%s487 + $0x78] sm:$0xff] %vm1008, %v3341
      %v3359 = vsel %vm1008, %v3326, 0
      %v3362 = vsel %vm1008, %v3327, 0
      %v3365 = vsel %vm1008, %v3328, 0
      %v3368 = vsel %vm1008, %v3329, 0
      %3370 = vmatprep.subr.mxu0 0.0
      %3371 = vmatpush1.msra.mxu0 0.0
      %3372 = vmatprep.subr.mxu0 0.0
      %3373 = vmatpush1.msra.mxu0 0.0
      %3374 = vmatprep.subr.mxu0 0.0
      %3375 = vmatpush1.msra.mxu0 0.0
      %3376 = vmatprep.subr.mxu0 0.0
      %3377 = vmatpush1.msra.mxu0 0.0
      %3378 = vmatprep.subr.mxu0 0.0
      %3379 = vmatpush1.msra.mxu0 0.0
      %3380 = vmatprep.subr.mxu0 0.0
      %3381 = vmatpush1.msra.mxu0 0.0
      %3382 = vmatprep.subr.mxu0 0.0
      %3383 = vmatpush1.msra.mxu0 0.0
      %3384 = vmatprep.subr.mxu0 0.0
      %3385 = vmatpush1.msra.mxu0 0.0
      %3386 = vmatprep.subr.mxu0 0.0
      %3387 = vmatpush1.msra.mxu0 0.0
      %3388 = vmatprep.subr.mxu0 0.0
      %3389 = vmatpush1.msra.mxu0 0.0
      %3390 = vmatprep.subr.mxu0 0.0
      %3391 = vmatpush1.msra.mxu0 0.0
      %3392 = vmatprep.subr.mxu0 0.0
      %3393 = vmatpush1.msra.mxu0 0.0
      %3394 = vmatprep.subr.mxu0 0.0
      %3395 = vmatpush1.msra.mxu0 %v1003
      %3396 = vmatprep.subr.mxu0 0.0
      %3397 = vmatpush1.msra.mxu0 %v1001
      %3398 = vmatprep.subr.mxu0 0.0
      %3399 = vmatpush1.msra.mxu0 %v999
      %3400 = vmatprep.subr.mxu0 0.0
      %3401 = vmatpush1.msra.mxu0 %v997
      %3402 = vmatprep.subr.mxu0 0.0
      %3403 = vmatpush2.msra.mxu0 0.0
      %3404 = vmatprep.subr.mxu0 0.0
      %3405 = vmatpush2.msra.mxu0 0.0
      %3406 = vmatprep.subr.mxu0 0.0
      %3407 = vmatpush2.msra.mxu0 0.0
      %3408 = vmatprep.subr.mxu0 0.0
      %3409 = vmatpush2.msra.mxu0 0.0
      %3410 = vmatprep.subr.mxu0 0.0
      %3411 = vmatpush2.msra.mxu0 0.0
      %3412 = vmatprep.subr.mxu0 0.0
      %3413 = vmatpush2.msra.mxu0 0.0
      %3414 = vmatprep.subr.mxu0 0.0
      %3415 = vmatpush2.msra.mxu0 0.0
      %3416 = vmatprep.subr.mxu0 0.0
      %3417 = vmatpush2.msra.mxu0 0.0
      %3418 = vmatprep.subr.mxu0 0.0
      %3419 = vmatpush2.msra.mxu0 0.0
      %3420 = vmatprep.subr.mxu0 0.0
      %3421 = vmatpush2.msra.mxu0 0.0
      %3422 = vmatprep.subr.mxu0 0.0
      %3423 = vmatpush2.msra.mxu0 0.0
      %3424 = vmatprep.subr.mxu0 0.0
      %3425 = vmatpush2.msra.mxu0 0.0
      %3426 = vmatprep.subr.mxu0 0.0
      %3427 = vmatpush2.msra.mxu0 0.0
      %3428 = vmatprep.subr.mxu0 0.0
      %3429 = vmatpush2.msra.mxu0 0.0
      %3430 = vmatprep.subr.mxu0 0.0
      %3431 = vmatpush2.msra.mxu0 0.0
      %3432 = vmatprep.subr.mxu0 0.0
      %3433 = vmatpush2.msra.mxu0 0.0
      %3434 = vmatprep.mubr.f32.mxu0 0.0
      %3435 = vmatmul.mubr.f32.gmra.mxu0 %v3359
      %v3436 = vpop.f32.mrf.mxu0
      %v3437 = vadd.f32 0.0, %v3436
      %v3438 = vpop.f32.mrf.mxu0
      %3439 = vmatprep.mubr.f32.mxu0 0.0
      %3440 = vmatmul.mubr.f32.gmra.mxu0 %v3362
      %v3441 = vpop.f32.mrf.mxu0
      %v3442 = vadd.f32 0.0, %v3441
      %v3443 = vpop.f32.mrf.mxu0
      %3444 = vmatprep.mubr.f32.mxu0 0.0
      %3445 = vmatmul.mubr.f32.gmra.mxu0 %v3365
      %v3446 = vpop.f32.mrf.mxu0
      %v3447 = vadd.f32 0.0, %v3446
      %v3448 = vpop.f32.mrf.mxu0
      %3449 = vmatprep.mubr.f32.mxu0 0.0
      %3450 = vmatmul.mubr.f32.gmra.mxu0 %v3368
      %v3451 = vpop.f32.mrf.mxu0
      %v3452 = vadd.f32 0.0, %v3451
      %v3453 = vpop.f32.mrf.mxu0
      %3454 = vdwg.mxu0
      %v3456 = vsel %vm1008, %v3330, 0
      %v3459 = vsel %vm1008, %v3331, 0
      %v3462 = vsel %vm1008, %v3332, 0
      %v3465 = vsel %vm1008, %v3333, 0
      %3467 = vmatprep.subr.mxu0 0.0
      %3468 = vmatpush1.msra.mxu0 0.0
      %3469 = vmatprep.subr.mxu0 0.0
      %3470 = vmatpush1.msra.mxu0 0.0
      %3471 = vmatprep.subr.mxu0 0.0
      %3472 = vmatpush1.msra.mxu0 0.0
      %3473 = vmatprep.subr.mxu0 0.0
      %3474 = vmatpush1.msra.mxu0 0.0
      %3475 = vmatprep.subr.mxu0 0.0
      %3476 = vmatpush1.msra.mxu0 0.0
      %3477 = vmatprep.subr.mxu0 0.0
      %3478 = vmatpush1.msra.mxu0 0.0
      %3479 = vmatprep.subr.mxu0 0.0
      %3480 = vmatpush1.msra.mxu0 0.0
      %3481 = vmatprep.subr.mxu0 0.0
      %3482 = vmatpush1.msra.mxu0 0.0
      %3483 = vmatprep.subr.mxu0 0.0
      %3484 = vmatpush1.msra.mxu0 0.0
      %3485 = vmatprep.subr.mxu0 0.0
      %3486 = vmatpush1.msra.mxu0 0.0
      %3487 = vmatprep.subr.mxu0 0.0
      %3488 = vmatpush1.msra.mxu0 0.0
      %3489 = vmatprep.subr.mxu0 0.0
      %3490 = vmatpush1.msra.mxu0 0.0
      %3491 = vmatprep.subr.mxu0 0.0
      %3492 = vmatpush1.msra.mxu0 %v1373
      %3493 = vmatprep.subr.mxu0 0.0
      %3494 = vmatpush1.msra.mxu0 %v1371
      %3495 = vmatprep.subr.mxu0 0.0
      %3496 = vmatpush1.msra.mxu0 %v1369
      %3497 = vmatprep.subr.mxu0 0.0
      %3498 = vmatpush1.msra.mxu0 %v1367
      %3499 = vmatprep.subr.mxu0 0.0
      %3500 = vmatpush2.msra.mxu0 0.0
      %3501 = vmatprep.subr.mxu0 0.0
      %3502 = vmatpush2.msra.mxu0 0.0
      %3503 = vmatprep.subr.mxu0 0.0
      %3504 = vmatpush2.msra.mxu0 0.0
      %3505 = vmatprep.subr.mxu0 0.0
      %3506 = vmatpush2.msra.mxu0 0.0
      %3507 = vmatprep.subr.mxu0 0.0
      %3508 = vmatpush2.msra.mxu0 0.0
      %3509 = vmatprep.subr.mxu0 0.0
      %3510 = vmatpush2.msra.mxu0 0.0
      %3511 = vmatprep.subr.mxu0 0.0
      %3512 = vmatpush2.msra.mxu0 0.0
      %3513 = vmatprep.subr.mxu0 0.0
      %3514 = vmatpush2.msra.mxu0 0.0
      %3515 = vmatprep.subr.mxu0 0.0
      %3516 = vmatpush2.msra.mxu0 0.0
      %3517 = vmatprep.subr.mxu0 0.0
      %3518 = vmatpush2.msra.mxu0 0.0
      %3519 = vmatprep.subr.mxu0 0.0
      %3520 = vmatpush2.msra.mxu0 0.0
      %3521 = vmatprep.subr.mxu0 0.0
      %3522 = vmatpush2.msra.mxu0 0.0
      %3523 = vmatprep.subr.mxu0 0.0
      %3524 = vmatpush2.msra.mxu0 0.0
      %3525 = vmatprep.subr.mxu0 0.0
      %3526 = vmatpush2.msra.mxu0 0.0
      %3527 = vmatprep.subr.mxu0 0.0
      %3528 = vmatpush2.msra.mxu0 0.0
      %3529 = vmatprep.subr.mxu0 0.0
      %3530 = vmatpush2.msra.mxu0 0.0
      %3531 = vmatprep.mubr.f32.mxu0 0.0
      %3532 = vmatmul.mubr.f32.gmra.mxu0 %v3456
      %v3533 = vpop.f32.mrf.mxu0
      %v3534 = vadd.f32 0.0, %v3533
      %v3535 = vpop.f32.mrf.mxu0
      %3536 = vmatprep.mubr.f32.mxu0 0.0
      %3537 = vmatmul.mubr.f32.gmra.mxu0 %v3459
      %v3538 = vpop.f32.mrf.mxu0
      %v3539 = vadd.f32 0.0, %v3538
      %v3540 = vpop.f32.mrf.mxu0
      %3541 = vmatprep.mubr.f32.mxu0 0.0
      %3542 = vmatmul.mubr.f32.gmra.mxu0 %v3462
      %v3543 = vpop.f32.mrf.mxu0
      %v3544 = vadd.f32 0.0, %v3543
      %v3545 = vpop.f32.mrf.mxu0
      %3546 = vmatprep.mubr.f32.mxu0 0.0
      %3547 = vmatmul.mubr.f32.gmra.mxu0 %v3465
      %v3548 = vpop.f32.mrf.mxu0
      %v3549 = vadd.f32 0.0, %v3548
      %v3550 = vpop.f32.mrf.mxu0
      %3551 = vdwg.mxu0
      %v3553 = vsel %vm1008, %v3334, 0
      %v3556 = vsel %vm1008, %v3335, 0
      %v3559 = vsel %vm1008, %v3336, 0
      %v3562 = vsel %vm1008, %v3337, 0
      %3564 = vmatprep.subr.mxu0 0.0
      %3565 = vmatpush1.msra.mxu0 0.0
      %3566 = vmatprep.subr.mxu0 0.0
      %3567 = vmatpush1.msra.mxu0 0.0
      %3568 = vmatprep.subr.mxu0 0.0
      %3569 = vmatpush1.msra.mxu0 0.0
      %3570 = vmatprep.subr.mxu0 0.0
      %3571 = vmatpush1.msra.mxu0 0.0
      %3572 = vmatprep.subr.mxu0 0.0
      %3573 = vmatpush1.msra.mxu0 0.0
      %3574 = vmatprep.subr.mxu0 0.0
      %3575 = vmatpush1.msra.mxu0 0.0
      %3576 = vmatprep.subr.mxu0 0.0
      %3577 = vmatpush1.msra.mxu0 0.0
      %3578 = vmatprep.subr.mxu0 0.0
      %3579 = vmatpush1.msra.mxu0 0.0
      %3580 = vmatprep.subr.mxu0 0.0
      %3581 = vmatpush1.msra.mxu0 0.0
      %3582 = vmatprep.subr.mxu0 0.0
      %3583 = vmatpush1.msra.mxu0 0.0
      %3584 = vmatprep.subr.mxu0 0.0
      %3585 = vmatpush1.msra.mxu0 0.0
      %3586 = vmatprep.subr.mxu0 0.0
      %3587 = vmatpush1.msra.mxu0 0.0
      %3588 = vmatprep.subr.mxu0 0.0
      %3589 = vmatpush1.msra.mxu0 %v1634
      %3590 = vmatprep.subr.mxu0 0.0
      %3591 = vmatpush1.msra.mxu0 %v1632
      %3592 = vmatprep.subr.mxu0 0.0
      %3593 = vmatpush1.msra.mxu0 %v1630
      %3594 = vmatprep.subr.mxu0 0.0
      %3595 = vmatpush1.msra.mxu0 %v1628
      %3596 = vmatprep.subr.mxu0 0.0
      %3597 = vmatpush2.msra.mxu0 0.0
      %3598 = vmatprep.subr.mxu0 0.0
      %3599 = vmatpush2.msra.mxu0 0.0
      %3600 = vmatprep.subr.mxu0 0.0
      %3601 = vmatpush2.msra.mxu0 0.0
      %3602 = vmatprep.subr.mxu0 0.0
      %3603 = vmatpush2.msra.mxu0 0.0
      %3604 = vmatprep.subr.mxu0 0.0
      %3605 = vmatpush2.msra.mxu0 0.0
      %3606 = vmatprep.subr.mxu0 0.0
      %3607 = vmatpush2.msra.mxu0 0.0
      %3608 = vmatprep.subr.mxu0 0.0
      %3609 = vmatpush2.msra.mxu0 0.0
      %3610 = vmatprep.subr.mxu0 0.0
      %3611 = vmatpush2.msra.mxu0 0.0
      %3612 = vmatprep.subr.mxu0 0.0
      %3613 = vmatpush2.msra.mxu0 0.0
      %3614 = vmatprep.subr.mxu0 0.0
      %3615 = vmatpush2.msra.mxu0 0.0
      %3616 = vmatprep.subr.mxu0 0.0
      %3617 = vmatpush2.msra.mxu0 0.0
      %3618 = vmatprep.subr.mxu0 0.0
      %3619 = vmatpush2.msra.mxu0 0.0
      %3620 = vmatprep.subr.mxu0 0.0
      %3621 = vmatpush2.msra.mxu0 0.0
      %3622 = vmatprep.subr.mxu0 0.0
      %3623 = vmatpush2.msra.mxu0 0.0
      %3624 = vmatprep.subr.mxu0 0.0
      %3625 = vmatpush2.msra.mxu0 0.0
      %3626 = vmatprep.subr.mxu0 0.0
      %3627 = vmatpush2.msra.mxu0 0.0
      %3628 = vmatprep.mubr.f32.mxu0 0.0
      %3629 = vmatmul.mubr.f32.gmra.mxu0 %v3553
      %v3630 = vpop.f32.mrf.mxu0
      %v3631 = vadd.f32 0.0, %v3630
      %v3632 = vpop.f32.mrf.mxu0
      %3633 = vmatprep.mubr.f32.mxu0 0.0
      %3634 = vmatmul.mubr.f32.gmra.mxu0 %v3556
      %v3635 = vpop.f32.mrf.mxu0
      %v3636 = vadd.f32 0.0, %v3635
      %v3637 = vpop.f32.mrf.mxu0
      %3638 = vmatprep.mubr.f32.mxu0 0.0
      %3639 = vmatmul.mubr.f32.gmra.mxu0 %v3559
      %v3640 = vpop.f32.mrf.mxu0
      %v3641 = vadd.f32 0.0, %v3640
      %v3642 = vpop.f32.mrf.mxu0
      %3643 = vmatprep.mubr.f32.mxu0 0.0
      %3644 = vmatmul.mubr.f32.gmra.mxu0 %v3562
      %v3645 = vpop.f32.mrf.mxu0
      %v3646 = vadd.f32 0.0, %v3645
      %v3647 = vpop.f32.mrf.mxu0
      %3648 = vdwg.mxu0
      %v3650 = vsel %vm1008, %v3338, 0
      %v3653 = vsel %vm1008, %v3339, 0
      %v3656 = vsel %vm1008, %v3340, 0
      %v3659 = vsel %vm1008, %v3341, 0
      %3661 = vmatprep.subr.mxu0 0.0
      %3662 = vmatpush1.msra.mxu0 0.0
      %3663 = vmatprep.subr.mxu0 0.0
      %3664 = vmatpush1.msra.mxu0 0.0
      %3665 = vmatprep.subr.mxu0 0.0
      %3666 = vmatpush1.msra.mxu0 0.0
      %3667 = vmatprep.subr.mxu0 0.0
      %3668 = vmatpush1.msra.mxu0 0.0
      %3669 = vmatprep.subr.mxu0 0.0
      %3670 = vmatpush1.msra.mxu0 0.0
      %3671 = vmatprep.subr.mxu0 0.0
      %3672 = vmatpush1.msra.mxu0 0.0
      %3673 = vmatprep.subr.mxu0 0.0
      %3674 = vmatpush1.msra.mxu0 0.0
      %3675 = vmatprep.subr.mxu0 0.0
      %3676 = vmatpush1.msra.mxu0 0.0
      %3677 = vmatprep.subr.mxu0 0.0
      %3678 = vmatpush1.msra.mxu0 0.0
      %3679 = vmatprep.subr.mxu0 0.0
      %3680 = vmatpush1.msra.mxu0 0.0
      %3681 = vmatprep.subr.mxu0 0.0
      %3682 = vmatpush1.msra.mxu0 0.0
      %3683 = vmatprep.subr.mxu0 0.0
      %3684 = vmatpush1.msra.mxu0 0.0
      %3685 = vmatprep.subr.mxu0 0.0
      %3686 = vmatpush1.msra.mxu0 %v1895
      %3687 = vmatprep.subr.mxu0 0.0
      %3688 = vmatpush1.msra.mxu0 %v1893
      %3689 = vmatprep.subr.mxu0 0.0
      %3690 = vmatpush1.msra.mxu0 %v1891
      %3691 = vmatprep.subr.mxu0 0.0
      %3692 = vmatpush1.msra.mxu0 %v1889
      %3693 = vmatprep.subr.mxu0 0.0
      %3694 = vmatpush2.msra.mxu0 0.0
      %3695 = vmatprep.subr.mxu0 0.0
      %3696 = vmatpush2.msra.mxu0 0.0
      %3697 = vmatprep.subr.mxu0 0.0
      %3698 = vmatpush2.msra.mxu0 0.0
      %3699 = vmatprep.subr.mxu0 0.0
      %3700 = vmatpush2.msra.mxu0 0.0
      %3701 = vmatprep.subr.mxu0 0.0
      %3702 = vmatpush2.msra.mxu0 0.0
      %3703 = vmatprep.subr.mxu0 0.0
      %3704 = vmatpush2.msra.mxu0 0.0
      %3705 = vmatprep.subr.mxu0 0.0
      %3706 = vmatpush2.msra.mxu0 0.0
      %3707 = vmatprep.subr.mxu0 0.0
      %3708 = vmatpush2.msra.mxu0 0.0
      %3709 = vmatprep.subr.mxu0 0.0
      %3710 = vmatpush2.msra.mxu0 0.0
      %3711 = vmatprep.subr.mxu0 0.0
      %3712 = vmatpush2.msra.mxu0 0.0
      %3713 = vmatprep.subr.mxu0 0.0
      %3714 = vmatpush2.msra.mxu0 0.0
      %3715 = vmatprep.subr.mxu0 0.0
      %3716 = vmatpush2.msra.mxu0 0.0
      %3717 = vmatprep.subr.mxu0 0.0
      %3718 = vmatpush2.msra.mxu0 0.0
      %3719 = vmatprep.subr.mxu0 0.0
      %3720 = vmatpush2.msra.mxu0 0.0
      %3721 = vmatprep.subr.mxu0 0.0
      %3722 = vmatpush2.msra.mxu0 0.0
      %3723 = vmatprep.subr.mxu0 0.0
      %3724 = vmatpush2.msra.mxu0 0.0
      %3725 = vmatprep.mubr.f32.mxu0 0.0
      %3726 = vmatmul.mubr.f32.gmra.mxu0 %v3650
      %v3727 = vpop.f32.mrf.mxu0
      %v3728 = vadd.f32 0.0, %v3727
      %v3729 = vpop.f32.mrf.mxu0
      %3730 = vmatprep.mubr.f32.mxu0 0.0
      %3731 = vmatmul.mubr.f32.gmra.mxu0 %v3653
      %v3732 = vpop.f32.mrf.mxu0
      %v3733 = vadd.f32 0.0, %v3732
      %v3734 = vpop.f32.mrf.mxu0
      %3735 = vmatprep.mubr.f32.mxu0 0.0
      %3736 = vmatmul.mubr.f32.gmra.mxu0 %v3656
      %v3737 = vpop.f32.mrf.mxu0
      %v3738 = vadd.f32 0.0, %v3737
      %v3739 = vpop.f32.mrf.mxu0
      %3740 = vmatprep.mubr.f32.mxu0 0.0
      %3741 = vmatmul.mubr.f32.gmra.mxu0 %v3659
      %v3742 = vpop.f32.mrf.mxu0
      %v3743 = vadd.f32 0.0, %v3742
      %v3744 = vpop.f32.mrf.mxu0
      %3745 = vdwg.mxu0
      %3746 = vrot.lane.b32.xlu0 %v2697, 124
      %v3747 = vpop.permute.xlu0 %3746
      %3748 = vrot.lane.b32.xlu0 %v2698, 124
      %v3749 = vpop.permute.xlu0 %3748
      %3750 = vrot.lane.b32.xlu0 %v2699, 124
      %v3751 = vpop.permute.xlu0 %3750
      %3752 = vrot.lane.b32.xlu0 %v2700, 124
      %v3753 = vpop.permute.xlu0 %3752
      %3754 = vrot.lane.b32.xlu0 %v878, 116
      %v3755 = vpop.permute.xlu0 %3754
      %3756 = vrot.lane.b32.xlu0 %v883, 116
      %v3757 = vpop.permute.xlu0 %3756
      %3758 = vrot.lane.b32.xlu0 %v888, 116
      %v3759 = vpop.permute.xlu0 %3758
      %3760 = vrot.lane.b32.xlu0 %v893, 116
      %v3761 = vpop.permute.xlu0 %3760
      %v3762 = vsel %vm2721, %v3747, 0
      %v3764 = vsel %vm2721, %v3749, 0
      %v3766 = vsel %vm2721, %v3751, 0
      %v3768 = vsel %vm2721, %v3753, 0
      %v3770 = vsel %vm2721, %v3755, 0
      %v3772 = vsel %vm2721, %v3757, 0
      %v3774 = vsel %vm2721, %v3759, 0
      %v3776 = vsel %vm2721, %v3761, 0
      %3778 = vmatprep.subr.mxu0 0.0
      %3779 = vmatpush1.xpose.msra.mxu0 0.0
      %3780 = vmatprep.subr.mxu0 0.0
      %3781 = vmatpush1.xpose.msra.mxu0 0.0
      %3782 = vmatprep.subr.mxu0 0.0
      %3783 = vmatpush1.xpose.msra.mxu0 0.0
      %3784 = vmatprep.subr.mxu0 0.0
      %3785 = vmatpush1.xpose.msra.mxu0 0.0
      %3786 = vmatprep.subr.mxu0 0.0
      %3787 = vmatpush1.xpose.msra.mxu0 0.0
      %3788 = vmatprep.subr.mxu0 0.0
      %3789 = vmatpush1.xpose.msra.mxu0 0.0
      %3790 = vmatprep.subr.mxu0 0.0
      %3791 = vmatpush1.xpose.msra.mxu0 0.0
      %3792 = vmatprep.subr.mxu0 0.0
      %3793 = vmatpush1.xpose.msra.mxu0 0.0
      %3794 = vmatprep.subr.mxu0 0.0
      %3795 = vmatpush1.xpose.msra.mxu0 0.0
      %3796 = vmatprep.subr.mxu0 0.0
      %3797 = vmatpush1.xpose.msra.mxu0 0.0
      %3798 = vmatprep.subr.mxu0 0.0
      %3799 = vmatpush1.xpose.msra.mxu0 0.0
      %3800 = vmatprep.subr.mxu0 0.0
      %3801 = vmatpush1.xpose.msra.mxu0 0.0
      %3802 = vmatprep.subr.mxu0 0.0
      %3803 = vmatpush1.xpose.msra.mxu0 %v3776
      %3804 = vmatprep.subr.mxu0 0.0
      %3805 = vmatpush1.xpose.msra.mxu0 %v3774
      %3806 = vmatprep.subr.mxu0 0.0
      %3807 = vmatpush1.xpose.msra.mxu0 %v3772
      %3808 = vmatprep.subr.mxu0 0.0
      %3809 = vmatpush1.xpose.msra.mxu0 %v3770
      %3810 = vmatprep.subr.mxu0 0.0
      %3811 = vmatpush2.xpose.msra.mxu0 0.0
      %3812 = vmatprep.subr.mxu0 0.0
      %3813 = vmatpush2.xpose.msra.mxu0 0.0
      %3814 = vmatprep.subr.mxu0 0.0
      %3815 = vmatpush2.xpose.msra.mxu0 0.0
      %3816 = vmatprep.subr.mxu0 0.0
      %3817 = vmatpush2.xpose.msra.mxu0 0.0
      %3818 = vmatprep.subr.mxu0 0.0
      %3819 = vmatpush2.xpose.msra.mxu0 0.0
      %3820 = vmatprep.subr.mxu0 0.0
      %3821 = vmatpush2.xpose.msra.mxu0 0.0
      %3822 = vmatprep.subr.mxu0 0.0
      %3823 = vmatpush2.xpose.msra.mxu0 0.0
      %3824 = vmatprep.subr.mxu0 0.0
      %3825 = vmatpush2.xpose.msra.mxu0 0.0
      %3826 = vmatprep.subr.mxu0 0.0
      %3827 = vmatpush2.xpose.msra.mxu0 0.0
      %3828 = vmatprep.subr.mxu0 0.0
      %3829 = vmatpush2.xpose.msra.mxu0 0.0
      %3830 = vmatprep.subr.mxu0 0.0
      %3831 = vmatpush2.xpose.msra.mxu0 0.0
      %3832 = vmatprep.subr.mxu0 0.0
      %3833 = vmatpush2.xpose.msra.mxu0 0.0
      %3834 = vmatprep.subr.mxu0 0.0
      %3835 = vmatpush2.xpose.msra.mxu0 0.0
      %3836 = vmatprep.subr.mxu0 0.0
      %3837 = vmatpush2.xpose.msra.mxu0 0.0
      %3838 = vmatprep.subr.mxu0 0.0
      %3839 = vmatpush2.xpose.msra.mxu0 0.0
      %3840 = vmatprep.subr.mxu0 0.0
      %3841 = vmatpush2.xpose.msra.mxu0 0.0
      %3842 = vmatprep.mubr.f32.mxu0 0.0
      %3843 = vmatmul.mubr.f32.gmra.mxu0 %v3762
      %v3844 = vpop.f32.mrf.mxu0
      %v3845 = vadd.f32 0.0, %v3844
      %v3846 = vpop.f32.mrf.mxu0
      %3847 = vmatprep.mubr.f32.mxu0 0.0
      %3848 = vmatmul.mubr.f32.gmra.mxu0 %v3764
      %v3849 = vpop.f32.mrf.mxu0
      %v3850 = vadd.f32 0.0, %v3849
      %v3851 = vpop.f32.mrf.mxu0
      %3852 = vmatprep.mubr.f32.mxu0 0.0
      %3853 = vmatmul.mubr.f32.gmra.mxu0 %v3766
      %v3854 = vpop.f32.mrf.mxu0
      %v3855 = vadd.f32 0.0, %v3854
      %v3856 = vpop.f32.mrf.mxu0
      %3857 = vmatprep.mubr.f32.mxu0 0.0
      %3858 = vmatmul.mubr.f32.gmra.mxu0 %v3768
      %v3859 = vpop.f32.mrf.mxu0
      %v3860 = vadd.f32 0.0, %v3859
      %v3861 = vpop.f32.mrf.mxu0
      %3862 = vdwg.mxu0
      %3863 = vrot.lane.b32.xlu0 %v2701, 124
      %v3864 = vpop.permute.xlu0 %3863
      %3865 = vrot.lane.b32.xlu0 %v2702, 124
      %v3866 = vpop.permute.xlu0 %3865
      %3867 = vrot.lane.b32.xlu0 %v2703, 124
      %v3868 = vpop.permute.xlu0 %3867
      %3869 = vrot.lane.b32.xlu0 %v2704, 124
      %v3870 = vpop.permute.xlu0 %3869
      %3871 = vrot.lane.b32.xlu0 %v898, 116
      %v3872 = vpop.permute.xlu0 %3871
      %3873 = vrot.lane.b32.xlu0 %v903, 116
      %v3874 = vpop.permute.xlu0 %3873
      %3875 = vrot.lane.b32.xlu0 %v908, 116
      %v3876 = vpop.permute.xlu0 %3875
      %3877 = vrot.lane.b32.xlu0 %v913, 116
      %v3878 = vpop.permute.xlu0 %3877
      %v3879 = vsel %vm2721, %v3864, 0
      %v3881 = vsel %vm2721, %v3866, 0
      %v3883 = vsel %vm2721, %v3868, 0
      %v3885 = vsel %vm2721, %v3870, 0
      %v3887 = vsel %vm2721, %v3872, 0
      %v3889 = vsel %vm2721, %v3874, 0
      %v3891 = vsel %vm2721, %v3876, 0
      %v3893 = vsel %vm2721, %v3878, 0
      %3895 = vmatprep.subr.mxu0 0.0
      %3896 = vmatpush1.xpose.msra.mxu0 0.0
      %3897 = vmatprep.subr.mxu0 0.0
      %3898 = vmatpush1.xpose.msra.mxu0 0.0
      %3899 = vmatprep.subr.mxu0 0.0
      %3900 = vmatpush1.xpose.msra.mxu0 0.0
      %3901 = vmatprep.subr.mxu0 0.0
      %3902 = vmatpush1.xpose.msra.mxu0 0.0
      %3903 = vmatprep.subr.mxu0 0.0
      %3904 = vmatpush1.xpose.msra.mxu0 0.0
      %3905 = vmatprep.subr.mxu0 0.0
      %3906 = vmatpush1.xpose.msra.mxu0 0.0
      %3907 = vmatprep.subr.mxu0 0.0
      %3908 = vmatpush1.xpose.msra.mxu0 0.0
      %3909 = vmatprep.subr.mxu0 0.0
      %3910 = vmatpush1.xpose.msra.mxu0 0.0
      %3911 = vmatprep.subr.mxu0 0.0
      %3912 = vmatpush1.xpose.msra.mxu0 0.0
      %3913 = vmatprep.subr.mxu0 0.0
      %3914 = vmatpush1.xpose.msra.mxu0 0.0
      %3915 = vmatprep.subr.mxu0 0.0
      %3916 = vmatpush1.xpose.msra.mxu0 0.0
      %3917 = vmatprep.subr.mxu0 0.0
      %3918 = vmatpush1.xpose.msra.mxu0 0.0
      %3919 = vmatprep.subr.mxu0 0.0
      %3920 = vmatpush1.xpose.msra.mxu0 %v3893
      %3921 = vmatprep.subr.mxu0 0.0
      %3922 = vmatpush1.xpose.msra.mxu0 %v3891
      %3923 = vmatprep.subr.mxu0 0.0
      %3924 = vmatpush1.xpose.msra.mxu0 %v3889
      %3925 = vmatprep.subr.mxu0 0.0
      %3926 = vmatpush1.xpose.msra.mxu0 %v3887
      %3927 = vmatprep.subr.mxu0 0.0
      %3928 = vmatpush2.xpose.msra.mxu0 0.0
      %3929 = vmatprep.subr.mxu0 0.0
      %3930 = vmatpush2.xpose.msra.mxu0 0.0
      %3931 = vmatprep.subr.mxu0 0.0
      %3932 = vmatpush2.xpose.msra.mxu0 0.0
      %3933 = vmatprep.subr.mxu0 0.0
      %3934 = vmatpush2.xpose.msra.mxu0 0.0
      %3935 = vmatprep.subr.mxu0 0.0
      %3936 = vmatpush2.xpose.msra.mxu0 0.0
      %3937 = vmatprep.subr.mxu0 0.0
      %3938 = vmatpush2.xpose.msra.mxu0 0.0
      %3939 = vmatprep.subr.mxu0 0.0
      %3940 = vmatpush2.xpose.msra.mxu0 0.0
      %3941 = vmatprep.subr.mxu0 0.0
      %3942 = vmatpush2.xpose.msra.mxu0 0.0
      %3943 = vmatprep.subr.mxu0 0.0
      %3944 = vmatpush2.xpose.msra.mxu0 0.0
      %3945 = vmatprep.subr.mxu0 0.0
      %3946 = vmatpush2.xpose.msra.mxu0 0.0
      %3947 = vmatprep.subr.mxu0 0.0
      %3948 = vmatpush2.xpose.msra.mxu0 0.0
      %3949 = vmatprep.subr.mxu0 0.0
      %3950 = vmatpush2.xpose.msra.mxu0 0.0
      %3951 = vmatprep.subr.mxu0 0.0
      %3952 = vmatpush2.xpose.msra.mxu0 0.0
      %3953 = vmatprep.subr.mxu0 0.0
      %3954 = vmatpush2.xpose.msra.mxu0 0.0
      %3955 = vmatprep.subr.mxu0 0.0
      %3956 = vmatpush2.xpose.msra.mxu0 0.0
      %3957 = vmatprep.subr.mxu0 0.0
      %3958 = vmatpush2.xpose.msra.mxu0 0.0
      %3959 = vmatprep.mubr.f32.mxu0 0.0
      %3960 = vmatmul.mubr.f32.gmra.mxu0 %v3879
      %v3961 = vpop.f32.mrf.mxu0
      %v3962 = vadd.f32 0.0, %v3961
      %v3963 = vpop.f32.mrf.mxu0
      %3964 = vmatprep.mubr.f32.mxu0 0.0
      %3965 = vmatmul.mubr.f32.gmra.mxu0 %v3881
      %v3966 = vpop.f32.mrf.mxu0
      %v3967 = vadd.f32 0.0, %v3966
      %v3968 = vpop.f32.mrf.mxu0
      %3969 = vmatprep.mubr.f32.mxu0 0.0
      %3970 = vmatmul.mubr.f32.gmra.mxu0 %v3883
      %v3971 = vpop.f32.mrf.mxu0
      %v3972 = vadd.f32 0.0, %v3971
      %v3973 = vpop.f32.mrf.mxu0
      %3974 = vmatprep.mubr.f32.mxu0 0.0
      %3975 = vmatmul.mubr.f32.gmra.mxu0 %v3885
      %v3976 = vpop.f32.mrf.mxu0
      %v3977 = vadd.f32 0.0, %v3976
      %v3978 = vpop.f32.mrf.mxu0
      %3979 = vdwg.mxu0
      %3980 = vrot.lane.b32.xlu0 %v2705, 124
      %v3981 = vpop.permute.xlu0 %3980
      %3982 = vrot.lane.b32.xlu0 %v2706, 124
      %v3983 = vpop.permute.xlu0 %3982
      %3984 = vrot.lane.b32.xlu0 %v2707, 124
      %v3985 = vpop.permute.xlu0 %3984
      %3986 = vrot.lane.b32.xlu0 %v2708, 124
      %v3987 = vpop.permute.xlu0 %3986
      %3988 = vrot.lane.b32.xlu0 %v918, 116
      %v3989 = vpop.permute.xlu0 %3988
      %3990 = vrot.lane.b32.xlu0 %v923, 116
      %v3991 = vpop.permute.xlu0 %3990
      %3992 = vrot.lane.b32.xlu0 %v928, 116
      %v3993 = vpop.permute.xlu0 %3992
      %3994 = vrot.lane.b32.xlu0 %v933, 116
      %v3995 = vpop.permute.xlu0 %3994
      %v3996 = vsel %vm2721, %v3981, 0
      %v3998 = vsel %vm2721, %v3983, 0
      %v4000 = vsel %vm2721, %v3985, 0
      %v4002 = vsel %vm2721, %v3987, 0
      %v4004 = vsel %vm2721, %v3989, 0
      %v4006 = vsel %vm2721, %v3991, 0
      %v4008 = vsel %vm2721, %v3993, 0
      %v4010 = vsel %vm2721, %v3995, 0
      %4012 = vmatprep.subr.mxu0 0.0
      %4013 = vmatpush1.xpose.msra.mxu0 0.0
      %4014 = vmatprep.subr.mxu0 0.0
      %4015 = vmatpush1.xpose.msra.mxu0 0.0
      %4016 = vmatprep.subr.mxu0 0.0
      %4017 = vmatpush1.xpose.msra.mxu0 0.0
      %4018 = vmatprep.subr.mxu0 0.0
      %4019 = vmatpush1.xpose.msra.mxu0 0.0
      %4020 = vmatprep.subr.mxu0 0.0
      %4021 = vmatpush1.xpose.msra.mxu0 0.0
      %4022 = vmatprep.subr.mxu0 0.0
      %4023 = vmatpush1.xpose.msra.mxu0 0.0
      %4024 = vmatprep.subr.mxu0 0.0
      %4025 = vmatpush1.xpose.msra.mxu0 0.0
      %4026 = vmatprep.subr.mxu0 0.0
      %4027 = vmatpush1.xpose.msra.mxu0 0.0
      %4028 = vmatprep.subr.mxu0 0.0
      %4029 = vmatpush1.xpose.msra.mxu0 0.0
      %4030 = vmatprep.subr.mxu0 0.0
      %4031 = vmatpush1.xpose.msra.mxu0 0.0
      %4032 = vmatprep.subr.mxu0 0.0
      %4033 = vmatpush1.xpose.msra.mxu0 0.0
      %4034 = vmatprep.subr.mxu0 0.0
      %4035 = vmatpush1.xpose.msra.mxu0 0.0
      %4036 = vmatprep.subr.mxu0 0.0
      %4037 = vmatpush1.xpose.msra.mxu0 %v4010
      %4038 = vmatprep.subr.mxu0 0.0
      %4039 = vmatpush1.xpose.msra.mxu0 %v4008
      %4040 = vmatprep.subr.mxu0 0.0
      %4041 = vmatpush1.xpose.msra.mxu0 %v4006
      %4042 = vmatprep.subr.mxu0 0.0
      %4043 = vmatpush1.xpose.msra.mxu0 %v4004
      %4044 = vmatprep.subr.mxu0 0.0
      %4045 = vmatpush2.xpose.msra.mxu0 0.0
      %4046 = vmatprep.subr.mxu0 0.0
      %4047 = vmatpush2.xpose.msra.mxu0 0.0
      %4048 = vmatprep.subr.mxu0 0.0
      %4049 = vmatpush2.xpose.msra.mxu0 0.0
      %4050 = vmatprep.subr.mxu0 0.0
      %4051 = vmatpush2.xpose.msra.mxu0 0.0
      %4052 = vmatprep.subr.mxu0 0.0
      %4053 = vmatpush2.xpose.msra.mxu0 0.0
      %4054 = vmatprep.subr.mxu0 0.0
      %4055 = vmatpush2.xpose.msra.mxu0 0.0
      %4056 = vmatprep.subr.mxu0 0.0
      %4057 = vmatpush2.xpose.msra.mxu0 0.0
      %4058 = vmatprep.subr.mxu0 0.0
      %4059 = vmatpush2.xpose.msra.mxu0 0.0
      %4060 = vmatprep.subr.mxu0 0.0
      %4061 = vmatpush2.xpose.msra.mxu0 0.0
      %4062 = vmatprep.subr.mxu0 0.0
      %4063 = vmatpush2.xpose.msra.mxu0 0.0
      %4064 = vmatprep.subr.mxu0 0.0
      %4065 = vmatpush2.xpose.msra.mxu0 0.0
      %4066 = vmatprep.subr.mxu0 0.0
      %4067 = vmatpush2.xpose.msra.mxu0 0.0
      %4068 = vmatprep.subr.mxu0 0.0
      %4069 = vmatpush2.xpose.msra.mxu0 0.0
      %4070 = vmatprep.subr.mxu0 0.0
      %4071 = vmatpush2.xpose.msra.mxu0 0.0
      %4072 = vmatprep.subr.mxu0 0.0
      %4073 = vmatpush2.xpose.msra.mxu0 0.0
      %4074 = vmatprep.subr.mxu0 0.0
      %4075 = vmatpush2.xpose.msra.mxu0 0.0
      %4076 = vmatprep.mubr.f32.mxu0 0.0
      %4077 = vmatmul.mubr.f32.gmra.mxu0 %v3996
      %v4078 = vpop.f32.mrf.mxu0
      %v4079 = vadd.f32 0.0, %v4078
      %v4080 = vpop.f32.mrf.mxu0
      %4081 = vmatprep.mubr.f32.mxu0 0.0
      %4082 = vmatmul.mubr.f32.gmra.mxu0 %v3998
      %v4083 = vpop.f32.mrf.mxu0
      %v4084 = vadd.f32 0.0, %v4083
      %v4085 = vpop.f32.mrf.mxu0
      %4086 = vmatprep.mubr.f32.mxu0 0.0
      %4087 = vmatmul.mubr.f32.gmra.mxu0 %v4000
      %v4088 = vpop.f32.mrf.mxu0
      %v4089 = vadd.f32 0.0, %v4088
      %v4090 = vpop.f32.mrf.mxu0
      %4091 = vmatprep.mubr.f32.mxu0 0.0
      %4092 = vmatmul.mubr.f32.gmra.mxu0 %v4002
      %v4093 = vpop.f32.mrf.mxu0
      %v4094 = vadd.f32 0.0, %v4093
      %v4095 = vpop.f32.mrf.mxu0
      %4096 = vdwg.mxu0
      %4097 = vrot.lane.b32.xlu0 %v2709, 124
      %v4098 = vpop.permute.xlu0 %4097
      %4099 = vrot.lane.b32.xlu0 %v2710, 124
      %v4100 = vpop.permute.xlu0 %4099
      %4101 = vrot.lane.b32.xlu0 %v2711, 124
      %v4102 = vpop.permute.xlu0 %4101
      %4103 = vrot.lane.b32.xlu0 %v2712, 124
      %v4104 = vpop.permute.xlu0 %4103
      %4105 = vrot.lane.b32.xlu0 %v938, 116
      %v4106 = vpop.permute.xlu0 %4105
      %4107 = vrot.lane.b32.xlu0 %v943, 116
      %v4108 = vpop.permute.xlu0 %4107
      %4109 = vrot.lane.b32.xlu0 %v948, 116
      %v4110 = vpop.permute.xlu0 %4109
      %4111 = vrot.lane.b32.xlu0 %v953, 116
      %v4112 = vpop.permute.xlu0 %4111
      %v4113 = vsel %vm2721, %v4098, 0
      %v4115 = vsel %vm2721, %v4100, 0
      %v4117 = vsel %vm2721, %v4102, 0
      %v4119 = vsel %vm2721, %v4104, 0
      %v4121 = vsel %vm2721, %v4106, 0
      %v4123 = vsel %vm2721, %v4108, 0
      %v4125 = vsel %vm2721, %v4110, 0
      %v4127 = vsel %vm2721, %v4112, 0
      %4129 = vmatprep.subr.mxu0 0.0
      %4130 = vmatpush1.xpose.msra.mxu0 0.0
      %4131 = vmatprep.subr.mxu0 0.0
      %4132 = vmatpush1.xpose.msra.mxu0 0.0
      %4133 = vmatprep.subr.mxu0 0.0
      %4134 = vmatpush1.xpose.msra.mxu0 0.0
      %4135 = vmatprep.subr.mxu0 0.0
      %4136 = vmatpush1.xpose.msra.mxu0 0.0
      %4137 = vmatprep.subr.mxu0 0.0
      %4138 = vmatpush1.xpose.msra.mxu0 0.0
      %4139 = vmatprep.subr.mxu0 0.0
      %4140 = vmatpush1.xpose.msra.mxu0 0.0
      %4141 = vmatprep.subr.mxu0 0.0
      %4142 = vmatpush1.xpose.msra.mxu0 0.0
      %4143 = vmatprep.subr.mxu0 0.0
      %4144 = vmatpush1.xpose.msra.mxu0 0.0
      %4145 = vmatprep.subr.mxu0 0.0
      %4146 = vmatpush1.xpose.msra.mxu0 0.0
      %4147 = vmatprep.subr.mxu0 0.0
      %4148 = vmatpush1.xpose.msra.mxu0 0.0
      %4149 = vmatprep.subr.mxu0 0.0
      %4150 = vmatpush1.xpose.msra.mxu0 0.0
      %4151 = vmatprep.subr.mxu0 0.0
      %4152 = vmatpush1.xpose.msra.mxu0 0.0
      %4153 = vmatprep.subr.mxu0 0.0
      %4154 = vmatpush1.xpose.msra.mxu0 %v4127
      %4155 = vmatprep.subr.mxu0 0.0
      %4156 = vmatpush1.xpose.msra.mxu0 %v4125
      %4157 = vmatprep.subr.mxu0 0.0
      %4158 = vmatpush1.xpose.msra.mxu0 %v4123
      %4159 = vmatprep.subr.mxu0 0.0
      %4160 = vmatpush1.xpose.msra.mxu0 %v4121
      %4161 = vmatprep.subr.mxu0 0.0
      %4162 = vmatpush2.xpose.msra.mxu0 0.0
      %4163 = vmatprep.subr.mxu0 0.0
      %4164 = vmatpush2.xpose.msra.mxu0 0.0
      %4165 = vmatprep.subr.mxu0 0.0
      %4166 = vmatpush2.xpose.msra.mxu0 0.0
      %4167 = vmatprep.subr.mxu0 0.0
      %4168 = vmatpush2.xpose.msra.mxu0 0.0
      %4169 = vmatprep.subr.mxu0 0.0
      %4170 = vmatpush2.xpose.msra.mxu0 0.0
      %4171 = vmatprep.subr.mxu0 0.0
      %4172 = vmatpush2.xpose.msra.mxu0 0.0
      %4173 = vmatprep.subr.mxu0 0.0
      %4174 = vmatpush2.xpose.msra.mxu0 0.0
      %4175 = vmatprep.subr.mxu0 0.0
      %4176 = vmatpush2.xpose.msra.mxu0 0.0
      %4177 = vmatprep.subr.mxu0 0.0
      %4178 = vmatpush2.xpose.msra.mxu0 0.0
      %4179 = vmatprep.subr.mxu0 0.0
      %4180 = vmatpush2.xpose.msra.mxu0 0.0
      %4181 = vmatprep.subr.mxu0 0.0
      %4182 = vmatpush2.xpose.msra.mxu0 0.0
      %4183 = vmatprep.subr.mxu0 0.0
      %4184 = vmatpush2.xpose.msra.mxu0 0.0
      %4185 = vmatprep.subr.mxu0 0.0
      %4186 = vmatpush2.xpose.msra.mxu0 0.0
      %4187 = vmatprep.subr.mxu0 0.0
      %4188 = vmatpush2.xpose.msra.mxu0 0.0
      %4189 = vmatprep.subr.mxu0 0.0
      %4190 = vmatpush2.xpose.msra.mxu0 0.0
      %4191 = vmatprep.subr.mxu0 0.0
      %4192 = vmatpush2.xpose.msra.mxu0 0.0
      %4193 = vmatprep.mubr.f32.mxu0 0.0
      %4194 = vmatmul.mubr.f32.gmra.mxu0 %v4113
      %v4195 = vpop.f32.mrf.mxu0
      %v4196 = vadd.f32 0.0, %v4195
      %v4197 = vpop.f32.mrf.mxu0
      %4198 = vmatprep.mubr.f32.mxu0 0.0
      %4199 = vmatmul.mubr.f32.gmra.mxu0 %v4115
      %v4200 = vpop.f32.mrf.mxu0
      %v4201 = vadd.f32 0.0, %v4200
      %v4202 = vpop.f32.mrf.mxu0
      %4203 = vmatprep.mubr.f32.mxu0 0.0
      %4204 = vmatmul.mubr.f32.gmra.mxu0 %v4117
      %v4205 = vpop.f32.mrf.mxu0
      %v4206 = vadd.f32 0.0, %v4205
      %v4207 = vpop.f32.mrf.mxu0
      %4208 = vmatprep.mubr.f32.mxu0 0.0
      %4209 = vmatmul.mubr.f32.gmra.mxu0 %v4119
      %v4210 = vpop.f32.mrf.mxu0
      %v4211 = vadd.f32 0.0, %v4210
      %v4212 = vpop.f32.mrf.mxu0
      %4213 = vdwg.mxu0
      %v4214 = vsel %vm1008, %v3845, -inf
      %4215 = vmax.xlane.f32.xlu0 %v4214
      %v4216 = vpop.xlane.xlu0 %4215
      %v4217 = vsel %vm1008, %v3850, -inf
      %4218 = vmax.xlane.f32.xlu0 %v4217
      %v4219 = vpop.xlane.xlu0 %4218
      %v4220 = vsel %vm1008, %v3855, -inf
      %4221 = vmax.xlane.f32.xlu0 %v4220
      %v4222 = vpop.xlane.xlu0 %4221
      %v4223 = vsel %vm1008, %v3860, -inf
      %4224 = vmax.xlane.f32.xlu0 %v4223
      %v4225 = vpop.xlane.xlu0 %4224
      %v4226 = vsel %vm1008, %v3962, -inf
      %4227 = vmax.xlane.f32.xlu0 %v4226
      %v4228 = vpop.xlane.xlu0 %4227
      %v4229 = vsel %vm1008, %v3967, -inf
      %4230 = vmax.xlane.f32.xlu0 %v4229
      %v4231 = vpop.xlane.xlu0 %4230
      %v4232 = vsel %vm1008, %v3972, -inf
      %4233 = vmax.xlane.f32.xlu0 %v4232
      %v4234 = vpop.xlane.xlu0 %4233
      %v4235 = vsel %vm1008, %v3977, -inf
      %4236 = vmax.xlane.f32.xlu0 %v4235
      %v4237 = vpop.xlane.xlu0 %4236
      %v4238 = vsel %vm1008, %v4079, -inf
      %4239 = vmax.xlane.f32.xlu0 %v4238
      %v4240 = vpop.xlane.xlu0 %4239
      %v4241 = vsel %vm1008, %v4084, -inf
      %4242 = vmax.xlane.f32.xlu0 %v4241
      %v4243 = vpop.xlane.xlu0 %4242
      %v4244 = vsel %vm1008, %v4089, -inf
      %4245 = vmax.xlane.f32.xlu0 %v4244
      %v4246 = vpop.xlane.xlu0 %4245
      %v4247 = vsel %vm1008, %v4094, -inf
      %4248 = vmax.xlane.f32.xlu0 %v4247
      %v4249 = vpop.xlane.xlu0 %4248
      %v4250 = vsel %vm1008, %v4196, -inf
      %4251 = vmax.xlane.f32.xlu0 %v4250
      %v4252 = vpop.xlane.xlu0 %4251
      %v4253 = vsel %vm1008, %v4201, -inf
      %4254 = vmax.xlane.f32.xlu0 %v4253
      %v4255 = vpop.xlane.xlu0 %4254
      %v4256 = vsel %vm1008, %v4206, -inf
      %4257 = vmax.xlane.f32.xlu0 %v4256
      %v4258 = vpop.xlane.xlu0 %4257
      %v4259 = vsel %vm1008, %v4211, -inf
      %4260 = vmax.xlane.f32.xlu0 %v4259
      %v4261 = vpop.xlane.xlu0 %4260
      %v4262 = vsub.f32 %v3845, %v4216
      %v4263 = vsub.f32 %v3850, %v4219
      %v4264 = vsub.f32 %v3855, %v4222
      %v4265 = vsub.f32 %v3860, %v4225
      %v4266 = vsub.f32 %v3962, %v4228
      %v4267 = vsub.f32 %v3967, %v4231
      %v4268 = vsub.f32 %v3972, %v4234
      %v4269 = vsub.f32 %v3977, %v4237
      %v4270 = vsub.f32 %v4079, %v4240
      %v4271 = vsub.f32 %v4084, %v4243
      %v4272 = vsub.f32 %v4089, %v4246
      %v4273 = vsub.f32 %v4094, %v4249
      %v4274 = vsub.f32 %v4196, %v4252
      %v4275 = vsub.f32 %v4201, %v4255
      %v4276 = vsub.f32 %v4206, %v4258
      %v4277 = vsub.f32 %v4211, %v4261
      %v4278 = vmul.f32 %v4262, 1.442695
      %v4279 = vpow.pop %v4278
      %v4280 = vmul.f32 %v4263, 1.442695
      %v4281 = vpow.pop %v4280
      %v4282 = vmul.f32 %v4264, 1.442695
      %v4283 = vpow.pop %v4282
      %v4284 = vmul.f32 %v4265, 1.442695
      %v4285 = vpow.pop %v4284
      %v4286 = vmul.f32 %v4266, 1.442695
      %v4287 = vpow.pop %v4286
      %v4288 = vmul.f32 %v4267, 1.442695
      %v4289 = vpow.pop %v4288
      %v4290 = vmul.f32 %v4268, 1.442695
      %v4291 = vpow.pop %v4290
      %v4292 = vmul.f32 %v4269, 1.442695
      %v4293 = vpow.pop %v4292
      %v4294 = vmul.f32 %v4270, 1.442695
      %v4295 = vpow.pop %v4294
      %v4296 = vmul.f32 %v4271, 1.442695
      %v4297 = vpow.pop %v4296
      %v4298 = vmul.f32 %v4272, 1.442695
      %v4299 = vpow.pop %v4298
      %v4300 = vmul.f32 %v4273, 1.442695
      %v4301 = vpow.pop %v4300
      %v4302 = vmul.f32 %v4274, 1.442695
      %v4303 = vpow.pop %v4302
      %v4304 = vmul.f32 %v4275, 1.442695
      %v4305 = vpow.pop %v4304
      %v4306 = vmul.f32 %v4276, 1.442695
      %v4307 = vpow.pop %v4306
      %v4308 = vmul.f32 %v4277, 1.442695
      %v4309 = vpow.pop %v4308
      %v4310 = vsel %vm1008, %v4279, 0.0
      %4311 = vadd.xlane.f32.xlu0 %v4310
      %v4312 = vpop.xlane.xlu0 %4311
      %v4313 = vsel %vm1008, %v4281, 0.0
      %4314 = vadd.xlane.f32.xlu0 %v4313
      %v4315 = vpop.xlane.xlu0 %4314
      %v4316 = vsel %vm1008, %v4283, 0.0
      %4317 = vadd.xlane.f32.xlu0 %v4316
      %v4318 = vpop.xlane.xlu0 %4317
      %v4319 = vsel %vm1008, %v4285, 0.0
      %4320 = vadd.xlane.f32.xlu0 %v4319
      %v4321 = vpop.xlane.xlu0 %4320
      %v4322 = vsel %vm1008, %v4287, 0.0
      %4323 = vadd.xlane.f32.xlu0 %v4322
      %v4324 = vpop.xlane.xlu0 %4323
      %v4325 = vsel %vm1008, %v4289, 0.0
      %4326 = vadd.xlane.f32.xlu0 %v4325
      %v4327 = vpop.xlane.xlu0 %4326
      %v4328 = vsel %vm1008, %v4291, 0.0
      %4329 = vadd.xlane.f32.xlu0 %v4328
      %v4330 = vpop.xlane.xlu0 %4329
      %v4331 = vsel %vm1008, %v4293, 0.0
      %4332 = vadd.xlane.f32.xlu0 %v4331
      %v4333 = vpop.xlane.xlu0 %4332
      %v4334 = vsel %vm1008, %v4295, 0.0
      %4335 = vadd.xlane.f32.xlu0 %v4334
      %v4336 = vpop.xlane.xlu0 %4335
      %v4337 = vsel %vm1008, %v4297, 0.0
      %4338 = vadd.xlane.f32.xlu0 %v4337
      %v4339 = vpop.xlane.xlu0 %4338
      %v4340 = vsel %vm1008, %v4299, 0.0
      %4341 = vadd.xlane.f32.xlu0 %v4340
      %v4342 = vpop.xlane.xlu0 %4341
      %v4343 = vsel %vm1008, %v4301, 0.0
      %4344 = vadd.xlane.f32.xlu0 %v4343
      %v4345 = vpop.xlane.xlu0 %4344
      %v4346 = vsel %vm1008, %v4303, 0.0
      %4347 = vadd.xlane.f32.xlu0 %v4346
      %v4348 = vpop.xlane.xlu0 %4347
      %v4349 = vsel %vm1008, %v4305, 0.0
      %4350 = vadd.xlane.f32.xlu0 %v4349
      %v4351 = vpop.xlane.xlu0 %4350
      %v4352 = vsel %vm1008, %v4307, 0.0
      %4353 = vadd.xlane.f32.xlu0 %v4352
      %v4354 = vpop.xlane.xlu0 %4353
      %v4355 = vsel %vm1008, %v4309, 0.0
      %4356 = vadd.xlane.f32.xlu0 %v4355
      %v4357 = vpop.xlane.xlu0 %4356
      %v4358 = vrcp.pop %v4312
      %v4359 = vrcp.pop %v4315
      %v4360 = vrcp.pop %v4318
      %v4361 = vrcp.pop %v4321
      %v4362 = vrcp.pop %v4324
      %v4363 = vrcp.pop %v4327
      %v4364 = vrcp.pop %v4330
      %v4365 = vrcp.pop %v4333
      %v4366 = vrcp.pop %v4336
      %v4367 = vrcp.pop %v4339
      %v4368 = vrcp.pop %v4342
      %v4369 = vrcp.pop %v4345
      %v4370 = vrcp.pop %v4348
      %v4371 = vrcp.pop %v4351
      %v4372 = vrcp.pop %v4354
      %v4373 = vrcp.pop %v4357
      %v4374 = vmul.f32 %v4279, %v4358
      %v4375 = vmul.f32 %v4281, %v4359
      %v4376 = vmul.f32 %v4283, %v4360
      %v4377 = vmul.f32 %v4285, %v4361
      %v4378 = vmul.f32 %v4287, %v4362
      %v4379 = vmul.f32 %v4289, %v4363
      %v4380 = vmul.f32 %v4291, %v4364
      %v4381 = vmul.f32 %v4293, %v4365
      %v4382 = vmul.f32 %v4295, %v4366
      %v4383 = vmul.f32 %v4297, %v4367
      %v4384 = vmul.f32 %v4299, %v4368
      %v4385 = vmul.f32 %v4301, %v4369
      %v4386 = vmul.f32 %v4303, %v4370
      %v4387 = vmul.f32 %v4305, %v4371
      %v4388 = vmul.f32 %v4307, %v4372
      %v4389 = vmul.f32 %v4309, %v4373
      %s4390 = scalar_lea.vmem %s487, 128
      %4391 = vst.msk [vmem:[%s4390] sm:$0xff] %vm1008, %v4374
      %4392 = vst.msk [vmem:[%s4390 + $0x8] sm:$0xff] %vm1008, %v4375
      %4393 = vst.msk [vmem:[%s4390 + $0x10] sm:$0xff] %vm1008, %v4376
      %4394 = vst.msk [vmem:[%s4390 + $0x18] sm:$0xff] %vm1008, %v4377
      %4395 = vst.msk [vmem:[%s4390 + $0x20] sm:$0xff] %vm1008, %v4378
      %4396 = vst.msk [vmem:[%s4390 + $0x28] sm:$0xff] %vm1008, %v4379
      %4397 = vst.msk [vmem:[%s4390 + $0x30] sm:$0xff] %vm1008, %v4380
      %4398 = vst.msk [vmem:[%s4390 + $0x38] sm:$0xff] %vm1008, %v4381
      %4399 = vst.msk [vmem:[%s4390 + $0x40] sm:$0xff] %vm1008, %v4382
      %4400 = vst.msk [vmem:[%s4390 + $0x48] sm:$0xff] %vm1008, %v4383
      %4401 = vst.msk [vmem:[%s4390 + $0x50] sm:$0xff] %vm1008, %v4384
      %4402 = vst.msk [vmem:[%s4390 + $0x58] sm:$0xff] %vm1008, %v4385
      %4403 = vst.msk [vmem:[%s4390 + $0x60] sm:$0xff] %vm1008, %v4386
      %4404 = vst.msk [vmem:[%s4390 + $0x68] sm:$0xff] %vm1008, %v4387
      %4405 = vst.msk [vmem:[%s4390 + $0x70] sm:$0xff] %vm1008, %v4388
      %4406 = vst.msk [vmem:[%s4390 + $0x78] sm:$0xff] %vm1008, %v4389
      %4407 = vrot.lane.b32.xlu0 %v878, 108
      %v4408 = vpop.permute.xlu0 %4407
      %4409 = vrot.lane.b32.xlu0 %v883, 108
      %v4410 = vpop.permute.xlu0 %4409
      %4411 = vrot.lane.b32.xlu0 %v888, 108
      %v4412 = vpop.permute.xlu0 %4411
      %4413 = vrot.lane.b32.xlu0 %v893, 108
      %v4414 = vpop.permute.xlu0 %4413
      %v4420 = vsel %vm1008, %v4374, 0
      %v4423 = vsel %vm1008, %v4375, 0
      %v4426 = vsel %vm1008, %v4376, 0
      %v4429 = vsel %vm1008, %v4377, 0
      %4431 = vmatprep.subr.mxu0 0.0
      %4432 = vmatpush1.msra.mxu0 0.0
      %4433 = vmatprep.subr.mxu0 0.0
      %4434 = vmatpush1.msra.mxu0 0.0
      %4435 = vmatprep.subr.mxu0 0.0
      %4436 = vmatpush1.msra.mxu0 0.0
      %4437 = vmatprep.subr.mxu0 0.0
      %4438 = vmatpush1.msra.mxu0 0.0
      %4439 = vmatprep.subr.mxu0 0.0
      %4440 = vmatpush1.msra.mxu0 0.0
      %4441 = vmatprep.subr.mxu0 0.0
      %4442 = vmatpush1.msra.mxu0 0.0
      %4443 = vmatprep.subr.mxu0 0.0
      %4444 = vmatpush1.msra.mxu0 0.0
      %4445 = vmatprep.subr.mxu0 0.0
      %4446 = vmatpush1.msra.mxu0 0.0
      %4447 = vmatprep.subr.mxu0 0.0
      %4448 = vmatpush1.msra.mxu0 0.0
      %4449 = vmatprep.subr.mxu0 0.0
      %4450 = vmatpush1.msra.mxu0 0.0
      %4451 = vmatprep.subr.mxu0 0.0
      %4452 = vmatpush1.msra.mxu0 0.0
      %4453 = vmatprep.subr.mxu0 0.0
      %4454 = vmatpush1.msra.mxu0 0.0
      %4455 = vmatprep.subr.mxu0 0.0
      %4456 = vmatpush1.msra.mxu0 %v4414
      %4457 = vmatprep.subr.mxu0 0.0
      %4458 = vmatpush1.msra.mxu0 %v4412
      %4459 = vmatprep.subr.mxu0 0.0
      %4460 = vmatpush1.msra.mxu0 %v4410
      %4461 = vmatprep.subr.mxu0 0.0
      %4462 = vmatpush1.msra.mxu0 %v4408
      %4463 = vmatprep.subr.mxu0 0.0
      %4464 = vmatpush2.msra.mxu0 0.0
      %4465 = vmatprep.subr.mxu0 0.0
      %4466 = vmatpush2.msra.mxu0 0.0
      %4467 = vmatprep.subr.mxu0 0.0
      %4468 = vmatpush2.msra.mxu0 0.0
      %4469 = vmatprep.subr.mxu0 0.0
      %4470 = vmatpush2.msra.mxu0 0.0
      %4471 = vmatprep.subr.mxu0 0.0
      %4472 = vmatpush2.msra.mxu0 0.0
      %4473 = vmatprep.subr.mxu0 0.0
      %4474 = vmatpush2.msra.mxu0 0.0
      %4475 = vmatprep.subr.mxu0 0.0
      %4476 = vmatpush2.msra.mxu0 0.0
      %4477 = vmatprep.subr.mxu0 0.0
      %4478 = vmatpush2.msra.mxu0 0.0
      %4479 = vmatprep.subr.mxu0 0.0
      %4480 = vmatpush2.msra.mxu0 0.0
      %4481 = vmatprep.subr.mxu0 0.0
      %4482 = vmatpush2.msra.mxu0 0.0
      %4483 = vmatprep.subr.mxu0 0.0
      %4484 = vmatpush2.msra.mxu0 0.0
      %4485 = vmatprep.subr.mxu0 0.0
      %4486 = vmatpush2.msra.mxu0 0.0
      %4487 = vmatprep.subr.mxu0 0.0
      %4488 = vmatpush2.msra.mxu0 0.0
      %4489 = vmatprep.subr.mxu0 0.0
      %4490 = vmatpush2.msra.mxu0 0.0
      %4491 = vmatprep.subr.mxu0 0.0
      %4492 = vmatpush2.msra.mxu0 0.0
      %4493 = vmatprep.subr.mxu0 0.0
      %4494 = vmatpush2.msra.mxu0 0.0
      %4495 = vmatprep.mubr.f32.mxu0 0.0
      %4496 = vmatmul.mubr.f32.gmra.mxu0 %v4420
      %v4497 = vpop.f32.mrf.mxu0
      %v4498 = vadd.f32 0.0, %v4497
      %v4499 = vpop.f32.mrf.mxu0
      %4500 = vmatprep.mubr.f32.mxu0 0.0
      %4501 = vmatmul.mubr.f32.gmra.mxu0 %v4423
      %v4502 = vpop.f32.mrf.mxu0
      %v4503 = vadd.f32 0.0, %v4502
      %v4504 = vpop.f32.mrf.mxu0
      %4505 = vmatprep.mubr.f32.mxu0 0.0
      %4506 = vmatmul.mubr.f32.gmra.mxu0 %v4426
      %v4507 = vpop.f32.mrf.mxu0
      %v4508 = vadd.f32 0.0, %v4507
      %v4509 = vpop.f32.mrf.mxu0
      %4510 = vmatprep.mubr.f32.mxu0 0.0
      %4511 = vmatmul.mubr.f32.gmra.mxu0 %v4429
      %v4512 = vpop.f32.mrf.mxu0
      %v4513 = vadd.f32 0.0, %v4512
      %v4514 = vpop.f32.mrf.mxu0
      %4515 = vdwg.mxu0
      %4516 = vrot.lane.b32.xlu0 %v898, 108
      %v4517 = vpop.permute.xlu0 %4516
      %4518 = vrot.lane.b32.xlu0 %v903, 108
      %v4519 = vpop.permute.xlu0 %4518
      %4520 = vrot.lane.b32.xlu0 %v908, 108
      %v4521 = vpop.permute.xlu0 %4520
      %4522 = vrot.lane.b32.xlu0 %v913, 108
      %v4523 = vpop.permute.xlu0 %4522
      %v4529 = vsel %vm1008, %v4378, 0
      %v4532 = vsel %vm1008, %v4379, 0
      %v4535 = vsel %vm1008, %v4380, 0
      %v4538 = vsel %vm1008, %v4381, 0
      %4540 = vmatprep.subr.mxu0 0.0
      %4541 = vmatpush1.msra.mxu0 0.0
      %4542 = vmatprep.subr.mxu0 0.0
      %4543 = vmatpush1.msra.mxu0 0.0
      %4544 = vmatprep.subr.mxu0 0.0
      %4545 = vmatpush1.msra.mxu0 0.0
      %4546 = vmatprep.subr.mxu0 0.0
      %4547 = vmatpush1.msra.mxu0 0.0
      %4548 = vmatprep.subr.mxu0 0.0
      %4549 = vmatpush1.msra.mxu0 0.0
      %4550 = vmatprep.subr.mxu0 0.0
      %4551 = vmatpush1.msra.mxu0 0.0
      %4552 = vmatprep.subr.mxu0 0.0
      %4553 = vmatpush1.msra.mxu0 0.0
      %4554 = vmatprep.subr.mxu0 0.0
      %4555 = vmatpush1.msra.mxu0 0.0
      %4556 = vmatprep.subr.mxu0 0.0
      %4557 = vmatpush1.msra.mxu0 0.0
      %4558 = vmatprep.subr.mxu0 0.0
      %4559 = vmatpush1.msra.mxu0 0.0
      %4560 = vmatprep.subr.mxu0 0.0
      %4561 = vmatpush1.msra.mxu0 0.0
      %4562 = vmatprep.subr.mxu0 0.0
      %4563 = vmatpush1.msra.mxu0 0.0
      %4564 = vmatprep.subr.mxu0 0.0
      %4565 = vmatpush1.msra.mxu0 %v4523
      %4566 = vmatprep.subr.mxu0 0.0
      %4567 = vmatpush1.msra.mxu0 %v4521
      %4568 = vmatprep.subr.mxu0 0.0
      %4569 = vmatpush1.msra.mxu0 %v4519
      %4570 = vmatprep.subr.mxu0 0.0
      %4571 = vmatpush1.msra.mxu0 %v4517
      %4572 = vmatprep.subr.mxu0 0.0
      %4573 = vmatpush2.msra.mxu0 0.0
      %4574 = vmatprep.subr.mxu0 0.0
      %4575 = vmatpush2.msra.mxu0 0.0
      %4576 = vmatprep.subr.mxu0 0.0
      %4577 = vmatpush2.msra.mxu0 0.0
      %4578 = vmatprep.subr.mxu0 0.0
      %4579 = vmatpush2.msra.mxu0 0.0
      %4580 = vmatprep.subr.mxu0 0.0
      %4581 = vmatpush2.msra.mxu0 0.0
      %4582 = vmatprep.subr.mxu0 0.0
      %4583 = vmatpush2.msra.mxu0 0.0
      %4584 = vmatprep.subr.mxu0 0.0
      %4585 = vmatpush2.msra.mxu0 0.0
      %4586 = vmatprep.subr.mxu0 0.0
      %4587 = vmatpush2.msra.mxu0 0.0
      %4588 = vmatprep.subr.mxu0 0.0
      %4589 = vmatpush2.msra.mxu0 0.0
      %4590 = vmatprep.subr.mxu0 0.0
      %4591 = vmatpush2.msra.mxu0 0.0
      %4592 = vmatprep.subr.mxu0 0.0
      %4593 = vmatpush2.msra.mxu0 0.0
      %4594 = vmatprep.subr.mxu0 0.0
      %4595 = vmatpush2.msra.mxu0 0.0
      %4596 = vmatprep.subr.mxu0 0.0
      %4597 = vmatpush2.msra.mxu0 0.0
      %4598 = vmatprep.subr.mxu0 0.0
      %4599 = vmatpush2.msra.mxu0 0.0
      %4600 = vmatprep.subr.mxu0 0.0
      %4601 = vmatpush2.msra.mxu0 0.0
      %4602 = vmatprep.subr.mxu0 0.0
      %4603 = vmatpush2.msra.mxu0 0.0
      %4604 = vmatprep.mubr.f32.mxu0 0.0
      %4605 = vmatmul.mubr.f32.gmra.mxu0 %v4529
      %v4606 = vpop.f32.mrf.mxu0
      %v4607 = vadd.f32 0.0, %v4606
      %v4608 = vpop.f32.mrf.mxu0
      %4609 = vmatprep.mubr.f32.mxu0 0.0
      %4610 = vmatmul.mubr.f32.gmra.mxu0 %v4532
      %v4611 = vpop.f32.mrf.mxu0
      %v4612 = vadd.f32 0.0, %v4611
      %v4613 = vpop.f32.mrf.mxu0
      %4614 = vmatprep.mubr.f32.mxu0 0.0
      %4615 = vmatmul.mubr.f32.gmra.mxu0 %v4535
      %v4616 = vpop.f32.mrf.mxu0
      %v4617 = vadd.f32 0.0, %v4616
      %v4618 = vpop.f32.mrf.mxu0
      %4619 = vmatprep.mubr.f32.mxu0 0.0
      %4620 = vmatmul.mubr.f32.gmra.mxu0 %v4538
      %v4621 = vpop.f32.mrf.mxu0
      %v4622 = vadd.f32 0.0, %v4621
      %v4623 = vpop.f32.mrf.mxu0
      %4624 = vdwg.mxu0
      %4625 = vrot.lane.b32.xlu0 %v918, 108
      %v4626 = vpop.permute.xlu0 %4625
      %4627 = vrot.lane.b32.xlu0 %v923, 108
      %v4628 = vpop.permute.xlu0 %4627
      %4629 = vrot.lane.b32.xlu0 %v928, 108
      %v4630 = vpop.permute.xlu0 %4629
      %4631 = vrot.lane.b32.xlu0 %v933, 108
      %v4632 = vpop.permute.xlu0 %4631
      %v4638 = vsel %vm1008, %v4382, 0
      %v4641 = vsel %vm1008, %v4383, 0
      %v4644 = vsel %vm1008, %v4384, 0
      %v4647 = vsel %vm1008, %v4385, 0
      %4649 = vmatprep.subr.mxu0 0.0
      %4650 = vmatpush1.msra.mxu0 0.0
      %4651 = vmatprep.subr.mxu0 0.0
      %4652 = vmatpush1.msra.mxu0 0.0
      %4653 = vmatprep.subr.mxu0 0.0
      %4654 = vmatpush1.msra.mxu0 0.0
      %4655 = vmatprep.subr.mxu0 0.0
      %4656 = vmatpush1.msra.mxu0 0.0
      %4657 = vmatprep.subr.mxu0 0.0
      %4658 = vmatpush1.msra.mxu0 0.0
      %4659 = vmatprep.subr.mxu0 0.0
      %4660 = vmatpush1.msra.mxu0 0.0
      %4661 = vmatprep.subr.mxu0 0.0
      %4662 = vmatpush1.msra.mxu0 0.0
      %4663 = vmatprep.subr.mxu0 0.0
      %4664 = vmatpush1.msra.mxu0 0.0
      %4665 = vmatprep.subr.mxu0 0.0
      %4666 = vmatpush1.msra.mxu0 0.0
      %4667 = vmatprep.subr.mxu0 0.0
      %4668 = vmatpush1.msra.mxu0 0.0
      %4669 = vmatprep.subr.mxu0 0.0
      %4670 = vmatpush1.msra.mxu0 0.0
      %4671 = vmatprep.subr.mxu0 0.0
      %4672 = vmatpush1.msra.mxu0 0.0
      %4673 = vmatprep.subr.mxu0 0.0
      %4674 = vmatpush1.msra.mxu0 %v4632
      %4675 = vmatprep.subr.mxu0 0.0
      %4676 = vmatpush1.msra.mxu0 %v4630
      %4677 = vmatprep.subr.mxu0 0.0
      %4678 = vmatpush1.msra.mxu0 %v4628
      %4679 = vmatprep.subr.mxu0 0.0
      %4680 = vmatpush1.msra.mxu0 %v4626
      %4681 = vmatprep.subr.mxu0 0.0
      %4682 = vmatpush2.msra.mxu0 0.0
      %4683 = vmatprep.subr.mxu0 0.0
      %4684 = vmatpush2.msra.mxu0 0.0
      %4685 = vmatprep.subr.mxu0 0.0
      %4686 = vmatpush2.msra.mxu0 0.0
      %4687 = vmatprep.subr.mxu0 0.0
      %4688 = vmatpush2.msra.mxu0 0.0
      %4689 = vmatprep.subr.mxu0 0.0
      %4690 = vmatpush2.msra.mxu0 0.0
      %4691 = vmatprep.subr.mxu0 0.0
      %4692 = vmatpush2.msra.mxu0 0.0
      %4693 = vmatprep.subr.mxu0 0.0
      %4694 = vmatpush2.msra.mxu0 0.0
      %4695 = vmatprep.subr.mxu0 0.0
      %4696 = vmatpush2.msra.mxu0 0.0
      %4697 = vmatprep.subr.mxu0 0.0
      %4698 = vmatpush2.msra.mxu0 0.0
      %4699 = vmatprep.subr.mxu0 0.0
      %4700 = vmatpush2.msra.mxu0 0.0
      %4701 = vmatprep.subr.mxu0 0.0
      %4702 = vmatpush2.msra.mxu0 0.0
      %4703 = vmatprep.subr.mxu0 0.0
      %4704 = vmatpush2.msra.mxu0 0.0
      %4705 = vmatprep.subr.mxu0 0.0
      %4706 = vmatpush2.msra.mxu0 0.0
      %4707 = vmatprep.subr.mxu0 0.0
      %4708 = vmatpush2.msra.mxu0 0.0
      %4709 = vmatprep.subr.mxu0 0.0
      %4710 = vmatpush2.msra.mxu0 0.0
      %4711 = vmatprep.subr.mxu0 0.0
      %4712 = vmatpush2.msra.mxu0 0.0
      %4713 = vmatprep.mubr.f32.mxu0 0.0
      %4714 = vmatmul.mubr.f32.gmra.mxu0 %v4638
      %v4715 = vpop.f32.mrf.mxu0
      %v4716 = vadd.f32 0.0, %v4715
      %v4717 = vpop.f32.mrf.mxu0
      %4718 = vmatprep.mubr.f32.mxu0 0.0
      %4719 = vmatmul.mubr.f32.gmra.mxu0 %v4641
      %v4720 = vpop.f32.mrf.mxu0
      %v4721 = vadd.f32 0.0, %v4720
      %v4722 = vpop.f32.mrf.mxu0
      %4723 = vmatprep.mubr.f32.mxu0 0.0
      %4724 = vmatmul.mubr.f32.gmra.mxu0 %v4644
      %v4725 = vpop.f32.mrf.mxu0
      %v4726 = vadd.f32 0.0, %v4725
      %v4727 = vpop.f32.mrf.mxu0
      %4728 = vmatprep.mubr.f32.mxu0 0.0
      %4729 = vmatmul.mubr.f32.gmra.mxu0 %v4647
      %v4730 = vpop.f32.mrf.mxu0
      %v4731 = vadd.f32 0.0, %v4730
      %v4732 = vpop.f32.mrf.mxu0
      %4733 = vdwg.mxu0
      %4734 = vrot.lane.b32.xlu0 %v938, 108
      %v4735 = vpop.permute.xlu0 %4734
      %4736 = vrot.lane.b32.xlu0 %v943, 108
      %v4737 = vpop.permute.xlu0 %4736
      %4738 = vrot.lane.b32.xlu0 %v948, 108
      %v4739 = vpop.permute.xlu0 %4738
      %4740 = vrot.lane.b32.xlu0 %v953, 108
      %v4741 = vpop.permute.xlu0 %4740
      %v4747 = vsel %vm1008, %v4386, 0
      %v4750 = vsel %vm1008, %v4387, 0
      %v4753 = vsel %vm1008, %v4388, 0
      %v4756 = vsel %vm1008, %v4389, 0
      %4758 = vmatprep.subr.mxu0 0.0
      %4759 = vmatpush1.msra.mxu0 0.0
      %4760 = vmatprep.subr.mxu0 0.0
      %4761 = vmatpush1.msra.mxu0 0.0
      %4762 = vmatprep.subr.mxu0 0.0
      %4763 = vmatpush1.msra.mxu0 0.0
      %4764 = vmatprep.subr.mxu0 0.0
      %4765 = vmatpush1.msra.mxu0 0.0
      %4766 = vmatprep.subr.mxu0 0.0
      %4767 = vmatpush1.msra.mxu0 0.0
      %4768 = vmatprep.subr.mxu0 0.0
      %4769 = vmatpush1.msra.mxu0 0.0
      %4770 = vmatprep.subr.mxu0 0.0
      %4771 = vmatpush1.msra.mxu0 0.0
      %4772 = vmatprep.subr.mxu0 0.0
      %4773 = vmatpush1.msra.mxu0 0.0
      %4774 = vmatprep.subr.mxu0 0.0
      %4775 = vmatpush1.msra.mxu0 0.0
      %4776 = vmatprep.subr.mxu0 0.0
      %4777 = vmatpush1.msra.mxu0 0.0
      %4778 = vmatprep.subr.mxu0 0.0
      %4779 = vmatpush1.msra.mxu0 0.0
      %4780 = vmatprep.subr.mxu0 0.0
      %4781 = vmatpush1.msra.mxu0 0.0
      %4782 = vmatprep.subr.mxu0 0.0
      %4783 = vmatpush1.msra.mxu0 %v4741
      %4784 = vmatprep.subr.mxu0 0.0
      %4785 = vmatpush1.msra.mxu0 %v4739
      %4786 = vmatprep.subr.mxu0 0.0
      %4787 = vmatpush1.msra.mxu0 %v4737
      %4788 = vmatprep.subr.mxu0 0.0
      %4789 = vmatpush1.msra.mxu0 %v4735
      %4790 = vmatprep.subr.mxu0 0.0
      %4791 = vmatpush2.msra.mxu0 0.0
      %4792 = vmatprep.subr.mxu0 0.0
      %4793 = vmatpush2.msra.mxu0 0.0
      %4794 = vmatprep.subr.mxu0 0.0
      %4795 = vmatpush2.msra.mxu0 0.0
      %4796 = vmatprep.subr.mxu0 0.0
      %4797 = vmatpush2.msra.mxu0 0.0
      %4798 = vmatprep.subr.mxu0 0.0
      %4799 = vmatpush2.msra.mxu0 0.0
      %4800 = vmatprep.subr.mxu0 0.0
      %4801 = vmatpush2.msra.mxu0 0.0
      %4802 = vmatprep.subr.mxu0 0.0
      %4803 = vmatpush2.msra.mxu0 0.0
      %4804 = vmatprep.subr.mxu0 0.0
      %4805 = vmatpush2.msra.mxu0 0.0
      %4806 = vmatprep.subr.mxu0 0.0
      %4807 = vmatpush2.msra.mxu0 0.0
      %4808 = vmatprep.subr.mxu0 0.0
      %4809 = vmatpush2.msra.mxu0 0.0
      %4810 = vmatprep.subr.mxu0 0.0
      %4811 = vmatpush2.msra.mxu0 0.0
      %4812 = vmatprep.subr.mxu0 0.0
      %4813 = vmatpush2.msra.mxu0 0.0
      %4814 = vmatprep.subr.mxu0 0.0
      %4815 = vmatpush2.msra.mxu0 0.0
      %4816 = vmatprep.subr.mxu0 0.0
      %4817 = vmatpush2.msra.mxu0 0.0
      %4818 = vmatprep.subr.mxu0 0.0
      %4819 = vmatpush2.msra.mxu0 0.0
      %4820 = vmatprep.subr.mxu0 0.0
      %4821 = vmatpush2.msra.mxu0 0.0
      %4822 = vmatprep.mubr.f32.mxu0 0.0
      %4823 = vmatmul.mubr.f32.gmra.mxu0 %v4747
      %v4824 = vpop.f32.mrf.mxu0
      %v4825 = vadd.f32 0.0, %v4824
      %v4826 = vpop.f32.mrf.mxu0
      %4827 = vmatprep.mubr.f32.mxu0 0.0
      %4828 = vmatmul.mubr.f32.gmra.mxu0 %v4750
      %v4829 = vpop.f32.mrf.mxu0
      %v4830 = vadd.f32 0.0, %v4829
      %v4831 = vpop.f32.mrf.mxu0
      %4832 = vmatprep.mubr.f32.mxu0 0.0
      %4833 = vmatmul.mubr.f32.gmra.mxu0 %v4753
      %v4834 = vpop.f32.mrf.mxu0
      %v4835 = vadd.f32 0.0, %v4834
      %v4836 = vpop.f32.mrf.mxu0
      %4837 = vmatprep.mubr.f32.mxu0 0.0
      %4838 = vmatmul.mubr.f32.gmra.mxu0 %v4756
      %v4839 = vpop.f32.mrf.mxu0
      %v4840 = vadd.f32 0.0, %v4839
      %v4841 = vpop.f32.mrf.mxu0
      %4842 = vdwg.mxu0
      %4859 = vrot.lane.b32.xlu0 %v4498, 4
      %v4860 = vpop.permute.xlu0 %4859
      %4861 = vrot.lane.b32.xlu0 %v4503, 4
      %v4862 = vpop.permute.xlu0 %4861
      %4863 = vrot.lane.b32.xlu0 %v4508, 4
      %v4864 = vpop.permute.xlu0 %4863
      %4865 = vrot.lane.b32.xlu0 %v4513, 4
      %v4866 = vpop.permute.xlu0 %4865
      %4867 = vrot.lane.b32.xlu0 %v4607, 4
      %v4868 = vpop.permute.xlu0 %4867
      %4869 = vrot.lane.b32.xlu0 %v4612, 4
      %v4870 = vpop.permute.xlu0 %4869
      %4871 = vrot.lane.b32.xlu0 %v4617, 4
      %v4872 = vpop.permute.xlu0 %4871
      %4873 = vrot.lane.b32.xlu0 %v4622, 4
      %v4874 = vpop.permute.xlu0 %4873
      %4875 = vrot.lane.b32.xlu0 %v4716, 4
      %v4876 = vpop.permute.xlu0 %4875
      %4877 = vrot.lane.b32.xlu0 %v4721, 4
      %v4878 = vpop.permute.xlu0 %4877
      %4879 = vrot.lane.b32.xlu0 %v4726, 4
      %v4880 = vpop.permute.xlu0 %4879
      %4881 = vrot.lane.b32.xlu0 %v4731, 4
      %v4882 = vpop.permute.xlu0 %4881
      %4883 = vrot.lane.b32.xlu0 %v4825, 4
      %v4884 = vpop.permute.xlu0 %4883
      %4885 = vrot.lane.b32.xlu0 %v4830, 4
      %v4886 = vpop.permute.xlu0 %4885
      %4887 = vrot.lane.b32.xlu0 %v4835, 4
      %v4888 = vpop.permute.xlu0 %4887
      %4889 = vrot.lane.b32.xlu0 %v4840, 4
      %v4890 = vpop.permute.xlu0 %4889
      %v4907 = vsel %vm2721, %v3437, %v4860
      %v4908 = vsel %vm2721, %v3442, %v4862
      %v4909 = vsel %vm2721, %v3447, %v4864
      %v4910 = vsel %vm2721, %v3452, %v4866
      %v4911 = vsel %vm2721, %v3534, %v4868
      %v4912 = vsel %vm2721, %v3539, %v4870
      %v4913 = vsel %vm2721, %v3544, %v4872
      %v4914 = vsel %vm2721, %v3549, %v4874
      %v4915 = vsel %vm2721, %v3631, %v4876
      %v4916 = vsel %vm2721, %v3636, %v4878
      %v4917 = vsel %vm2721, %v3641, %v4880
      %v4918 = vsel %vm2721, %v3646, %v4882
      %v4919 = vsel %vm2721, %v3728, %v4884
      %v4920 = vsel %vm2721, %v3733, %v4886
      %v4921 = vsel %vm2721, %v3738, %v4888
      %v4922 = vsel %vm2721, %v3743, %v4890
      %v4923 = vadd.f32 %v2681, %v4907
      %v4924 = vadd.f32 %v2682, %v4908
      %v4925 = vadd.f32 %v2683, %v4909
      %v4926 = vadd.f32 %v2684, %v4910
      %v4927 = vadd.f32 %v2685, %v4911
      %v4928 = vadd.f32 %v2686, %v4912
      %v4929 = vadd.f32 %v2687, %v4913
      %v4930 = vadd.f32 %v2688, %v4914
      %v4931 = vadd.f32 %v2689, %v4915
      %v4932 = vadd.f32 %v2690, %v4916
      %v4933 = vadd.f32 %v2691, %v4917
      %v4934 = vadd.f32 %v2692, %v4918
      %v4935 = vadd.f32 %v2693, %v4919
      %v4936 = vadd.f32 %v2694, %v4920
      %v4937 = vadd.f32 %v2695, %v4921
      %v4938 = vadd.f32 %v2696, %v4922
      %v4939 = vld [vmem:[%s469] sm:$0xff]
      %v4940 = vld [vmem:[%s469 + $0x8] sm:$0xff]
      %v4942 = vsel %vm2401, %v4939, 0
      %v4945 = vsel %vm2401, %v4940, 0
      %v4948 = vsel %vm2401, %v4923, 0
      %v4951 = vsel %vm2401, %v4924, 0
      %v4954 = vsel %vm2401, %v4925, 0
      %v4957 = vsel %vm2401, %v4926, 0
      %v4960 = vsel %vm2401, %v4927, 0
      %v4963 = vsel %vm2401, %v4928, 0
      %v4966 = vsel %vm2401, %v4929, 0
      %v4969 = vsel %vm2401, %v4930, 0
      %v4972 = vsel %vm2401, %v4931, 0
      %v4975 = vsel %vm2401, %v4932, 0
      %v4978 = vsel %vm2401, %v4933, 0
      %v4981 = vsel %vm2401, %v4934, 0
      %v4984 = vsel %vm2401, %v4935, 0
      %v4987 = vsel %vm2401, %v4936, 0
      %v4990 = vsel %vm2401, %v4937, 0
      %v4993 = vsel %vm2401, %v4938, 0
      %4995 = vmatprep.subr.mxu0 0.0
      %4996 = vmatpush1.xpose.msra.mxu0 %v4993
      %4997 = vmatprep.subr.mxu0 0.0
      %4998 = vmatpush1.xpose.msra.mxu0 %v4990
      %4999 = vmatprep.subr.mxu0 0.0
      %5000 = vmatpush1.xpose.msra.mxu0 %v4987
      %5001 = vmatprep.subr.mxu0 0.0
      %5002 = vmatpush1.xpose.msra.mxu0 %v4984
      %5003 = vmatprep.subr.mxu0 0.0
      %5004 = vmatpush1.xpose.msra.mxu0 %v4981
      %5005 = vmatprep.subr.mxu0 0.0
      %5006 = vmatpush1.xpose.msra.mxu0 %v4978
      %5007 = vmatprep.subr.mxu0 0.0
      %5008 = vmatpush1.xpose.msra.mxu0 %v4975
      %5009 = vmatprep.subr.mxu0 0.0
      %5010 = vmatpush1.xpose.msra.mxu0 %v4972
      %5011 = vmatprep.subr.mxu0 0.0
      %5012 = vmatpush1.xpose.msra.mxu0 %v4969
      %5013 = vmatprep.subr.mxu0 0.0
      %5014 = vmatpush1.xpose.msra.mxu0 %v4966
      %5015 = vmatprep.subr.mxu0 0.0
      %5016 = vmatpush1.xpose.msra.mxu0 %v4963
      %5017 = vmatprep.subr.mxu0 0.0
      %5018 = vmatpush1.xpose.msra.mxu0 %v4960
      %5019 = vmatprep.subr.mxu0 0.0
      %5020 = vmatpush1.xpose.msra.mxu0 %v4957
      %5021 = vmatprep.subr.mxu0 0.0
      %5022 = vmatpush1.xpose.msra.mxu0 %v4954
      %5023 = vmatprep.subr.mxu0 0.0
      %5024 = vmatpush1.xpose.msra.mxu0 %v4951
      %5025 = vmatprep.subr.mxu0 0.0
      %5026 = vmatpush1.xpose.msra.mxu0 %v4948
      %5027 = vmatprep.subr.mxu0 0.0
      %5028 = vmatpush2.xpose.msra.mxu0 0.0
      %5029 = vmatprep.subr.mxu0 0.0
      %5030 = vmatpush2.xpose.msra.mxu0 0.0
      %5031 = vmatprep.subr.mxu0 0.0
      %5032 = vmatpush2.xpose.msra.mxu0 0.0
      %5033 = vmatprep.subr.mxu0 0.0
      %5034 = vmatpush2.xpose.msra.mxu0 0.0
      %5035 = vmatprep.subr.mxu0 0.0
      %5036 = vmatpush2.xpose.msra.mxu0 0.0
      %5037 = vmatprep.subr.mxu0 0.0
      %5038 = vmatpush2.xpose.msra.mxu0 0.0
      %5039 = vmatprep.subr.mxu0 0.0
      %5040 = vmatpush2.xpose.msra.mxu0 0.0
      %5041 = vmatprep.subr.mxu0 0.0
      %5042 = vmatpush2.xpose.msra.mxu0 0.0
      %5043 = vmatprep.subr.mxu0 0.0
      %5044 = vmatpush2.xpose.msra.mxu0 0.0
      %5045 = vmatprep.subr.mxu0 0.0
      %5046 = vmatpush2.xpose.msra.mxu0 0.0
      %5047 = vmatprep.subr.mxu0 0.0
      %5048 = vmatpush2.xpose.msra.mxu0 0.0
      %5049 = vmatprep.subr.mxu0 0.0
      %5050 = vmatpush2.xpose.msra.mxu0 0.0
      %5051 = vmatprep.subr.mxu0 0.0
      %5052 = vmatpush2.xpose.msra.mxu0 0.0
      %5053 = vmatprep.subr.mxu0 0.0
      %5054 = vmatpush2.xpose.msra.mxu0 0.0
      %5055 = vmatprep.subr.mxu0 0.0
      %5056 = vmatpush2.xpose.msra.mxu0 0.0
      %5057 = vmatprep.subr.mxu0 0.0
      %5058 = vmatpush2.xpose.msra.mxu0 0.0
      %5059 = vmatprep.mubr.f32.mxu0 0.0
      %5060 = vmatmul.mubr.f32.gmra.mxu0 %v4942
      %v5061 = vpop.f32.mrf.mxu0
      %v5062 = vadd.f32 0.0, %v5061
      %v5063 = vpop.f32.mrf.mxu0
      %5064 = vmatprep.mubr.f32.mxu0 0.0
      %5065 = vmatmul.mubr.f32.gmra.mxu0 %v4945
      %v5066 = vpop.f32.mrf.mxu0
      %v5067 = vadd.f32 0.0, %v5066
      %v5068 = vpop.f32.mrf.mxu0
      %5069 = vdwg.mxu0
      %5070 = vst [vmem:[%s477] sm:$0xff] %v5062
      %5071 = vst [vmem:[%s477 + $0x8] sm:$0xff] %v5067
      %p5072 = scmp.lt.s32.totalorder %s25, 1
      %s5073 = scalar_select %p5072, %s25, 1
      %p5074 = scmp.lt.s32.totalorder %s26, 0
      %s5075 = scalar_select %p5074, %s26, 0
      %s5076 = smul.addr %s5073, 2
      %s5077 = sadd.s32 %s5075, %s5076
      %s5078 = smul.addr %s5077, 8
      %s5079 = scalar_lea.vmem %s8, %s5078
      %s5080 = smul.u32 4, %s26
      %p5081 = scmp.lt.s32.totalorder %s25, 1
      %s5082 = scalar_select %p5081, %s25, 1
      %p5083 = scmp.lt.s32.totalorder %s5080, 3
      %s5084 = scalar_select %p5083, %s5080, 3
      %s5085 = smul.addr %s5084, 4
      %s5086 = smul.addr %s5082, 32
      %s5087 = sadd.s32 %s5085, %s5086
      %s5088 = smul.addr %s5087, 8
      %s5089 = scalar_lea.vmem %s9, %s5088
      // Predicated region
      $region53: #{cswin_forward_pallas.1} parent=51 // pred_check
        %p5090 = pneg %p253
      $region54: #{cswin_forward_pallas.1} parent=51 // pred_check_branch
        %5092 = sbr.rel (%p5090) target = $region56
      $region55: #{cswin_forward_pallas.1} parent=51 // pred_region
        _
      $region56: #{cswin_forward_pallas.1} parent=51 // pred_fallthru
        _
      // Predicated region
      $region57: #{cswin_forward_pallas.1} parent=51 // pred_check
        %p5093 = pneg %p281
      $region58: #{cswin_forward_pallas.1} parent=51 // pred_check_branch
        %5095 = sbr.rel (%p5093) target = $region60
      $region59: #{cswin_forward_pallas.1} parent=51 // pred_region
        %s5096 = smul.u32 4, %s26
      $region60: #{cswin_forward_pallas.1} parent=51 // pred_fallthru
        _
    $region52: #{cswin_forward_pallas.1} parent=5 // pred_fallthru
      _
    %p5097 = scmp.le.s32.totalorder 2, %s16
    // Predicated region
    $region61: #{cswin_forward_pallas.1} parent=5 // pred_check
      %p5098 = pneg %p5097
    $region62: #{cswin_forward_pallas.1} parent=5 // pred_check_branch
      %5100 = sbr.rel (%p5098) target = $region64
    $region63: #{cswin_forward_pallas.1} parent=5 // pred_region
      %s5101 = ssub.s32 %s16, 2
      // Predicated region
      $region65: #{cswin_forward_pallas.1} parent=63 // pred_check
        %p5102 = pneg %p259
      $region66: #{cswin_forward_pallas.1} parent=63 // pred_check_branch
        %5104 = sbr.rel (%p5102) target = $region68
      $region67: #{cswin_forward_pallas.1} parent=63 // pred_region
        %p5105 = scmp.lt.s32.totalorder %s27, 1
        %s5106 = scalar_select %p5105, %s27, 1
        %p5107 = scmp.lt.s32.totalorder %s28, 0
        %s5108 = scalar_select %p5107, %s28, 0
        %s5109 = smul.addr %s5106, 2
        %s5110 = sadd.s32 %s5108, %s5109
        %s5111 = smul.addr %s5110, 8
        %s5112 = scalar_lea.vmem %s8, %s5111
      $region68: #{cswin_forward_pallas.1} parent=63 // pred_fallthru
        _
      // Predicated region
      $region69: #{cswin_forward_pallas.1} parent=63 // pred_check
        %p5113 = pneg %p287
      $region70: #{cswin_forward_pallas.1} parent=63 // pred_check_branch
        %5115 = sbr.rel (%p5113) target = $region72
      $region71: #{cswin_forward_pallas.1} parent=63 // pred_region
        %s5116 = smul.u32 4, %s28
        %p5117 = scmp.lt.s32.totalorder %s27, 1
        %s5118 = scalar_select %p5117, %s27, 1
        %p5119 = scmp.lt.s32.totalorder %s5116, 3
        %s5120 = scalar_select %p5119, %s5116, 3
        %s5121 = smul.addr %s5120, 4
        %s5122 = smul.addr %s5118, 32
        %s5123 = sadd.s32 %s5121, %s5122
        %s5124 = smul.addr %s5123, 8
        %s5125 = scalar_lea.vmem %s9, %s5124
      $region72: #{cswin_forward_pallas.1} parent=63 // pred_fallthru
        _
    $region64: #{cswin_forward_pallas.1} parent=5 // pred_fallthru
      _
  $region6: #{cswin_forward_pallas.1} parent=0 // loop_footer
    %s20 = sadd.s32 1, %s16
  $region7: #{cswin_forward_pallas.1} parent=0 // loop_footer_branch
    %15 = sbr.rel target = $region3
  $region8: #{cswin_forward_pallas.1} parent=0 // loop_exit
    _

</llo_original>
